<compile_context>
chip_gen: v7x
topology: tpu7x:2x2x1
jax: 0.10.0
libtpu: 0.0.40
codegen_flags: <defaults>
</compile_context>

<pallas_src>
import numpy as np

import jax
import jax.numpy as jnp
from jax.experimental import pallas as pl
from jax.experimental.pallas import tpu as pltpu


# --------------------------------------------------------------------------- #
# Weight / layout pre-transforms (tiny, batch-independent, wrapper-side).      #
# --------------------------------------------------------------------------- #

def _round_up(x, m):
    return ((x + m - 1) // m) * m


def _band_matrix(k, in_w, out_w):
    """k: (Cout, KH, KW) -> B: (KH, in_w, Cout*out_w) with
       B[dj, w, o*out_w + j] = k[o, dj, w - j]  (0 when w - j outside [0, KW))."""
    cout, kh, kw = k.shape
    dk = np.arange(in_w)[None, :] - np.arange(out_w)[:, None]        # dk[j, w] = w - j
    valid = jnp.asarray(((dk >= 0) & (dk < kw)).astype(np.float32))
    dkc = np.clip(dk, 0, kw - 1)
    g = k[:, :, dkc] * valid[None, None]                             # (Cout, KH, out_w, in_w)
    return jnp.transpose(g, (1, 3, 0, 2)).reshape(kh, in_w, cout * out_w)


def _pool_cols(in_w, out_w, n_channels):
    """(Cout*in_w, out_w) matrix folding the 2:1 column pool, the all-channel sum and
    the 1/(4*C) factor of the reference AvgPool2d (lane-side half of pool1)."""
    sel = (np.arange(in_w)[:, None] // 2 == np.arange(out_w)[None, :]).astype(np.float32)
    return np.tile(sel, (n_channels, 1)) / (4.0 * n_channels)


def _pool_dense(in_hw, out_hw, n_channels):
    """(C*in_hw*in_hw, out_hw*out_hw) matrix for the reference AvgPool2d applied to a
    flattened (o, i, j) activation: mean over ALL channels and the 2x2 window."""
    sel = (np.arange(in_hw)[:, None] // 2 == np.arange(out_hw)[None, :]).astype(np.float32)
    sp = np.einsum("ir,jc->ijrc", sel, sel).reshape(in_hw * in_hw, out_hw * out_hw)
    return np.tile(sp, (n_channels, 1)) / (4.0 * n_channels)


def _dense_conv_matrix(ks, in_hw, out_hw):
    """ks: (Cout, K, K) (Cin already summed).  Returns (in_hw^2, Cout*out_hw^2) with
    M[r*in_hw + c', o*out_hw^2 + i*out_hw + j] = ks[o, r - i, c' - j] (valid taps)."""
    cout, kk, _ = ks.shape
    d = np.arange(in_hw)[:, None] - np.arange(out_hw)[None, :]       # d[r, i] = r - i
    valid = (d >= 0) & (d < kk)
    dc = np.clip(d, 0, kk - 1)
    m = ks[:, dc[:, :, None, None], dc[None, None, :, :]]            # (Cout, r, i, c', j)
    vm = (valid[:, :, None, None] & valid[None, None, :, :]).astype(np.float32)
    m = m * jnp.asarray(vm)[None]
    m = jnp.transpose(m, (1, 3, 0, 2, 4))                            # (r, c', Cout, i, j)
    return m.reshape(in_hw * in_hw, cout * out_hw * out_hw)


# --------------------------------------------------------------------------- #
# The fused kernel: one grid step == one block of bb images, all in VMEM.      #
# --------------------------------------------------------------------------- #

def _cnn_kernel(x_ref, b1_ref, s1_ref, w2d_ref, p2_ref, k3_ref,
                w1_ref, bfc1_ref, w2_ref, bfc2_ref, o_ref):
    f32, bf16 = jnp.float32, jnp.bfloat16
    bb = o_ref.shape[0]

    def dot(a, b):
        return jnp.dot(a, b, preferred_element_type=f32)

    # ---- conv_1 (3->6, 5x5, no bias) + tanh: ONE MXU matmul, K folds (KH, Cin, W).
    # Input rows are (conv_row i)*bb + b, lanes are dj*96 + c*32 + w.
    x = x_ref[...].reshape(28 * bb, 480)                             # bf16
    h1 = jnp.tanh(dot(x, b1_ref[...]))                               # (28*bb, 168) f32

    # ---- avg_pool_1, lane side: channel sum + 2:1 column pool (1/24 folded in).
    h1c = dot(h1.astype(bf16), s1_ref[...])                          # (28*bb, 14) f32

    # ---- avg_pool_1, row side: conv rows 2r / 2r+1 are contiguous, bb-aligned row
    # slabs; sum them and lay pooled rows out along lanes -> (bb, 196), cols r*14+c'.
    cols = []
    for r in range(14):
        top = h1c[(2 * r) * bb:(2 * r) * bb + bb, :]
        bot = h1c[(2 * r + 1) * bb:(2 * r + 1) * bb + bb, :]
        cols.append(top + bot)
    p1 = jnp.concatenate(cols, axis=-1)                              # (bb, 196) f32

    # ---- conv_2 (+ tanh) as a dense (196 -> 16*10*10) matmul.  The quirky pool
    # broadcasts one map to every input channel, so Cin is pre-summed (exact).
    h2 = jnp.tanh(dot(p1.astype(bf16), w2d_ref[...]))                # (bb, 1600) f32

    # ---- avg_pool_2: all-channel + 2x2 pool folded into one (1600 -> 25) matrix.
    p2 = dot(h2.astype(bf16), p2_ref[...])                           # (bb, 25) f32

    # ---- conv_3 (+ tanh): 5x5 valid conv on a 5x5 map == dense (25 -> 120).
    h3 = jnp.tanh(dot(p2.astype(bf16), k3_ref[...]))                 # (bb, 120) f32

    # ---- fully-connected head.
    h4 = jnp.tanh(dot(h3.astype(bf16), w1_ref[...]) + bfc1_ref[...])  # (bb, 84)
    o_ref[...] = dot(h4.astype(bf16), w2_ref[...]) + bfc2_ref[...]    # (bb, 10)


# --------------------------------------------------------------------------- #
# Wrapper.                                                                     #
# --------------------------------------------------------------------------- #

def custom_cnn_forward(params, x, *, block_batch=64):
    n, c, h, w = x.shape
    assert (c, h, w) == (3, 32, 32), "CustomCNN's LeNet geometry needs (N, 3, 32, 32)"
    f32, bf16 = jnp.float32, jnp.bfloat16
    x = x.astype(f32)

    # ---- batch blocking -----------------------------------------------------
    bb = int(min(block_batch, _round_up(n, 8)))
    bb = max(8, (bb // 8) * 8)
    n_pad = _round_up(n, bb)
    nblk = n_pad // bb
    if n_pad != n:
        x = jnp.pad(x, ((0, n_pad - n), (0, 0), (0, 0), (0, 0)))

    # ---- input pre-layout: fold (KH, Cin, W) into K and put the conv-row index
    # OUTSIDE the batch so pooled-row pairs become contiguous, aligned row slabs.
    xt = jnp.transpose(x, (0, 2, 1, 3)).reshape(n_pad, 32, 96)            # [n, i, c*32+w]
    x5 = jnp.concatenate([xt[:, dj:dj + 28, :] for dj in range(5)], axis=-1)  # (n,28,480)
    x5 = x5.reshape(nblk, bb, 28, 480).transpose(0, 2, 1, 3)              # (nblk,28,bb,480)
    x5 = x5.astype(bf16)

    # ---- weight pre-transforms ----------------------------------------------
    k1 = params["conv1_k"].astype(f32)                                    # (6, 3, 5, 5)
    # The quirky avg-pool broadcasts one pooled map to every channel, so conv_2 /
    # conv_3 see identical input channels -> summing their kernels over Cin is exact.
    k2s = params["conv2_k"].astype(f32).sum(axis=1)                       # (16, 5, 5)
    k3s = params["conv3_k"].astype(f32).sum(axis=1)                       # (120, 5, 5)

    b1 = jnp.stack([_band_matrix(k1[:, ci], 32, 28) for ci in range(3)], axis=1)
    b1 = b1.reshape(5 * 3 * 32, 6 * 28).astype(bf16)                      # (480, 168)

    s1 = jnp.asarray(_pool_cols(28, 14, 6)).astype(bf16)                  # (168, 14)
    w2d = _dense_conv_matrix(k2s, 14, 10).astype(bf16)                    # (196, 1600)
    p2m = jnp.asarray(_pool_dense(10, 5, 16)).astype(bf16)                # (1600, 25)
    k3d = jnp.transpose(k3s, (1, 2, 0)).reshape(25, 120).astype(bf16)     # (25, 120)

    w1 = params["fc1_w"].astype(bf16)                                     # (120, 84)
    bfc1 = params["fc1_b"].astype(f32).reshape(1, -1)                     # (1, 84)
    w2 = params["fc2_w"].astype(bf16)                                     # (84, 10)
    bfc2 = params["fc2_b"].astype(f32).reshape(1, -1)                     # (1, 10)

    def resident(a):
        nd = a.ndim
        return pl.BlockSpec(a.shape, lambda i, _nd=nd: (0,) * _nd)        # stays in VMEM

    out = pl.pallas_call(
        _cnn_kernel,
        out_shape=jax.ShapeDtypeStruct((n_pad, 10), f32),
        grid=(nblk,),
        in_specs=[
            pl.BlockSpec((1, 28, bb, 480), lambda i: (i, 0, 0, 0)),       # one image block
            resident(b1), resident(s1), resident(w2d), resident(p2m), resident(k3d),
            resident(w1), resident(bfc1), resident(w2), resident(bfc2),
        ],
        out_specs=pl.BlockSpec((bb, 10), lambda i: (i, 0)),
        compiler_params=pltpu.CompilerParams(
            dimension_semantics=("parallel",),          # batch blocks shard across TCs
            vmem_limit_bytes=32 * 1024 * 1024),         # headroom over v5e's 16 MiB default
    )(x5, b1, s1, w2d, p2m, k3d, w1, bfc1, w2, bfc2)
    return out[:n]


# --------------------------------------------------------------------------- #
# Parameters (same distribution as the torch.randn reference).                 #
# --------------------------------------------------------------------------- #

def init_params(key):
    ks = jax.random.split(key, 7)
    return {
        "conv1_k": jax.random.normal(ks[0], (6, 3, 5, 5), jnp.float32),
        "conv2_k": jax.random.normal(ks[1], (16, 6, 5, 5), jnp.float32),
        "conv3_k": jax.random.normal(ks[2], (120, 16, 5, 5), jnp.float32),
        "fc1_w": jax.random.normal(ks[3], (120, 84), jnp.float32),
        "fc1_b": jax.random.normal(ks[4], (84,), jnp.float32),
        "fc2_w": jax.random.normal(ks[5], (84, 10), jnp.float32),
        "fc2_b": jax.random.normal(ks[6], (10,), jnp.float32),
    }


# --------------------------------------------------------------------------- #
# NumPy float64 reference implementing the PyTorch module's exact semantics.   #
# --------------------------------------------------------------------------- #

def _conv_np(x, k):
    n, c, hh, ww = x.shape
    o, _, kk, _ = k.shape
    oh, ow = hh - kk + 1, ww - kk + 1
    out = np.zeros((n, o, oh, ow))
    for dj in range(kk):
        for dk in range(kk):
            out += np.einsum("ncij,oc->noij", x[:, :, dj:dj + oh, dk:dk + ow], k[:, :, dj, dk])
    return out


def _pool_np(x):
    n, c, hh, ww = x.shape
    s = (x[:, :, 0::2, 0::2] + x[:, :, 0::2, 1::2]
         + x[:, :, 1::2, 0::2] + x[:, :, 1::2, 1::2])
    m = s.sum(axis=1) / (4.0 * c)                       # mean over ALL channels + window
    return np.broadcast_to(m[:, None, :, :], (n, c, hh // 2, ww // 2))


def _reference_forward_np(params, x):
    x = np.asarray(x, np.float64)
    k1 = np.asarray(params["conv1_k"], np.float64)
    k2 = np.asarray(params["conv2_k"], np.float64)
    k3 = np.asarray(params["conv3_k"], np.float64)
    w1 = np.asarray(params["fc1_w"], np.float64)
    b1 = np.asarray(params["fc1_b"], np.float64)
    w2 = np.asarray(params["fc2_w"], np.float64)
    b2 = np.asarray(params["fc2_b"], np.float64)
    hid = _pool_np(np.tanh(_conv_np(x, k1)))
    hid = _pool_np(np.tanh(_conv_np(hid, k2)))
    hid = np.tanh(_conv_np(hid, k3)).reshape(x.shape[0], -1)
    hid = np.tanh(hid @ w1 + b1)
    return hid @ w2 + b2


# --------------------------------------------------------------------------- #
# Main.                                                                        #
# --------------------------------------------------------------------------- #

if __name__ == "__main__":
    key = jax.random.PRNGKey(0)
    k_params, k_x = jax.random.split(key)
    params = init_params(k_params)
    # 32x32 input so conv_3 yields 1x1 spatial and the flatten is 120 (LeNet geometry).
    x = jax.random.normal(k_x, (16, 3, 32, 32), jnp.float32)

    fwd = jax.jit(custom_cnn_forward)
    out = jax.block_until_ready(fwd(params, x))

    assert out.shape == (16, 10), out.shape
    assert out.dtype == jnp.float32
    assert bool(jnp.all(jnp.isfinite(out)))

    # Sanity check against the float64 NumPy reference of the exact module semantics.
    # Tolerance is loose: the kernel uses bf16 MXU operands with f32 accumulation.
    ref = _reference_forward_np(params, x)
    rel_err = float(np.max(np.abs(np.asarray(out, np.float64) - ref))) / (
        float(np.max(np.abs(ref))) + 1e-9)
    assert rel_err < 0.1, rel_err

    print("KERNEL_OK")
</pallas_src>

<mosaic_0001>
module attributes {stable_mosaic.version = 11 : i64} {
  func.func @_cnn_kernel(%arg0: i32, %arg1: memref<1x28x16x480xbf16, #tpu.memory_space<vmem>>, %arg2: memref<480x168xbf16, #tpu.memory_space<vmem>>, %arg3: memref<168x14xbf16, #tpu.memory_space<vmem>>, %arg4: memref<196x1600xbf16, #tpu.memory_space<vmem>>, %arg5: memref<1600x25xbf16, #tpu.memory_space<vmem>>, %arg6: memref<25x120xbf16, #tpu.memory_space<vmem>>, %arg7: memref<120x84xbf16, #tpu.memory_space<vmem>>, %arg8: memref<1x84xf32, #tpu.memory_space<vmem>>, %arg9: memref<84x10xbf16, #tpu.memory_space<vmem>>, %arg10: memref<1x10xf32, #tpu.memory_space<vmem>>, %arg11: memref<16x10xf32, #tpu.memory_space<vmem>>) attributes {dimension_semantics = [#tpu.dimension_semantics<parallel>], iteration_bounds = array<i64: 1>, scalar_prefetch = 0 : i64, scratch_operands = 0 : i64, tpu.core_type = #tpu.core_type<tc>, window_params = [{transform_indices = @transform_0, window_bounds = array<i64: 1, 28, 16, 480>}, {pipeline_mode = #tpu.pipeline_mode<synchronous>, transform_indices = @transform_1, window_bounds = array<i64: 480, 168>}, {pipeline_mode = #tpu.pipeline_mode<synchronous>, transform_indices = @transform_2, window_bounds = array<i64: 168, 14>}, {pipeline_mode = #tpu.pipeline_mode<synchronous>, transform_indices = @transform_3, window_bounds = array<i64: 196, 1600>}, {pipeline_mode = #tpu.pipeline_mode<synchronous>, transform_indices = @transform_4, window_bounds = array<i64: 1600, 25>}, {pipeline_mode = #tpu.pipeline_mode<synchronous>, transform_indices = @transform_5, window_bounds = array<i64: 25, 120>}, {pipeline_mode = #tpu.pipeline_mode<synchronous>, transform_indices = @transform_6, window_bounds = array<i64: 120, 84>}, {pipeline_mode = #tpu.pipeline_mode<synchronous>, transform_indices = @transform_7, window_bounds = array<i64: 1, 84>}, {pipeline_mode = #tpu.pipeline_mode<synchronous>, transform_indices = @transform_8, window_bounds = array<i64: 84, 10>}, {pipeline_mode = #tpu.pipeline_mode<synchronous>, transform_indices = @transform_9, window_bounds = array<i64: 1, 10>}, {transform_indices = @transform_10, window_bounds = array<i64: 16, 10>}]} {
    %c0 = arith.constant 0 : index
    %c0_0 = arith.constant 0 : index
    %c0_1 = arith.constant 0 : index
    %c0_2 = arith.constant 0 : index
    %0 = vector.load %arg1[%c0, %c0_0, %c0_1, %c0_2] : memref<1x28x16x480xbf16, #tpu.memory_space<vmem>>, vector<1x28x16x480xbf16>
    %1 = vector.shape_cast %0 : vector<1x28x16x480xbf16> to vector<448x480xbf16>
    %c0_3 = arith.constant 0 : index
    %c0_4 = arith.constant 0 : index
    %2 = vector.load %arg2[%c0_3, %c0_4] : memref<480x168xbf16, #tpu.memory_space<vmem>>, vector<480x168xbf16>
    %cst = arith.constant dense<0.000000e+00> : vector<448x168xf32>
    %3 = tpu.matmul %1, %2, %cst {dimension_numbers = #tpu.dot_dimension_numbers<[1], [0], [0], [1], [0, 0, 1, 1], [], []>} : vector<448x480xbf16>, vector<480x168xbf16>, vector<448x168xf32> -> vector<448x168xf32>
    %4 = math.tanh %3 : vector<448x168xf32>
    %5 = arith.truncf %4 : vector<448x168xf32> to vector<448x168xbf16>
    %c0_5 = arith.constant 0 : index
    %c0_6 = arith.constant 0 : index
    %6 = vector.load %arg3[%c0_5, %c0_6] : memref<168x14xbf16, #tpu.memory_space<vmem>>, vector<168x14xbf16>
    %cst_7 = arith.constant dense<0.000000e+00> : vector<448x14xf32>
    %7 = tpu.matmul %5, %6, %cst_7 {dimension_numbers = #tpu.dot_dimension_numbers<[1], [0], [0], [1], [0, 0, 1, 1], [], []>} : vector<448x168xbf16>, vector<168x14xbf16>, vector<448x14xf32> -> vector<448x14xf32>
    %8 = vector.extract_strided_slice %7 {offsets = [0, 0], sizes = [16, 14], strides = [1, 1]} : vector<448x14xf32> to vector<16x14xf32>
    %9 = vector.extract_strided_slice %7 {offsets = [16, 0], sizes = [16, 14], strides = [1, 1]} : vector<448x14xf32> to vector<16x14xf32>
    %10 = arith.addf %8, %9 : vector<16x14xf32>
    %11 = vector.extract_strided_slice %7 {offsets = [32, 0], sizes = [16, 14], strides = [1, 1]} : vector<448x14xf32> to vector<16x14xf32>
    %12 = vector.extract_strided_slice %7 {offsets = [48, 0], sizes = [16, 14], strides = [1, 1]} : vector<448x14xf32> to vector<16x14xf32>
    %13 = arith.addf %11, %12 : vector<16x14xf32>
    %14 = vector.extract_strided_slice %7 {offsets = [64, 0], sizes = [16, 14], strides = [1, 1]} : vector<448x14xf32> to vector<16x14xf32>
    %15 = vector.extract_strided_slice %7 {offsets = [80, 0], sizes = [16, 14], strides = [1, 1]} : vector<448x14xf32> to vector<16x14xf32>
    %16 = arith.addf %14, %15 : vector<16x14xf32>
    %17 = vector.extract_strided_slice %7 {offsets = [96, 0], sizes = [16, 14], strides = [1, 1]} : vector<448x14xf32> to vector<16x14xf32>
    %18 = vector.extract_strided_slice %7 {offsets = [112, 0], sizes = [16, 14], strides = [1, 1]} : vector<448x14xf32> to vector<16x14xf32>
    %19 = arith.addf %17, %18 : vector<16x14xf32>
    %20 = vector.extract_strided_slice %7 {offsets = [128, 0], sizes = [16, 14], strides = [1, 1]} : vector<448x14xf32> to vector<16x14xf32>
    %21 = vector.extract_strided_slice %7 {offsets = [144, 0], sizes = [16, 14], strides = [1, 1]} : vector<448x14xf32> to vector<16x14xf32>
    %22 = arith.addf %20, %21 : vector<16x14xf32>
    %23 = vector.extract_strided_slice %7 {offsets = [160, 0], sizes = [16, 14], strides = [1, 1]} : vector<448x14xf32> to vector<16x14xf32>
    %24 = vector.extract_strided_slice %7 {offsets = [176, 0], sizes = [16, 14], strides = [1, 1]} : vector<448x14xf32> to vector<16x14xf32>
    %25 = arith.addf %23, %24 : vector<16x14xf32>
    %26 = vector.extract_strided_slice %7 {offsets = [192, 0], sizes = [16, 14], strides = [1, 1]} : vector<448x14xf32> to vector<16x14xf32>
    %27 = vector.extract_strided_slice %7 {offsets = [208, 0], sizes = [16, 14], strides = [1, 1]} : vector<448x14xf32> to vector<16x14xf32>
    %28 = arith.addf %26, %27 : vector<16x14xf32>
    %29 = vector.extract_strided_slice %7 {offsets = [224, 0], sizes = [16, 14], strides = [1, 1]} : vector<448x14xf32> to vector<16x14xf32>
    %30 = vector.extract_strided_slice %7 {offsets = [240, 0], sizes = [16, 14], strides = [1, 1]} : vector<448x14xf32> to vector<16x14xf32>
    %31 = arith.addf %29, %30 : vector<16x14xf32>
    %32 = vector.extract_strided_slice %7 {offsets = [256, 0], sizes = [16, 14], strides = [1, 1]} : vector<448x14xf32> to vector<16x14xf32>
    %33 = vector.extract_strided_slice %7 {offsets = [272, 0], sizes = [16, 14], strides = [1, 1]} : vector<448x14xf32> to vector<16x14xf32>
    %34 = arith.addf %32, %33 : vector<16x14xf32>
    %35 = vector.extract_strided_slice %7 {offsets = [288, 0], sizes = [16, 14], strides = [1, 1]} : vector<448x14xf32> to vector<16x14xf32>
    %36 = vector.extract_strided_slice %7 {offsets = [304, 0], sizes = [16, 14], strides = [1, 1]} : vector<448x14xf32> to vector<16x14xf32>
    %37 = arith.addf %35, %36 : vector<16x14xf32>
    %38 = vector.extract_strided_slice %7 {offsets = [320, 0], sizes = [16, 14], strides = [1, 1]} : vector<448x14xf32> to vector<16x14xf32>
    %39 = vector.extract_strided_slice %7 {offsets = [336, 0], sizes = [16, 14], strides = [1, 1]} : vector<448x14xf32> to vector<16x14xf32>
    %40 = arith.addf %38, %39 : vector<16x14xf32>
    %41 = vector.extract_strided_slice %7 {offsets = [352, 0], sizes = [16, 14], strides = [1, 1]} : vector<448x14xf32> to vector<16x14xf32>
    %42 = vector.extract_strided_slice %7 {offsets = [368, 0], sizes = [16, 14], strides = [1, 1]} : vector<448x14xf32> to vector<16x14xf32>
    %43 = arith.addf %41, %42 : vector<16x14xf32>
    %44 = vector.extract_strided_slice %7 {offsets = [384, 0], sizes = [16, 14], strides = [1, 1]} : vector<448x14xf32> to vector<16x14xf32>
    %45 = vector.extract_strided_slice %7 {offsets = [400, 0], sizes = [16, 14], strides = [1, 1]} : vector<448x14xf32> to vector<16x14xf32>
    %46 = arith.addf %44, %45 : vector<16x14xf32>
    %47 = vector.extract_strided_slice %7 {offsets = [416, 0], sizes = [16, 14], strides = [1, 1]} : vector<448x14xf32> to vector<16x14xf32>
    %48 = vector.extract_strided_slice %7 {offsets = [432, 0], sizes = [16, 14], strides = [1, 1]} : vector<448x14xf32> to vector<16x14xf32>
    %49 = arith.addf %47, %48 : vector<16x14xf32>
    %50 = tpu.concatenate %10, %13, %16, %19, %22, %25, %28, %31, %34, %37, %40, %43, %46, %49 in 1 : vector<16x14xf32>, vector<16x14xf32>, vector<16x14xf32>, vector<16x14xf32>, vector<16x14xf32>, vector<16x14xf32>, vector<16x14xf32>, vector<16x14xf32>, vector<16x14xf32>, vector<16x14xf32>, vector<16x14xf32>, vector<16x14xf32>, vector<16x14xf32>, vector<16x14xf32> -> vector<16x196xf32>
    %51 = arith.truncf %50 : vector<16x196xf32> to vector<16x196xbf16>
    %c0_8 = arith.constant 0 : index
    %c0_9 = arith.constant 0 : index
    %52 = vector.load %arg4[%c0_8, %c0_9] : memref<196x1600xbf16, #tpu.memory_space<vmem>>, vector<196x1600xbf16>
    %cst_10 = arith.constant dense<0.000000e+00> : vector<16x1600xf32>
    %53 = tpu.matmul %51, %52, %cst_10 {dimension_numbers = #tpu.dot_dimension_numbers<[1], [0], [0], [1], [0, 0, 1, 1], [], []>} : vector<16x196xbf16>, vector<196x1600xbf16>, vector<16x1600xf32> -> vector<16x1600xf32>
    %54 = math.tanh %53 : vector<16x1600xf32>
    %55 = arith.truncf %54 : vector<16x1600xf32> to vector<16x1600xbf16>
    %c0_11 = arith.constant 0 : index
    %c0_12 = arith.constant 0 : index
    %56 = vector.load %arg5[%c0_11, %c0_12] : memref<1600x25xbf16, #tpu.memory_space<vmem>>, vector<1600x25xbf16>
    %cst_13 = arith.constant dense<0.000000e+00> : vector<16x25xf32>
    %57 = tpu.matmul %55, %56, %cst_13 {dimension_numbers = #tpu.dot_dimension_numbers<[1], [0], [0], [1], [0, 0, 1, 1], [], []>} : vector<16x1600xbf16>, vector<1600x25xbf16>, vector<16x25xf32> -> vector<16x25xf32>
    %58 = arith.truncf %57 : vector<16x25xf32> to vector<16x25xbf16>
    %c0_14 = arith.constant 0 : index
    %c0_15 = arith.constant 0 : index
    %59 = vector.load %arg6[%c0_14, %c0_15] : memref<25x120xbf16, #tpu.memory_space<vmem>>, vector<25x120xbf16>
    %cst_16 = arith.constant dense<0.000000e+00> : vector<16x120xf32>
    %60 = tpu.matmul %58, %59, %cst_16 {dimension_numbers = #tpu.dot_dimension_numbers<[1], [0], [0], [1], [0, 0, 1, 1], [], []>} : vector<16x25xbf16>, vector<25x120xbf16>, vector<16x120xf32> -> vector<16x120xf32>
    %61 = math.tanh %60 : vector<16x120xf32>
    %62 = arith.truncf %61 : vector<16x120xf32> to vector<16x120xbf16>
    %c0_17 = arith.constant 0 : index
    %c0_18 = arith.constant 0 : index
    %63 = vector.load %arg7[%c0_17, %c0_18] : memref<120x84xbf16, #tpu.memory_space<vmem>>, vector<120x84xbf16>
    %cst_19 = arith.constant dense<0.000000e+00> : vector<16x84xf32>
    %64 = tpu.matmul %62, %63, %cst_19 {dimension_numbers = #tpu.dot_dimension_numbers<[1], [0], [0], [1], [0, 0, 1, 1], [], []>} : vector<16x120xbf16>, vector<120x84xbf16>, vector<16x84xf32> -> vector<16x84xf32>
    %c0_20 = arith.constant 0 : index
    %c0_21 = arith.constant 0 : index
    %65 = vector.load %arg8[%c0_20, %c0_21] : memref<1x84xf32, #tpu.memory_space<vmem>>, vector<1x84xf32>
    %66 = vector.broadcast %65 : vector<1x84xf32> to vector<16x84xf32>
    %67 = arith.addf %64, %66 : vector<16x84xf32>
    %68 = math.tanh %67 : vector<16x84xf32>
    %69 = arith.truncf %68 : vector<16x84xf32> to vector<16x84xbf16>
    %c0_22 = arith.constant 0 : index
    %c0_23 = arith.constant 0 : index
    %70 = vector.load %arg9[%c0_22, %c0_23] : memref<84x10xbf16, #tpu.memory_space<vmem>>, vector<84x10xbf16>
    %cst_24 = arith.constant dense<0.000000e+00> : vector<16x10xf32>
    %71 = tpu.matmul %69, %70, %cst_24 {dimension_numbers = #tpu.dot_dimension_numbers<[1], [0], [0], [1], [0, 0, 1, 1], [], []>} : vector<16x84xbf16>, vector<84x10xbf16>, vector<16x10xf32> -> vector<16x10xf32>
    %c0_25 = arith.constant 0 : index
    %c0_26 = arith.constant 0 : index
    %72 = vector.load %arg10[%c0_25, %c0_26] : memref<1x10xf32, #tpu.memory_space<vmem>>, vector<1x10xf32>
    %73 = vector.broadcast %72 : vector<1x10xf32> to vector<16x10xf32>
    %74 = arith.addf %71, %73 : vector<16x10xf32>
    %c0_27 = arith.constant 0 : index
    %c0_28 = arith.constant 0 : index
    %75 = vector.load %arg11[%c0_27, %c0_28] : memref<16x10xf32, #tpu.memory_space<vmem>>, vector<16x10xf32>
    tpu.vector_store %arg11[%c0_27, %c0_28], %74 {strides = array<i32>} : memref<16x10xf32, #tpu.memory_space<vmem>>, vector<16x10xf32>,
    return
  }
  func.func @transform_0(%arg0: i32) -> (i32, i32, i32, i32) {
    %c0_i32 = arith.constant 0 : i32
    %c0_i32_0 = arith.constant 0 : i32
    %c0_i32_1 = arith.constant 0 : i32
    %c0_i32_2 = arith.constant 0 : i32
    return %arg0, %c0_i32, %c0_i32_0, %c0_i32_1 : i32, i32, i32, i32
  }
  func.func @transform_1(%arg0: i32) -> (i32, i32) {
    %c0_i32 = arith.constant 0 : i32
    %c0_i32_0 = arith.constant 0 : i32
    %c0_i32_1 = arith.constant 0 : i32
    return %c0_i32, %c0_i32_0 : i32, i32
  }
  func.func @transform_2(%arg0: i32) -> (i32, i32) {
    %c0_i32 = arith.constant 0 : i32
    %c0_i32_0 = arith.constant 0 : i32
    %c0_i32_1 = arith.constant 0 : i32
    return %c0_i32, %c0_i32_0 : i32, i32
  }
  func.func @transform_3(%arg0: i32) -> (i32, i32) {
    %c0_i32 = arith.constant 0 : i32
    %c0_i32_0 = arith.constant 0 : i32
    %c0_i32_1 = arith.constant 0 : i32
    return %c0_i32, %c0_i32_0 : i32, i32
  }
  func.func @transform_4(%arg0: i32) -> (i32, i32) {
    %c0_i32 = arith.constant 0 : i32
    %c0_i32_0 = arith.constant 0 : i32
    %c0_i32_1 = arith.constant 0 : i32
    return %c0_i32, %c0_i32_0 : i32, i32
  }
  func.func @transform_5(%arg0: i32) -> (i32, i32) {
    %c0_i32 = arith.constant 0 : i32
    %c0_i32_0 = arith.constant 0 : i32
    %c0_i32_1 = arith.constant 0 : i32
    return %c0_i32, %c0_i32_0 : i32, i32
  }
  func.func @transform_6(%arg0: i32) -> (i32, i32) {
    %c0_i32 = arith.constant 0 : i32
    %c0_i32_0 = arith.constant 0 : i32
    %c0_i32_1 = arith.constant 0 : i32
    return %c0_i32, %c0_i32_0 : i32, i32
  }
  func.func @transform_7(%arg0: i32) -> (i32, i32) {
    %c0_i32 = arith.constant 0 : i32
    %c0_i32_0 = arith.constant 0 : i32
    %c0_i32_1 = arith.constant 0 : i32
    return %c0_i32, %c0_i32_0 : i32, i32
  }
  func.func @transform_8(%arg0: i32) -> (i32, i32) {
    %c0_i32 = arith.constant 0 : i32
    %c0_i32_0 = arith.constant 0 : i32
    %c0_i32_1 = arith.constant 0 : i32
    return %c0_i32, %c0_i32_0 : i32, i32
  }
  func.func @transform_9(%arg0: i32) -> (i32, i32) {
    %c0_i32 = arith.constant 0 : i32
    %c0_i32_0 = arith.constant 0 : i32
    %c0_i32_1 = arith.constant 0 : i32
    return %c0_i32, %c0_i32_0 : i32, i32
  }
  func.func @transform_10(%arg0: i32) -> (i32, i32) {
    %c0_i32 = arith.constant 0 : i32
    %c0_i32_0 = arith.constant 0 : i32
    return %arg0, %c0_i32 : i32, i32
  }
}

</mosaic_0001>

<llo_original>
// kernel: custom_cnn_forward.1
$region0: #{custom_cnn_forward.1}
  #allocation0 [shape = 'u32[]', space=smem, size = 0x4, offset = 0x4, fixed_abs, tag = 'smem constant byte address 0x4 - core index']
  #allocation1 [shape = 'u32[144,128]{1,0:T(1,128)}', space=vmem, size = 0x12000, scoped, tag = 'internal scratch']
  %s0 = inlined_call_operand.vmem [shape: bf16[1,28,16,480], index: 0, kind: input, shape index: {}]
  %s1 = inlined_call_operand.vmem [shape: bf16[480,168], index: 1, kind: input, shape index: {}]
  %s2 = inlined_call_operand.vmem [shape: bf16[168,14], index: 2, kind: input, shape index: {}]
  %s3 = inlined_call_operand.vmem [shape: bf16[196,1600], index: 3, kind: input, shape index: {}]
  %s4 = inlined_call_operand.vmem [shape: bf16[1600,25], index: 4, kind: input, shape index: {}]
  %s5 = inlined_call_operand.vmem [shape: bf16[25,120], index: 5, kind: input, shape index: {}]
  %s6 = inlined_call_operand.vmem [shape: bf16[120,84], index: 6, kind: input, shape index: {}]
  %s7 = inlined_call_operand.vmem [shape: f32[1,84], index: 7, kind: input, shape index: {}]
  %s8 = inlined_call_operand.vmem [shape: bf16[84,10], index: 8, kind: input, shape index: {}]
  %s9 = inlined_call_operand.vmem [shape: f32[1,10], index: 9, kind: input, shape index: {}]
  %s10 = inlined_call_operand.hbm [shape: f32[16,10], index: 10, kind: output, shape index: {}]
  %s11 = sld [smem:[#allocation0]]
  $region50: #{custom_cnn_forward.1} parent=0
    _
  %s13 = ssub.s32 1, %s11
  %s14 = scalar_select 0, %s13, %s11
  $region1: #{custom_cnn_forward.1} parent=0
    #allocation2 [shape = 'u8[8192]{0}', space=vmem, size = 0x2000, scoped, tag = 'output window, operand 0, single buffered']
    #allocation3 [shape = 's32[1]{0}', space=sflag, size = 0x4, scoped, tag = 'scoped memory for custom_cnn_forward.1']
    %15 = vsyncpa [#allocation3], 0
    // Predicated region
    $region2: #{custom_cnn_forward.1} parent=1 // pred_check
      _
    $region3: #{custom_cnn_forward.1} parent=1 // pred_check_branch
      %17 = sbr.rel (0) target = $region5
    $region4: #{custom_cnn_forward.1} parent=1 // pred_region
      _
    $region5: #{custom_cnn_forward.1} parent=1 // pred_fallthru
      _
    // Predicated region
    $region6: #{custom_cnn_forward.1} parent=1 // pred_check
      _
    $region7: #{custom_cnn_forward.1} parent=1 // pred_check_branch
      %19 = sbr.rel (0) target = $region9
    $region8: #{custom_cnn_forward.1} parent=1 // pred_region
      _
    $region9: #{custom_cnn_forward.1} parent=1 // pred_fallthru
      _
    // Predicated region
    $region10: #{custom_cnn_forward.1} parent=1 // pred_check
      _
    $region11: #{custom_cnn_forward.1} parent=1 // pred_check_branch
      %21 = sbr.rel (0) target = $region13
    $region12: #{custom_cnn_forward.1} parent=1 // pred_region
      _
    $region13: #{custom_cnn_forward.1} parent=1 // pred_fallthru
      _
    // Predicated region
    $region14: #{custom_cnn_forward.1} parent=1 // pred_check
      _
    $region15: #{custom_cnn_forward.1} parent=1 // pred_check_branch
      %23 = sbr.rel (0) target = $region17
    $region16: #{custom_cnn_forward.1} parent=1 // pred_region
      _
    $region17: #{custom_cnn_forward.1} parent=1 // pred_fallthru
      _
    // Predicated region
    $region18: #{custom_cnn_forward.1} parent=1 // pred_check
      _
    $region19: #{custom_cnn_forward.1} parent=1 // pred_check_branch
      %25 = sbr.rel (0) target = $region21
    $region20: #{custom_cnn_forward.1} parent=1 // pred_region
      _
    $region21: #{custom_cnn_forward.1} parent=1 // pred_fallthru
      _
    // Predicated region
    $region22: #{custom_cnn_forward.1} parent=1 // pred_check
      _
    $region23: #{custom_cnn_forward.1} parent=1 // pred_check_branch
      %27 = sbr.rel (0) target = $region25
    $region24: #{custom_cnn_forward.1} parent=1 // pred_region
      _
    $region25: #{custom_cnn_forward.1} parent=1 // pred_fallthru
      _
    // Predicated region
    $region26: #{custom_cnn_forward.1} parent=1 // pred_check
      _
    $region27: #{custom_cnn_forward.1} parent=1 // pred_check_branch
      %29 = sbr.rel (0) target = $region29
    $region28: #{custom_cnn_forward.1} parent=1 // pred_region
      _
    $region29: #{custom_cnn_forward.1} parent=1 // pred_fallthru
      _
    // Predicated region
    $region30: #{custom_cnn_forward.1} parent=1 // pred_check
      _
    $region31: #{custom_cnn_forward.1} parent=1 // pred_check_branch
      %31 = sbr.rel (0) target = $region33
    $region32: #{custom_cnn_forward.1} parent=1 // pred_region
      _
    $region33: #{custom_cnn_forward.1} parent=1 // pred_fallthru
      _
    // Predicated region
    $region34: #{custom_cnn_forward.1} parent=1 // pred_check
      _
    $region35: #{custom_cnn_forward.1} parent=1 // pred_check_branch
      %33 = sbr.rel (0) target = $region37
    $region36: #{custom_cnn_forward.1} parent=1 // pred_region
      _
    $region37: #{custom_cnn_forward.1} parent=1 // pred_fallthru
      _
    // Predicated region
    $region38: #{custom_cnn_forward.1} parent=1 // pred_check
      _
    $region39: #{custom_cnn_forward.1} parent=1 // pred_check_branch
      %35 = sbr.rel (0) target = $region41
    $region40: #{custom_cnn_forward.1} parent=1 // pred_region
      _
    $region41: #{custom_cnn_forward.1} parent=1 // pred_fallthru
      _
    %v37 = vld [vmem:[%s0] sm:$0xff]
    %v38 = vld [vmem:[%s0 + $0x8] sm:$0xff]
    %v39 = vld [vmem:[%s0 + $0x10] sm:$0xff]
    %v40 = vld [vmem:[%s0 + $0x18] sm:$0xff]
    %v41 = vld [vmem:[%s0 + $0x20] sm:$0xff]
    %v42 = vld [vmem:[%s0 + $0x28] sm:$0xff]
    %v43 = vld [vmem:[%s0 + $0x30] sm:$0xff]
    %v44 = vld [vmem:[%s0 + $0x38] sm:$0xff]
    %v45 = vld [vmem:[%s0 + $0x40] sm:$0xff]
    %v46 = vld [vmem:[%s0 + $0x48] sm:$0xff]
    %v47 = vld [vmem:[%s0 + $0x50] sm:$0xff]
    %v48 = vld [vmem:[%s0 + $0x58] sm:$0xff]
    %v49 = vld [vmem:[%s0 + $0x60] sm:$0xff]
    %v50 = vld [vmem:[%s0 + $0x68] sm:$0xff]
    %v51 = vld [vmem:[%s0 + $0x70] sm:$0xff]
    %v52 = vld [vmem:[%s0 + $0x78] sm:$0xff]
    %v53 = vld [vmem:[%s0 + $0x80] sm:$0xff]
    %v54 = vld [vmem:[%s0 + $0x88] sm:$0xff]
    %v55 = vld [vmem:[%s0 + $0x90] sm:$0xff]
    %v56 = vld [vmem:[%s0 + $0x98] sm:$0xff]
    %v57 = vld [vmem:[%s0 + $0xa0] sm:$0xff]
    %v58 = vld [vmem:[%s0 + $0xa8] sm:$0xff]
    %v59 = vld [vmem:[%s0 + $0xb0] sm:$0xff]
    %v60 = vld [vmem:[%s0 + $0xb8] sm:$0xff]
    %v61 = vld [vmem:[%s0 + $0xc0] sm:$0xff]
    %v62 = vld [vmem:[%s0 + $0xc8] sm:$0xff]
    %v63 = vld [vmem:[%s0 + $0xd0] sm:$0xff]
    %v64 = vld [vmem:[%s0 + $0xd8] sm:$0xff]
    %v65 = vld [vmem:[%s0 + $0xe0] sm:$0xff]
    %v66 = vld [vmem:[%s0 + $0xe8] sm:$0xff]
    %v67 = vld [vmem:[%s0 + $0xf0] sm:$0xff]
    %v68 = vld [vmem:[%s0 + $0xf8] sm:$0xff]
    %v69 = vld [vmem:[%s0 + $0x100] sm:$0xff]
    %v70 = vld [vmem:[%s0 + $0x108] sm:$0xff]
    %v71 = vld [vmem:[%s0 + $0x110] sm:$0xff]
    %v72 = vld [vmem:[%s0 + $0x118] sm:$0xff]
    %v73 = vld [vmem:[%s0 + $0x120] sm:$0xff]
    %v74 = vld [vmem:[%s0 + $0x128] sm:$0xff]
    %v75 = vld [vmem:[%s0 + $0x130] sm:$0xff]
    %v76 = vld [vmem:[%s0 + $0x138] sm:$0xff]
    %v77 = vld [vmem:[%s0 + $0x140] sm:$0xff]
    %v78 = vld [vmem:[%s0 + $0x148] sm:$0xff]
    %v79 = vld [vmem:[%s0 + $0x150] sm:$0xff]
    %v80 = vld [vmem:[%s0 + $0x158] sm:$0xff]
    %v81 = vld [vmem:[%s0 + $0x160] sm:$0xff]
    %v82 = vld [vmem:[%s0 + $0x168] sm:$0xff]
    %v83 = vld [vmem:[%s0 + $0x170] sm:$0xff]
    %v84 = vld [vmem:[%s0 + $0x178] sm:$0xff]
    %v85 = vld [vmem:[%s0 + $0x180] sm:$0xff]
    %v86 = vld [vmem:[%s0 + $0x188] sm:$0xff]
    %v87 = vld [vmem:[%s0 + $0x190] sm:$0xff]
    %v88 = vld [vmem:[%s0 + $0x198] sm:$0xff]
    %v89 = vld [vmem:[%s0 + $0x1a0] sm:$0xff]
    %v90 = vld [vmem:[%s0 + $0x1a8] sm:$0xff]
    %v91 = vld [vmem:[%s0 + $0x1b0] sm:$0xff]
    %v92 = vld [vmem:[%s0 + $0x1b8] sm:$0xff]
    %v93 = vld [vmem:[%s0 + $0x1c0] sm:$0xff]
    %v94 = vld [vmem:[%s0 + $0x1c8] sm:$0xff]
    %v95 = vld [vmem:[%s0 + $0x1d0] sm:$0xff]
    %v96 = vld [vmem:[%s0 + $0x1d8] sm:$0xff]
    %v97 = vld [vmem:[%s0 + $0x1e0] sm:$0xff]
    %v98 = vld [vmem:[%s0 + $0x1e8] sm:$0xff]
    %v99 = vld [vmem:[%s0 + $0x1f0] sm:$0xff]
    %v100 = vld [vmem:[%s0 + $0x1f8] sm:$0xff]
    %v101 = vld [vmem:[%s0 + $0x200] sm:$0xff]
    %v102 = vld [vmem:[%s0 + $0x208] sm:$0xff]
    %v103 = vld [vmem:[%s0 + $0x210] sm:$0xff]
    %v104 = vld [vmem:[%s0 + $0x218] sm:$0xff]
    %v105 = vld [vmem:[%s0 + $0x220] sm:$0xff]
    %v106 = vld [vmem:[%s0 + $0x228] sm:$0xff]
    %v107 = vld [vmem:[%s0 + $0x230] sm:$0xff]
    %v108 = vld [vmem:[%s0 + $0x238] sm:$0xff]
    %v109 = vld [vmem:[%s0 + $0x240] sm:$0xff]
    %v110 = vld [vmem:[%s0 + $0x248] sm:$0xff]
    %v111 = vld [vmem:[%s0 + $0x250] sm:$0xff]
    %v112 = vld [vmem:[%s0 + $0x258] sm:$0xff]
    %v113 = vld [vmem:[%s0 + $0x260] sm:$0xff]
    %v114 = vld [vmem:[%s0 + $0x268] sm:$0xff]
    %v115 = vld [vmem:[%s0 + $0x270] sm:$0xff]
    %v116 = vld [vmem:[%s0 + $0x278] sm:$0xff]
    %v117 = vld [vmem:[%s0 + $0x280] sm:$0xff]
    %v118 = vld [vmem:[%s0 + $0x288] sm:$0xff]
    %v119 = vld [vmem:[%s0 + $0x290] sm:$0xff]
    %v120 = vld [vmem:[%s0 + $0x298] sm:$0xff]
    %v121 = vld [vmem:[%s0 + $0x2a0] sm:$0xff]
    %v122 = vld [vmem:[%s0 + $0x2a8] sm:$0xff]
    %v123 = vld [vmem:[%s0 + $0x2b0] sm:$0xff]
    %v124 = vld [vmem:[%s0 + $0x2b8] sm:$0xff]
    %v125 = vld [vmem:[%s0 + $0x2c0] sm:$0xff]
    %v126 = vld [vmem:[%s0 + $0x2c8] sm:$0xff]
    %v127 = vld [vmem:[%s0 + $0x2d0] sm:$0xff]
    %v128 = vld [vmem:[%s0 + $0x2d8] sm:$0xff]
    %v129 = vld [vmem:[%s0 + $0x2e0] sm:$0xff]
    %v130 = vld [vmem:[%s0 + $0x2e8] sm:$0xff]
    %v131 = vld [vmem:[%s0 + $0x2f0] sm:$0xff]
    %v132 = vld [vmem:[%s0 + $0x2f8] sm:$0xff]
    %v133 = vld [vmem:[%s0 + $0x300] sm:$0xff]
    %v134 = vld [vmem:[%s0 + $0x308] sm:$0xff]
    %v135 = vld [vmem:[%s0 + $0x310] sm:$0xff]
    %v136 = vld [vmem:[%s0 + $0x318] sm:$0xff]
    %v137 = vld [vmem:[%s0 + $0x320] sm:$0xff]
    %v138 = vld [vmem:[%s0 + $0x328] sm:$0xff]
    %v139 = vld [vmem:[%s0 + $0x330] sm:$0xff]
    %v140 = vld [vmem:[%s0 + $0x338] sm:$0xff]
    %v141 = vld [vmem:[%s0 + $0x340] sm:$0xff]
    %v142 = vld [vmem:[%s0 + $0x348] sm:$0xff]
    %v143 = vld [vmem:[%s0 + $0x350] sm:$0xff]
    %v144 = vld [vmem:[%s0 + $0x358] sm:$0xff]
    %v145 = vld [vmem:[%s0 + $0x360] sm:$0xff]
    %v146 = vld [vmem:[%s0 + $0x368] sm:$0xff]
    %v147 = vld [vmem:[%s0 + $0x370] sm:$0xff]
    %v148 = vld [vmem:[%s0 + $0x378] sm:$0xff]
    %v149 = vld [vmem:[%s1] sm:$0xff]
    %v150 = vld [vmem:[%s1 + $0x8] sm:$0xff]
    %v151 = vld [vmem:[%s1 + $0x10] sm:$0xff]
    %v152 = vld [vmem:[%s1 + $0x18] sm:$0xff]
    %v153 = vld [vmem:[%s1 + $0x20] sm:$0xff]
    %v154 = vld [vmem:[%s1 + $0x28] sm:$0xff]
    %v155 = vld [vmem:[%s1 + $0x30] sm:$0xff]
    %v156 = vld [vmem:[%s1 + $0x38] sm:$0xff]
    %v157 = vld [vmem:[%s1 + $0x40] sm:$0xff]
    %v158 = vld [vmem:[%s1 + $0x48] sm:$0xff]
    %v159 = vld [vmem:[%s1 + $0x50] sm:$0xff]
    %v160 = vld [vmem:[%s1 + $0x58] sm:$0xff]
    %v161 = vld [vmem:[%s1 + $0x60] sm:$0xff]
    %v162 = vld [vmem:[%s1 + $0x68] sm:$0xff]
    %v163 = vld [vmem:[%s1 + $0x70] sm:$0xff]
    %v164 = vld [vmem:[%s1 + $0x78] sm:$0xff]
    %v165 = vld [vmem:[%s1 + $0x80] sm:$0xff]
    %v166 = vld [vmem:[%s1 + $0x88] sm:$0xff]
    %v167 = vld [vmem:[%s1 + $0x90] sm:$0xff]
    %v168 = vld [vmem:[%s1 + $0x98] sm:$0xff]
    %v169 = vld [vmem:[%s1 + $0xa0] sm:$0xff]
    %v170 = vld [vmem:[%s1 + $0xa8] sm:$0xff]
    %v171 = vld [vmem:[%s1 + $0xb0] sm:$0xff]
    %v172 = vld [vmem:[%s1 + $0xb8] sm:$0xff]
    %v173 = vld [vmem:[%s1 + $0xc0] sm:$0xff]
    %v174 = vld [vmem:[%s1 + $0xc8] sm:$0xff]
    %v175 = vld [vmem:[%s1 + $0xd0] sm:$0xff]
    %v176 = vld [vmem:[%s1 + $0xd8] sm:$0xff]
    %v177 = vld [vmem:[%s1 + $0xe0] sm:$0xff]
    %v178 = vld [vmem:[%s1 + $0xe8] sm:$0xff]
    %v179 = vld [vmem:[%s1 + $0xf0] sm:$0xff]
    %v180 = vld [vmem:[%s1 + $0xf8] sm:$0xff]
    %v181 = vld [vmem:[%s1 + $0x100] sm:$0xff]
    %v182 = vld [vmem:[%s1 + $0x108] sm:$0xff]
    %v183 = vld [vmem:[%s1 + $0x110] sm:$0xff]
    %v184 = vld [vmem:[%s1 + $0x118] sm:$0xff]
    %v185 = vld [vmem:[%s1 + $0x120] sm:$0xff]
    %v186 = vld [vmem:[%s1 + $0x128] sm:$0xff]
    %v187 = vld [vmem:[%s1 + $0x130] sm:$0xff]
    %v188 = vld [vmem:[%s1 + $0x138] sm:$0xff]
    %v189 = vld [vmem:[%s1 + $0x140] sm:$0xff]
    %v190 = vld [vmem:[%s1 + $0x148] sm:$0xff]
    %v191 = vld [vmem:[%s1 + $0x150] sm:$0xff]
    %v192 = vld [vmem:[%s1 + $0x158] sm:$0xff]
    %v193 = vld [vmem:[%s1 + $0x160] sm:$0xff]
    %v194 = vld [vmem:[%s1 + $0x168] sm:$0xff]
    %v195 = vld [vmem:[%s1 + $0x170] sm:$0xff]
    %v196 = vld [vmem:[%s1 + $0x178] sm:$0xff]
    %v197 = vld [vmem:[%s1 + $0x180] sm:$0xff]
    %v198 = vld [vmem:[%s1 + $0x188] sm:$0xff]
    %v199 = vld [vmem:[%s1 + $0x190] sm:$0xff]
    %v200 = vld [vmem:[%s1 + $0x198] sm:$0xff]
    %v201 = vld [vmem:[%s1 + $0x1a0] sm:$0xff]
    %v202 = vld [vmem:[%s1 + $0x1a8] sm:$0xff]
    %v203 = vld [vmem:[%s1 + $0x1b0] sm:$0xff]
    %v204 = vld [vmem:[%s1 + $0x1b8] sm:$0xff]
    %v205 = vld [vmem:[%s1 + $0x1c0] sm:$0xff]
    %v206 = vld [vmem:[%s1 + $0x1c8] sm:$0xff]
    %v207 = vld [vmem:[%s1 + $0x1d0] sm:$0xff]
    %v208 = vld [vmem:[%s1 + $0x1d8] sm:$0xff]
    %v321 = vunpack.c.l.b16 %v37
    %v322 = vunpack.c.h.b16 %v37
    %v323 = vunpack.c.l.b16 %v38
    %v324 = vunpack.c.h.b16 %v38
    %v325 = vunpack.c.l.b16 %v39
    %v326 = vunpack.c.h.b16 %v39
    %v327 = vunpack.c.l.b16 %v40
    %v328 = vunpack.c.h.b16 %v40
    %v329 = vunpack.c.l.b16 %v41
    %v330 = vunpack.c.h.b16 %v41
    %v331 = vunpack.c.l.b16 %v42
    %v332 = vunpack.c.h.b16 %v42
    %v333 = vunpack.c.l.b16 %v43
    %v334 = vunpack.c.h.b16 %v43
    %v335 = vunpack.c.l.b16 %v44
    %v336 = vunpack.c.h.b16 %v44
    %v337 = vunpack.c.l.b16 %v45
    %v338 = vunpack.c.h.b16 %v45
    %v339 = vunpack.c.l.b16 %v46
    %v340 = vunpack.c.h.b16 %v46
    %v341 = vunpack.c.l.b16 %v47
    %v342 = vunpack.c.h.b16 %v47
    %v343 = vunpack.c.l.b16 %v48
    %v344 = vunpack.c.h.b16 %v48
    %v345 = vunpack.c.l.b16 %v49
    %v346 = vunpack.c.h.b16 %v49
    %v347 = vunpack.c.l.b16 %v50
    %v348 = vunpack.c.h.b16 %v50
    %v349 = vunpack.c.l.b16 %v51
    %v350 = vunpack.c.h.b16 %v51
    %v351 = vunpack.c.l.b16 %v52
    %v352 = vunpack.c.h.b16 %v52
    %v353 = vunpack.c.l.b16 %v53
    %v354 = vunpack.c.h.b16 %v53
    %v355 = vunpack.c.l.b16 %v54
    %v356 = vunpack.c.h.b16 %v54
    %v357 = vunpack.c.l.b16 %v55
    %v358 = vunpack.c.h.b16 %v55
    %v359 = vunpack.c.l.b16 %v56
    %v360 = vunpack.c.h.b16 %v56
    %v361 = vunpack.c.l.b16 %v57
    %v362 = vunpack.c.h.b16 %v57
    %v363 = vunpack.c.l.b16 %v58
    %v364 = vunpack.c.h.b16 %v58
    %v365 = vunpack.c.l.b16 %v59
    %v366 = vunpack.c.h.b16 %v59
    %v367 = vunpack.c.l.b16 %v60
    %v368 = vunpack.c.h.b16 %v60
    %v369 = vunpack.c.l.b16 %v61
    %v370 = vunpack.c.h.b16 %v61
    %v371 = vunpack.c.l.b16 %v62
    %v372 = vunpack.c.h.b16 %v62
    %v373 = vunpack.c.l.b16 %v63
    %v374 = vunpack.c.h.b16 %v63
    %v375 = vunpack.c.l.b16 %v64
    %v376 = vunpack.c.h.b16 %v64
    %v377 = vunpack.c.l.b16 %v65
    %v378 = vunpack.c.h.b16 %v65
    %v379 = vunpack.c.l.b16 %v66
    %v380 = vunpack.c.h.b16 %v66
    %v381 = vunpack.c.l.b16 %v67
    %v382 = vunpack.c.h.b16 %v67
    %v383 = vunpack.c.l.b16 %v68
    %v384 = vunpack.c.h.b16 %v68
    %v385 = vunpack.c.l.b16 %v69
    %v386 = vunpack.c.h.b16 %v69
    %v387 = vunpack.c.l.b16 %v70
    %v388 = vunpack.c.h.b16 %v70
    %v389 = vunpack.c.l.b16 %v71
    %v390 = vunpack.c.h.b16 %v71
    %v391 = vunpack.c.l.b16 %v72
    %v392 = vunpack.c.h.b16 %v72
    %v393 = vunpack.c.l.b16 %v73
    %v394 = vunpack.c.h.b16 %v73
    %v395 = vunpack.c.l.b16 %v74
    %v396 = vunpack.c.h.b16 %v74
    %v397 = vunpack.c.l.b16 %v75
    %v398 = vunpack.c.h.b16 %v75
    %v399 = vunpack.c.l.b16 %v76
    %v400 = vunpack.c.h.b16 %v76
    %v401 = vunpack.c.l.b16 %v77
    %v402 = vunpack.c.h.b16 %v77
    %v403 = vunpack.c.l.b16 %v78
    %v404 = vunpack.c.h.b16 %v78
    %v405 = vunpack.c.l.b16 %v79
    %v406 = vunpack.c.h.b16 %v79
    %v407 = vunpack.c.l.b16 %v80
    %v408 = vunpack.c.h.b16 %v80
    %v409 = vunpack.c.l.b16 %v81
    %v410 = vunpack.c.h.b16 %v81
    %v411 = vunpack.c.l.b16 %v82
    %v412 = vunpack.c.h.b16 %v82
    %v413 = vunpack.c.l.b16 %v83
    %v414 = vunpack.c.h.b16 %v83
    %v415 = vunpack.c.l.b16 %v84
    %v416 = vunpack.c.h.b16 %v84
    %v417 = vunpack.c.l.b16 %v85
    %v418 = vunpack.c.h.b16 %v85
    %v419 = vunpack.c.l.b16 %v86
    %v420 = vunpack.c.h.b16 %v86
    %v421 = vunpack.c.l.b16 %v87
    %v422 = vunpack.c.h.b16 %v87
    %v423 = vunpack.c.l.b16 %v88
    %v424 = vunpack.c.h.b16 %v88
    %v425 = vunpack.c.l.b16 %v89
    %v426 = vunpack.c.h.b16 %v89
    %v427 = vunpack.c.l.b16 %v90
    %v428 = vunpack.c.h.b16 %v90
    %v429 = vunpack.c.l.b16 %v91
    %v430 = vunpack.c.h.b16 %v91
    %v431 = vunpack.c.l.b16 %v92
    %v432 = vunpack.c.h.b16 %v92
    %v433 = vunpack.c.l.b16 %v93
    %v434 = vunpack.c.h.b16 %v93
    %v435 = vunpack.c.l.b16 %v94
    %v436 = vunpack.c.h.b16 %v94
    %v437 = vunpack.c.l.b16 %v95
    %v438 = vunpack.c.h.b16 %v95
    %v439 = vunpack.c.l.b16 %v96
    %v440 = vunpack.c.h.b16 %v96
    %v441 = vunpack.c.l.b16 %v97
    %v442 = vunpack.c.h.b16 %v97
    %v443 = vunpack.c.l.b16 %v98
    %v444 = vunpack.c.h.b16 %v98
    %v445 = vunpack.c.l.b16 %v99
    %v446 = vunpack.c.h.b16 %v99
    %v447 = vunpack.c.l.b16 %v100
    %v448 = vunpack.c.h.b16 %v100
    %v449 = vunpack.c.l.b16 %v101
    %v450 = vunpack.c.h.b16 %v101
    %v451 = vunpack.c.l.b16 %v102
    %v452 = vunpack.c.h.b16 %v102
    %v453 = vunpack.c.l.b16 %v103
    %v454 = vunpack.c.h.b16 %v103
    %v455 = vunpack.c.l.b16 %v104
    %v456 = vunpack.c.h.b16 %v104
    %v457 = vunpack.c.l.b16 %v105
    %v458 = vunpack.c.h.b16 %v105
    %v459 = vunpack.c.l.b16 %v106
    %v460 = vunpack.c.h.b16 %v106
    %v461 = vunpack.c.l.b16 %v107
    %v462 = vunpack.c.h.b16 %v107
    %v463 = vunpack.c.l.b16 %v108
    %v464 = vunpack.c.h.b16 %v108
    %v465 = vunpack.c.l.b16 %v109
    %v466 = vunpack.c.h.b16 %v109
    %v467 = vunpack.c.l.b16 %v110
    %v468 = vunpack.c.h.b16 %v110
    %v469 = vunpack.c.l.b16 %v111
    %v470 = vunpack.c.h.b16 %v111
    %v471 = vunpack.c.l.b16 %v112
    %v472 = vunpack.c.h.b16 %v112
    %v473 = vunpack.c.l.b16 %v113
    %v474 = vunpack.c.h.b16 %v113
    %v475 = vunpack.c.l.b16 %v114
    %v476 = vunpack.c.h.b16 %v114
    %v477 = vunpack.c.l.b16 %v115
    %v478 = vunpack.c.h.b16 %v115
    %v479 = vunpack.c.l.b16 %v116
    %v480 = vunpack.c.h.b16 %v116
    %v481 = vunpack.c.l.b16 %v117
    %v482 = vunpack.c.h.b16 %v117
    %v483 = vunpack.c.l.b16 %v118
    %v484 = vunpack.c.h.b16 %v118
    %v485 = vunpack.c.l.b16 %v119
    %v486 = vunpack.c.h.b16 %v119
    %v487 = vunpack.c.l.b16 %v120
    %v488 = vunpack.c.h.b16 %v120
    %v489 = vunpack.c.l.b16 %v121
    %v490 = vunpack.c.h.b16 %v121
    %v491 = vunpack.c.l.b16 %v122
    %v492 = vunpack.c.h.b16 %v122
    %v493 = vunpack.c.l.b16 %v123
    %v494 = vunpack.c.h.b16 %v123
    %v495 = vunpack.c.l.b16 %v124
    %v496 = vunpack.c.h.b16 %v124
    %v497 = vunpack.c.l.b16 %v125
    %v498 = vunpack.c.h.b16 %v125
    %v499 = vunpack.c.l.b16 %v126
    %v500 = vunpack.c.h.b16 %v126
    %v501 = vunpack.c.l.b16 %v127
    %v502 = vunpack.c.h.b16 %v127
    %v503 = vunpack.c.l.b16 %v128
    %v504 = vunpack.c.h.b16 %v128
    %v505 = vunpack.c.l.b16 %v129
    %v506 = vunpack.c.h.b16 %v129
    %v507 = vunpack.c.l.b16 %v130
    %v508 = vunpack.c.h.b16 %v130
    %v509 = vunpack.c.l.b16 %v131
    %v510 = vunpack.c.h.b16 %v131
    %v511 = vunpack.c.l.b16 %v132
    %v512 = vunpack.c.h.b16 %v132
    %v513 = vunpack.c.l.b16 %v133
    %v514 = vunpack.c.h.b16 %v133
    %v515 = vunpack.c.l.b16 %v134
    %v516 = vunpack.c.h.b16 %v134
    %v517 = vunpack.c.l.b16 %v135
    %v518 = vunpack.c.h.b16 %v135
    %v519 = vunpack.c.l.b16 %v136
    %v520 = vunpack.c.h.b16 %v136
    %v521 = vunpack.c.l.b16 %v137
    %v522 = vunpack.c.h.b16 %v137
    %v523 = vunpack.c.l.b16 %v138
    %v524 = vunpack.c.h.b16 %v138
    %v525 = vunpack.c.l.b16 %v139
    %v526 = vunpack.c.h.b16 %v139
    %v527 = vunpack.c.l.b16 %v140
    %v528 = vunpack.c.h.b16 %v140
    %v529 = vunpack.c.l.b16 %v141
    %v530 = vunpack.c.h.b16 %v141
    %v531 = vunpack.c.l.b16 %v142
    %v532 = vunpack.c.h.b16 %v142
    %v533 = vunpack.c.l.b16 %v143
    %v534 = vunpack.c.h.b16 %v143
    %v535 = vunpack.c.l.b16 %v144
    %v536 = vunpack.c.h.b16 %v144
    %v537 = vunpack.c.l.b16 %v145
    %v538 = vunpack.c.h.b16 %v145
    %v539 = vunpack.c.l.b16 %v146
    %v540 = vunpack.c.h.b16 %v146
    %v541 = vunpack.c.l.b16 %v147
    %v542 = vunpack.c.h.b16 %v147
    %v543 = vunpack.c.l.b16 %v148
    %v544 = vunpack.c.h.b16 %v148
    %v545 = vpack.c.b16 %v325, %v321
    %v546 = vpack.c.b16 %v326, %v322
    %v547 = vpack.c.b16 %v327, %v323
    %v548 = vpack.c.b16 %v328, %v324
    %v549 = vpack.c.b16 %v333, %v329
    %v550 = vpack.c.b16 %v334, %v330
    %v551 = vpack.c.b16 %v335, %v331
    %v552 = vpack.c.b16 %v336, %v332
    %v553 = vpack.c.b16 %v341, %v337
    %v554 = vpack.c.b16 %v342, %v338
    %v555 = vpack.c.b16 %v343, %v339
    %v556 = vpack.c.b16 %v344, %v340
    %v557 = vpack.c.b16 %v349, %v345
    %v558 = vpack.c.b16 %v350, %v346
    %v559 = vpack.c.b16 %v351, %v347
    %v560 = vpack.c.b16 %v352, %v348
    %v561 = vpack.c.b16 %v357, %v353
    %v562 = vpack.c.b16 %v358, %v354
    %v563 = vpack.c.b16 %v359, %v355
    %v564 = vpack.c.b16 %v360, %v356
    %v565 = vpack.c.b16 %v365, %v361
    %v566 = vpack.c.b16 %v366, %v362
    %v567 = vpack.c.b16 %v367, %v363
    %v568 = vpack.c.b16 %v368, %v364
    %v569 = vpack.c.b16 %v373, %v369
    %v570 = vpack.c.b16 %v374, %v370
    %v571 = vpack.c.b16 %v375, %v371
    %v572 = vpack.c.b16 %v376, %v372
    %v573 = vpack.c.b16 %v381, %v377
    %v574 = vpack.c.b16 %v382, %v378
    %v575 = vpack.c.b16 %v383, %v379
    %v576 = vpack.c.b16 %v384, %v380
    %v577 = vpack.c.b16 %v389, %v385
    %v578 = vpack.c.b16 %v390, %v386
    %v579 = vpack.c.b16 %v391, %v387
    %v580 = vpack.c.b16 %v392, %v388
    %v581 = vpack.c.b16 %v397, %v393
    %v582 = vpack.c.b16 %v398, %v394
    %v583 = vpack.c.b16 %v399, %v395
    %v584 = vpack.c.b16 %v400, %v396
    %v585 = vpack.c.b16 %v405, %v401
    %v586 = vpack.c.b16 %v406, %v402
    %v587 = vpack.c.b16 %v407, %v403
    %v588 = vpack.c.b16 %v408, %v404
    %v589 = vpack.c.b16 %v413, %v409
    %v590 = vpack.c.b16 %v414, %v410
    %v591 = vpack.c.b16 %v415, %v411
    %v592 = vpack.c.b16 %v416, %v412
    %v593 = vpack.c.b16 %v421, %v417
    %v594 = vpack.c.b16 %v422, %v418
    %v595 = vpack.c.b16 %v423, %v419
    %v596 = vpack.c.b16 %v424, %v420
    %v597 = vpack.c.b16 %v429, %v425
    %v598 = vpack.c.b16 %v430, %v426
    %v599 = vpack.c.b16 %v431, %v427
    %v600 = vpack.c.b16 %v432, %v428
    %v601 = vpack.c.b16 %v437, %v433
    %v602 = vpack.c.b16 %v438, %v434
    %v603 = vpack.c.b16 %v439, %v435
    %v604 = vpack.c.b16 %v440, %v436
    %v605 = vpack.c.b16 %v445, %v441
    %v606 = vpack.c.b16 %v446, %v442
    %v607 = vpack.c.b16 %v447, %v443
    %v608 = vpack.c.b16 %v448, %v444
    %v609 = vpack.c.b16 %v453, %v449
    %v610 = vpack.c.b16 %v454, %v450
    %v611 = vpack.c.b16 %v455, %v451
    %v612 = vpack.c.b16 %v456, %v452
    %v613 = vpack.c.b16 %v461, %v457
    %v614 = vpack.c.b16 %v462, %v458
    %v615 = vpack.c.b16 %v463, %v459
    %v616 = vpack.c.b16 %v464, %v460
    %v617 = vpack.c.b16 %v469, %v465
    %v618 = vpack.c.b16 %v470, %v466
    %v619 = vpack.c.b16 %v471, %v467
    %v620 = vpack.c.b16 %v472, %v468
    %v621 = vpack.c.b16 %v477, %v473
    %v622 = vpack.c.b16 %v478, %v474
    %v623 = vpack.c.b16 %v479, %v475
    %v624 = vpack.c.b16 %v480, %v476
    %v625 = vpack.c.b16 %v485, %v481
    %v626 = vpack.c.b16 %v486, %v482
    %v627 = vpack.c.b16 %v487, %v483
    %v628 = vpack.c.b16 %v488, %v484
    %v629 = vpack.c.b16 %v493, %v489
    %v630 = vpack.c.b16 %v494, %v490
    %v631 = vpack.c.b16 %v495, %v491
    %v632 = vpack.c.b16 %v496, %v492
    %v633 = vpack.c.b16 %v501, %v497
    %v634 = vpack.c.b16 %v502, %v498
    %v635 = vpack.c.b16 %v503, %v499
    %v636 = vpack.c.b16 %v504, %v500
    %v637 = vpack.c.b16 %v509, %v505
    %v638 = vpack.c.b16 %v510, %v506
    %v639 = vpack.c.b16 %v511, %v507
    %v640 = vpack.c.b16 %v512, %v508
    %v641 = vpack.c.b16 %v517, %v513
    %v642 = vpack.c.b16 %v518, %v514
    %v643 = vpack.c.b16 %v519, %v515
    %v644 = vpack.c.b16 %v520, %v516
    %v645 = vpack.c.b16 %v525, %v521
    %v646 = vpack.c.b16 %v526, %v522
    %v647 = vpack.c.b16 %v527, %v523
    %v648 = vpack.c.b16 %v528, %v524
    %v649 = vpack.c.b16 %v533, %v529
    %v650 = vpack.c.b16 %v534, %v530
    %v651 = vpack.c.b16 %v535, %v531
    %v652 = vpack.c.b16 %v536, %v532
    %v653 = vpack.c.b16 %v541, %v537
    %v654 = vpack.c.b16 %v542, %v538
    %v655 = vpack.c.b16 %v543, %v539
    %v656 = vpack.c.b16 %v544, %v540
    %v801 = vunpack.c.l.b16 %v149
    %v802 = vunpack.c.h.b16 %v149
    %v803 = vunpack.c.l.b16 %v150
    %v804 = vunpack.c.h.b16 %v150
    %v805 = vunpack.c.l.b16 %v151
    %v806 = vunpack.c.h.b16 %v151
    %v807 = vunpack.c.l.b16 %v152
    %v808 = vunpack.c.h.b16 %v152
    %v809 = vunpack.c.l.b16 %v153
    %v810 = vunpack.c.h.b16 %v153
    %v811 = vunpack.c.l.b16 %v154
    %v812 = vunpack.c.h.b16 %v154
    %v813 = vunpack.c.l.b16 %v155
    %v814 = vunpack.c.h.b16 %v155
    %v815 = vunpack.c.l.b16 %v156
    %v816 = vunpack.c.h.b16 %v156
    %v817 = vunpack.c.l.b16 %v157
    %v818 = vunpack.c.h.b16 %v157
    %v819 = vunpack.c.l.b16 %v158
    %v820 = vunpack.c.h.b16 %v158
    %v821 = vunpack.c.l.b16 %v159
    %v822 = vunpack.c.h.b16 %v159
    %v823 = vunpack.c.l.b16 %v160
    %v824 = vunpack.c.h.b16 %v160
    %v825 = vunpack.c.l.b16 %v161
    %v826 = vunpack.c.h.b16 %v161
    %v827 = vunpack.c.l.b16 %v162
    %v828 = vunpack.c.h.b16 %v162
    %v829 = vunpack.c.l.b16 %v163
    %v830 = vunpack.c.h.b16 %v163
    %v831 = vunpack.c.l.b16 %v164
    %v832 = vunpack.c.h.b16 %v164
    %v833 = vunpack.c.l.b16 %v165
    %v834 = vunpack.c.h.b16 %v165
    %v835 = vunpack.c.l.b16 %v166
    %v836 = vunpack.c.h.b16 %v166
    %v837 = vunpack.c.l.b16 %v167
    %v838 = vunpack.c.h.b16 %v167
    %v839 = vunpack.c.l.b16 %v168
    %v840 = vunpack.c.h.b16 %v168
    %v841 = vunpack.c.l.b16 %v169
    %v842 = vunpack.c.h.b16 %v169
    %v843 = vunpack.c.l.b16 %v170
    %v844 = vunpack.c.h.b16 %v170
    %v845 = vunpack.c.l.b16 %v171
    %v846 = vunpack.c.h.b16 %v171
    %v847 = vunpack.c.l.b16 %v172
    %v848 = vunpack.c.h.b16 %v172
    %v849 = vunpack.c.l.b16 %v173
    %v850 = vunpack.c.h.b16 %v173
    %v851 = vunpack.c.l.b16 %v174
    %v852 = vunpack.c.h.b16 %v174
    %v853 = vunpack.c.l.b16 %v175
    %v854 = vunpack.c.h.b16 %v175
    %v855 = vunpack.c.l.b16 %v176
    %v856 = vunpack.c.h.b16 %v176
    %v857 = vunpack.c.l.b16 %v177
    %v858 = vunpack.c.h.b16 %v177
    %v859 = vunpack.c.l.b16 %v178
    %v860 = vunpack.c.h.b16 %v178
    %v861 = vunpack.c.l.b16 %v179
    %v862 = vunpack.c.h.b16 %v179
    %v863 = vunpack.c.l.b16 %v180
    %v864 = vunpack.c.h.b16 %v180
    %v865 = vunpack.c.l.b16 %v181
    %v866 = vunpack.c.h.b16 %v181
    %v867 = vunpack.c.l.b16 %v182
    %v868 = vunpack.c.h.b16 %v182
    %v869 = vunpack.c.l.b16 %v183
    %v870 = vunpack.c.h.b16 %v183
    %v871 = vunpack.c.l.b16 %v184
    %v872 = vunpack.c.h.b16 %v184
    %v873 = vunpack.c.l.b16 %v185
    %v874 = vunpack.c.h.b16 %v185
    %v875 = vunpack.c.l.b16 %v186
    %v876 = vunpack.c.h.b16 %v186
    %v877 = vunpack.c.l.b16 %v187
    %v878 = vunpack.c.h.b16 %v187
    %v879 = vunpack.c.l.b16 %v188
    %v880 = vunpack.c.h.b16 %v188
    %v881 = vunpack.c.l.b16 %v189
    %v882 = vunpack.c.h.b16 %v189
    %v883 = vunpack.c.l.b16 %v190
    %v884 = vunpack.c.h.b16 %v190
    %v885 = vunpack.c.l.b16 %v191
    %v886 = vunpack.c.h.b16 %v191
    %v887 = vunpack.c.l.b16 %v192
    %v888 = vunpack.c.h.b16 %v192
    %v889 = vunpack.c.l.b16 %v193
    %v890 = vunpack.c.h.b16 %v193
    %v891 = vunpack.c.l.b16 %v194
    %v892 = vunpack.c.h.b16 %v194
    %v893 = vunpack.c.l.b16 %v195
    %v894 = vunpack.c.h.b16 %v195
    %v895 = vunpack.c.l.b16 %v196
    %v896 = vunpack.c.h.b16 %v196
    %v897 = vunpack.c.l.b16 %v197
    %v898 = vunpack.c.h.b16 %v197
    %v899 = vunpack.c.l.b16 %v198
    %v900 = vunpack.c.h.b16 %v198
    %v901 = vunpack.c.l.b16 %v199
    %v902 = vunpack.c.h.b16 %v199
    %v903 = vunpack.c.l.b16 %v200
    %v904 = vunpack.c.h.b16 %v200
    %v905 = vunpack.c.l.b16 %v201
    %v906 = vunpack.c.h.b16 %v201
    %v907 = vunpack.c.l.b16 %v202
    %v908 = vunpack.c.h.b16 %v202
    %v909 = vunpack.c.l.b16 %v203
    %v910 = vunpack.c.h.b16 %v203
    %v911 = vunpack.c.l.b16 %v204
    %v912 = vunpack.c.h.b16 %v204
    %v913 = vunpack.c.l.b16 %v205
    %v914 = vunpack.c.h.b16 %v205
    %v915 = vunpack.c.l.b16 %v206
    %v916 = vunpack.c.h.b16 %v206
    %v917 = vunpack.c.l.b16 %v207
    %v918 = vunpack.c.h.b16 %v207
    %v919 = vunpack.c.l.b16 %v208
    %v920 = vunpack.c.h.b16 %v208
    %v921 = vpack.c.b16 %v803, %v801
    %v922 = vpack.c.b16 %v804, %v802
    %v923 = vpack.c.b16 %v807, %v805
    %v924 = vpack.c.b16 %v808, %v806
    %v925 = vpack.c.b16 %v811, %v809
    %v926 = vpack.c.b16 %v812, %v810
    %v927 = vpack.c.b16 %v815, %v813
    %v928 = vpack.c.b16 %v816, %v814
    %v929 = vpack.c.b16 %v819, %v817
    %v930 = vpack.c.b16 %v820, %v818
    %v931 = vpack.c.b16 %v823, %v821
    %v932 = vpack.c.b16 %v824, %v822
    %v933 = vpack.c.b16 %v827, %v825
    %v934 = vpack.c.b16 %v828, %v826
    %v935 = vpack.c.b16 %v831, %v829
    %v936 = vpack.c.b16 %v832, %v830
    %v937 = vpack.c.b16 %v835, %v833
    %v938 = vpack.c.b16 %v836, %v834
    %v939 = vpack.c.b16 %v839, %v837
    %v940 = vpack.c.b16 %v840, %v838
    %v941 = vpack.c.b16 %v843, %v841
    %v942 = vpack.c.b16 %v844, %v842
    %v943 = vpack.c.b16 %v847, %v845
    %v944 = vpack.c.b16 %v848, %v846
    %v945 = vpack.c.b16 %v851, %v849
    %v946 = vpack.c.b16 %v852, %v850
    %v947 = vpack.c.b16 %v855, %v853
    %v948 = vpack.c.b16 %v856, %v854
    %v949 = vpack.c.b16 %v859, %v857
    %v950 = vpack.c.b16 %v860, %v858
    %v951 = vpack.c.b16 %v863, %v861
    %v952 = vpack.c.b16 %v864, %v862
    %v953 = vpack.c.b16 %v867, %v865
    %v954 = vpack.c.b16 %v868, %v866
    %v955 = vpack.c.b16 %v871, %v869
    %v956 = vpack.c.b16 %v872, %v870
    %v957 = vpack.c.b16 %v875, %v873
    %v958 = vpack.c.b16 %v876, %v874
    %v959 = vpack.c.b16 %v879, %v877
    %v960 = vpack.c.b16 %v880, %v878
    %v961 = vpack.c.b16 %v883, %v881
    %v962 = vpack.c.b16 %v884, %v882
    %v963 = vpack.c.b16 %v887, %v885
    %v964 = vpack.c.b16 %v888, %v886
    %v965 = vpack.c.b16 %v891, %v889
    %v966 = vpack.c.b16 %v892, %v890
    %v967 = vpack.c.b16 %v895, %v893
    %v968 = vpack.c.b16 %v896, %v894
    %v969 = vpack.c.b16 %v899, %v897
    %v970 = vpack.c.b16 %v900, %v898
    %v971 = vpack.c.b16 %v903, %v901
    %v972 = vpack.c.b16 %v904, %v902
    %v973 = vpack.c.b16 %v907, %v905
    %v974 = vpack.c.b16 %v908, %v906
    %v975 = vpack.c.b16 %v911, %v909
    %v976 = vpack.c.b16 %v912, %v910
    %v977 = vpack.c.b16 %v915, %v913
    %v978 = vpack.c.b16 %v916, %v914
    %v979 = vpack.c.b16 %v919, %v917
    %v980 = vpack.c.b16 %v920, %v918
    %vm1041 = vcmask 785408
    %v1043 = vsel %vm1041, %v548, 0
    %v1046 = vsel %vm1041, %v552, 0
    %v1049 = vsel %vm1041, %v556, 0
    %v1052 = vsel %vm1041, %v560, 0
    %v1055 = vsel %vm1041, %v564, 0
    %v1058 = vsel %vm1041, %v568, 0
    %v1061 = vsel %vm1041, %v572, 0
    %v1064 = vsel %vm1041, %v576, 0
    %v1067 = vsel %vm1041, %v580, 0
    %v1070 = vsel %vm1041, %v584, 0
    %v1073 = vsel %vm1041, %v588, 0
    %v1076 = vsel %vm1041, %v592, 0
    %v1079 = vsel %vm1041, %v596, 0
    %v1082 = vsel %vm1041, %v600, 0
    %v1085 = vsel %vm1041, %v604, 0
    %v1088 = vsel %vm1041, %v608, 0
    %v1091 = vsel %vm1041, %v612, 0
    %v1094 = vsel %vm1041, %v616, 0
    %v1097 = vsel %vm1041, %v620, 0
    %v1100 = vsel %vm1041, %v624, 0
    %v1103 = vsel %vm1041, %v628, 0
    %v1106 = vsel %vm1041, %v632, 0
    %v1109 = vsel %vm1041, %v636, 0
    %v1112 = vsel %vm1041, %v640, 0
    %v1115 = vsel %vm1041, %v644, 0
    %v1118 = vsel %vm1041, %v648, 0
    %v1121 = vsel %vm1041, %v652, 0
    %v1124 = vsel %vm1041, %v656, 0
    %1126 = vmatprep.subr.bf16.mxu0 %v922
    %1127 = vmatpush1.bf16.msra.mxu0 %v921
    %1128 = vmatprep.subr.bf16.mxu0 %v924
    %1129 = vmatpush1.bf16.msra.mxu0 %v923
    %1130 = vmatprep.subr.bf16.mxu0 %v926
    %1131 = vmatpush1.bf16.msra.mxu0 %v925
    %1132 = vmatprep.subr.bf16.mxu0 %v928
    %1133 = vmatpush1.bf16.msra.mxu0 %v927
    %1134 = vmatprep.subr.bf16.mxu0 %v930
    %1135 = vmatpush1.bf16.msra.mxu0 %v929
    %1136 = vmatprep.subr.bf16.mxu0 %v932
    %1137 = vmatpush1.bf16.msra.mxu0 %v931
    %1138 = vmatprep.subr.bf16.mxu0 %v934
    %1139 = vmatpush1.bf16.msra.mxu0 %v933
    %1140 = vmatprep.subr.bf16.mxu0 %v936
    %1141 = vmatpush1.bf16.msra.mxu0 %v935
    %1142 = vmatprep.subr.bf16.mxu0 %v938
    %1143 = vmatpush1.bf16.msra.mxu0 %v937
    %1144 = vmatprep.subr.bf16.mxu0 %v940
    %1145 = vmatpush1.bf16.msra.mxu0 %v939
    %1146 = vmatprep.subr.bf16.mxu0 %v942
    %1147 = vmatpush1.bf16.msra.mxu0 %v941
    %1148 = vmatprep.subr.bf16.mxu0 %v944
    %1149 = vmatpush1.bf16.msra.mxu0 %v943
    %1150 = vmatprep.subr.bf16.mxu0 %v946
    %1151 = vmatpush1.bf16.msra.mxu0 %v945
    %1152 = vmatprep.subr.bf16.mxu0 %v948
    %1153 = vmatpush1.bf16.msra.mxu0 %v947
    %1154 = vmatprep.subr.bf16.mxu0 %v950
    %1155 = vmatpush1.bf16.msra.mxu0 %v949
    %1156 = vmatprep.subr.bf16.mxu0 %v952
    %1157 = vmatpush1.bf16.msra.mxu0 %v951
    %1158 = vmatprep.mubr.bf16.mxu0 %v546
    %1159 = vmatmul.mubr.bf16.gmra.mrb[0].mxu0 %v545
    %v1160 = vpop.f32.mrb[0].mxu0
    %v1161 = vadd.f32 0.0, %v1160
    %v1162 = vpop.f32.mrb[0].mxu0
    %v1163 = vadd.f32 0.0, %v1162
    %v1164 = vpop.f32.mrb[0].mxu0
    %v1165 = vadd.f32 0.0, %v1164
    %v1166 = vpop.f32.mrb[0].mxu0
    %v1167 = vadd.f32 0.0, %v1166
    %1168 = vmatprep.mubr.bf16.mxu0 %v550
    %1169 = vmatmul.mubr.bf16.gmra.mrb[0].mxu0 %v549
    %v1170 = vpop.f32.mrb[0].mxu0
    %v1171 = vadd.f32 0.0, %v1170
    %v1172 = vpop.f32.mrb[0].mxu0
    %v1173 = vadd.f32 0.0, %v1172
    %v1174 = vpop.f32.mrb[0].mxu0
    %v1175 = vadd.f32 0.0, %v1174
    %v1176 = vpop.f32.mrb[0].mxu0
    %v1177 = vadd.f32 0.0, %v1176
    %1178 = vmatprep.mubr.bf16.mxu0 %v554
    %1179 = vmatmul.mubr.bf16.gmra.mrb[0].mxu0 %v553
    %v1180 = vpop.f32.mrb[0].mxu0
    %v1181 = vadd.f32 0.0, %v1180
    %v1182 = vpop.f32.mrb[0].mxu0
    %v1183 = vadd.f32 0.0, %v1182
    %v1184 = vpop.f32.mrb[0].mxu0
    %v1185 = vadd.f32 0.0, %v1184
    %v1186 = vpop.f32.mrb[0].mxu0
    %v1187 = vadd.f32 0.0, %v1186
    %1188 = vmatprep.mubr.bf16.mxu0 %v558
    %1189 = vmatmul.mubr.bf16.gmra.mrb[0].mxu0 %v557
    %v1190 = vpop.f32.mrb[0].mxu0
    %v1191 = vadd.f32 0.0, %v1190
    %v1192 = vpop.f32.mrb[0].mxu0
    %v1193 = vadd.f32 0.0, %v1192
    %v1194 = vpop.f32.mrb[0].mxu0
    %v1195 = vadd.f32 0.0, %v1194
    %v1196 = vpop.f32.mrb[0].mxu0
    %v1197 = vadd.f32 0.0, %v1196
    %1198 = vmatprep.mubr.bf16.mxu0 %v562
    %1199 = vmatmul.mubr.bf16.gmra.mrb[0].mxu0 %v561
    %v1200 = vpop.f32.mrb[0].mxu0
    %v1201 = vadd.f32 0.0, %v1200
    %v1202 = vpop.f32.mrb[0].mxu0
    %v1203 = vadd.f32 0.0, %v1202
    %v1204 = vpop.f32.mrb[0].mxu0
    %v1205 = vadd.f32 0.0, %v1204
    %v1206 = vpop.f32.mrb[0].mxu0
    %v1207 = vadd.f32 0.0, %v1206
    %1208 = vmatprep.mubr.bf16.mxu0 %v566
    %1209 = vmatmul.mubr.bf16.gmra.mrb[0].mxu0 %v565
    %v1210 = vpop.f32.mrb[0].mxu0
    %v1211 = vadd.f32 0.0, %v1210
    %v1212 = vpop.f32.mrb[0].mxu0
    %v1213 = vadd.f32 0.0, %v1212
    %v1214 = vpop.f32.mrb[0].mxu0
    %v1215 = vadd.f32 0.0, %v1214
    %v1216 = vpop.f32.mrb[0].mxu0
    %v1217 = vadd.f32 0.0, %v1216
    %1218 = vmatprep.mubr.bf16.mxu0 %v570
    %1219 = vmatmul.mubr.bf16.gmra.mrb[0].mxu0 %v569
    %v1220 = vpop.f32.mrb[0].mxu0
    %v1221 = vadd.f32 0.0, %v1220
    %v1222 = vpop.f32.mrb[0].mxu0
    %v1223 = vadd.f32 0.0, %v1222
    %v1224 = vpop.f32.mrb[0].mxu0
    %v1225 = vadd.f32 0.0, %v1224
    %v1226 = vpop.f32.mrb[0].mxu0
    %v1227 = vadd.f32 0.0, %v1226
    %1228 = vmatprep.mubr.bf16.mxu0 %v574
    %1229 = vmatmul.mubr.bf16.gmra.mrb[0].mxu0 %v573
    %v1230 = vpop.f32.mrb[0].mxu0
    %v1231 = vadd.f32 0.0, %v1230
    %v1232 = vpop.f32.mrb[0].mxu0
    %v1233 = vadd.f32 0.0, %v1232
    %v1234 = vpop.f32.mrb[0].mxu0
    %v1235 = vadd.f32 0.0, %v1234
    %v1236 = vpop.f32.mrb[0].mxu0
    %v1237 = vadd.f32 0.0, %v1236
    %1238 = vmatprep.mubr.bf16.mxu0 %v578
    %1239 = vmatmul.mubr.bf16.gmra.mrb[0].mxu0 %v577
    %v1240 = vpop.f32.mrb[0].mxu0
    %v1241 = vadd.f32 0.0, %v1240
    %v1242 = vpop.f32.mrb[0].mxu0
    %v1243 = vadd.f32 0.0, %v1242
    %v1244 = vpop.f32.mrb[0].mxu0
    %v1245 = vadd.f32 0.0, %v1244
    %v1246 = vpop.f32.mrb[0].mxu0
    %v1247 = vadd.f32 0.0, %v1246
    %1248 = vmatprep.mubr.bf16.mxu0 %v582
    %1249 = vmatmul.mubr.bf16.gmra.mrb[0].mxu0 %v581
    %v1250 = vpop.f32.mrb[0].mxu0
    %v1251 = vadd.f32 0.0, %v1250
    %v1252 = vpop.f32.mrb[0].mxu0
    %v1253 = vadd.f32 0.0, %v1252
    %v1254 = vpop.f32.mrb[0].mxu0
    %v1255 = vadd.f32 0.0, %v1254
    %v1256 = vpop.f32.mrb[0].mxu0
    %v1257 = vadd.f32 0.0, %v1256
    %1258 = vmatprep.mubr.bf16.mxu0 %v586
    %1259 = vmatmul.mubr.bf16.gmra.mrb[0].mxu0 %v585
    %v1260 = vpop.f32.mrb[0].mxu0
    %v1261 = vadd.f32 0.0, %v1260
    %v1262 = vpop.f32.mrb[0].mxu0
    %v1263 = vadd.f32 0.0, %v1262
    %v1264 = vpop.f32.mrb[0].mxu0
    %v1265 = vadd.f32 0.0, %v1264
    %v1266 = vpop.f32.mrb[0].mxu0
    %v1267 = vadd.f32 0.0, %v1266
    %1268 = vmatprep.mubr.bf16.mxu0 %v590
    %1269 = vmatmul.mubr.bf16.gmra.mrb[0].mxu0 %v589
    %v1270 = vpop.f32.mrb[0].mxu0
    %v1271 = vadd.f32 0.0, %v1270
    %v1272 = vpop.f32.mrb[0].mxu0
    %v1273 = vadd.f32 0.0, %v1272
    %v1274 = vpop.f32.mrb[0].mxu0
    %v1275 = vadd.f32 0.0, %v1274
    %v1276 = vpop.f32.mrb[0].mxu0
    %v1277 = vadd.f32 0.0, %v1276
    %1278 = vmatprep.mubr.bf16.mxu0 %v594
    %1279 = vmatmul.mubr.bf16.gmra.mrb[0].mxu0 %v593
    %v1280 = vpop.f32.mrb[0].mxu0
    %v1281 = vadd.f32 0.0, %v1280
    %v1282 = vpop.f32.mrb[0].mxu0
    %v1283 = vadd.f32 0.0, %v1282
    %v1284 = vpop.f32.mrb[0].mxu0
    %v1285 = vadd.f32 0.0, %v1284
    %v1286 = vpop.f32.mrb[0].mxu0
    %v1287 = vadd.f32 0.0, %v1286
    %1288 = vmatprep.mubr.bf16.mxu0 %v598
    %1289 = vmatmul.mubr.bf16.gmra.mrb[0].mxu0 %v597
    %v1290 = vpop.f32.mrb[0].mxu0
    %v1291 = vadd.f32 0.0, %v1290
    %v1292 = vpop.f32.mrb[0].mxu0
    %v1293 = vadd.f32 0.0, %v1292
    %v1294 = vpop.f32.mrb[0].mxu0
    %v1295 = vadd.f32 0.0, %v1294
    %v1296 = vpop.f32.mrb[0].mxu0
    %v1297 = vadd.f32 0.0, %v1296
    %1298 = vmatprep.mubr.bf16.mxu0 %v602
    %1299 = vmatmul.mubr.bf16.gmra.mrb[0].mxu0 %v601
    %v1300 = vpop.f32.mrb[0].mxu0
    %v1301 = vadd.f32 0.0, %v1300
    %v1302 = vpop.f32.mrb[0].mxu0
    %v1303 = vadd.f32 0.0, %v1302
    %v1304 = vpop.f32.mrb[0].mxu0
    %v1305 = vadd.f32 0.0, %v1304
    %v1306 = vpop.f32.mrb[0].mxu0
    %v1307 = vadd.f32 0.0, %v1306
    %1308 = vmatprep.mubr.bf16.mxu0 %v606
    %1309 = vmatmul.mubr.bf16.gmra.mrb[0].mxu0 %v605
    %v1310 = vpop.f32.mrb[0].mxu0
    %v1311 = vadd.f32 0.0, %v1310
    %v1312 = vpop.f32.mrb[0].mxu0
    %v1313 = vadd.f32 0.0, %v1312
    %v1314 = vpop.f32.mrb[0].mxu0
    %v1315 = vadd.f32 0.0, %v1314
    %v1316 = vpop.f32.mrb[0].mxu0
    %v1317 = vadd.f32 0.0, %v1316
    %1318 = vmatprep.mubr.bf16.mxu0 %v610
    %1319 = vmatmul.mubr.bf16.gmra.mrb[0].mxu0 %v609
    %v1320 = vpop.f32.mrb[0].mxu0
    %v1321 = vadd.f32 0.0, %v1320
    %v1322 = vpop.f32.mrb[0].mxu0
    %v1323 = vadd.f32 0.0, %v1322
    %v1324 = vpop.f32.mrb[0].mxu0
    %v1325 = vadd.f32 0.0, %v1324
    %v1326 = vpop.f32.mrb[0].mxu0
    %v1327 = vadd.f32 0.0, %v1326
    %1328 = vmatprep.mubr.bf16.mxu0 %v614
    %1329 = vmatmul.mubr.bf16.gmra.mrb[0].mxu0 %v613
    %v1330 = vpop.f32.mrb[0].mxu0
    %v1331 = vadd.f32 0.0, %v1330
    %v1332 = vpop.f32.mrb[0].mxu0
    %v1333 = vadd.f32 0.0, %v1332
    %v1334 = vpop.f32.mrb[0].mxu0
    %v1335 = vadd.f32 0.0, %v1334
    %v1336 = vpop.f32.mrb[0].mxu0
    %v1337 = vadd.f32 0.0, %v1336
    %1338 = vmatprep.mubr.bf16.mxu0 %v618
    %1339 = vmatmul.mubr.bf16.gmra.mrb[0].mxu0 %v617
    %v1340 = vpop.f32.mrb[0].mxu0
    %v1341 = vadd.f32 0.0, %v1340
    %v1342 = vpop.f32.mrb[0].mxu0
    %v1343 = vadd.f32 0.0, %v1342
    %v1344 = vpop.f32.mrb[0].mxu0
    %v1345 = vadd.f32 0.0, %v1344
    %v1346 = vpop.f32.mrb[0].mxu0
    %v1347 = vadd.f32 0.0, %v1346
    %1348 = vmatprep.mubr.bf16.mxu0 %v622
    %1349 = vmatmul.mubr.bf16.gmra.mrb[0].mxu0 %v621
    %v1350 = vpop.f32.mrb[0].mxu0
    %v1351 = vadd.f32 0.0, %v1350
    %v1352 = vpop.f32.mrb[0].mxu0
    %v1353 = vadd.f32 0.0, %v1352
    %v1354 = vpop.f32.mrb[0].mxu0
    %v1355 = vadd.f32 0.0, %v1354
    %v1356 = vpop.f32.mrb[0].mxu0
    %v1357 = vadd.f32 0.0, %v1356
    %1358 = vmatprep.mubr.bf16.mxu0 %v626
    %1359 = vmatmul.mubr.bf16.gmra.mrb[0].mxu0 %v625
    %v1360 = vpop.f32.mrb[0].mxu0
    %v1361 = vadd.f32 0.0, %v1360
    %v1362 = vpop.f32.mrb[0].mxu0
    %v1363 = vadd.f32 0.0, %v1362
    %v1364 = vpop.f32.mrb[0].mxu0
    %v1365 = vadd.f32 0.0, %v1364
    %v1366 = vpop.f32.mrb[0].mxu0
    %v1367 = vadd.f32 0.0, %v1366
    %1368 = vmatprep.mubr.bf16.mxu0 %v630
    %1369 = vmatmul.mubr.bf16.gmra.mrb[0].mxu0 %v629
    %v1370 = vpop.f32.mrb[0].mxu0
    %v1371 = vadd.f32 0.0, %v1370
    %v1372 = vpop.f32.mrb[0].mxu0
    %v1373 = vadd.f32 0.0, %v1372
    %v1374 = vpop.f32.mrb[0].mxu0
    %v1375 = vadd.f32 0.0, %v1374
    %v1376 = vpop.f32.mrb[0].mxu0
    %v1377 = vadd.f32 0.0, %v1376
    %1378 = vmatprep.mubr.bf16.mxu0 %v634
    %1379 = vmatmul.mubr.bf16.gmra.mrb[0].mxu0 %v633
    %v1380 = vpop.f32.mrb[0].mxu0
    %v1381 = vadd.f32 0.0, %v1380
    %v1382 = vpop.f32.mrb[0].mxu0
    %v1383 = vadd.f32 0.0, %v1382
    %v1384 = vpop.f32.mrb[0].mxu0
    %v1385 = vadd.f32 0.0, %v1384
    %v1386 = vpop.f32.mrb[0].mxu0
    %v1387 = vadd.f32 0.0, %v1386
    %1388 = vmatprep.mubr.bf16.mxu0 %v638
    %1389 = vmatmul.mubr.bf16.gmra.mrb[0].mxu0 %v637
    %v1390 = vpop.f32.mrb[0].mxu0
    %v1391 = vadd.f32 0.0, %v1390
    %v1392 = vpop.f32.mrb[0].mxu0
    %v1393 = vadd.f32 0.0, %v1392
    %v1394 = vpop.f32.mrb[0].mxu0
    %v1395 = vadd.f32 0.0, %v1394
    %v1396 = vpop.f32.mrb[0].mxu0
    %v1397 = vadd.f32 0.0, %v1396
    %1398 = vmatprep.mubr.bf16.mxu0 %v642
    %1399 = vmatmul.mubr.bf16.gmra.mrb[0].mxu0 %v641
    %v1400 = vpop.f32.mrb[0].mxu0
    %v1401 = vadd.f32 0.0, %v1400
    %v1402 = vpop.f32.mrb[0].mxu0
    %v1403 = vadd.f32 0.0, %v1402
    %v1404 = vpop.f32.mrb[0].mxu0
    %v1405 = vadd.f32 0.0, %v1404
    %v1406 = vpop.f32.mrb[0].mxu0
    %v1407 = vadd.f32 0.0, %v1406
    %1408 = vmatprep.mubr.bf16.mxu0 %v646
    %1409 = vmatmul.mubr.bf16.gmra.mrb[0].mxu0 %v645
    %v1410 = vpop.f32.mrb[0].mxu0
    %v1411 = vadd.f32 0.0, %v1410
    %v1412 = vpop.f32.mrb[0].mxu0
    %v1413 = vadd.f32 0.0, %v1412
    %v1414 = vpop.f32.mrb[0].mxu0
    %v1415 = vadd.f32 0.0, %v1414
    %v1416 = vpop.f32.mrb[0].mxu0
    %v1417 = vadd.f32 0.0, %v1416
    %1418 = vmatprep.mubr.bf16.mxu0 %v650
    %1419 = vmatmul.mubr.bf16.gmra.mrb[0].mxu0 %v649
    %v1420 = vpop.f32.mrb[0].mxu0
    %v1421 = vadd.f32 0.0, %v1420
    %v1422 = vpop.f32.mrb[0].mxu0
    %v1423 = vadd.f32 0.0, %v1422
    %v1424 = vpop.f32.mrb[0].mxu0
    %v1425 = vadd.f32 0.0, %v1424
    %v1426 = vpop.f32.mrb[0].mxu0
    %v1427 = vadd.f32 0.0, %v1426
    %1428 = vmatprep.mubr.bf16.mxu0 %v654
    %1429 = vmatmul.mubr.bf16.gmra.mrb[0].mxu0 %v653
    %v1430 = vpop.f32.mrb[0].mxu0
    %v1431 = vadd.f32 0.0, %v1430
    %v1432 = vpop.f32.mrb[0].mxu0
    %v1433 = vadd.f32 0.0, %v1432
    %v1434 = vpop.f32.mrb[0].mxu0
    %v1435 = vadd.f32 0.0, %v1434
    %v1436 = vpop.f32.mrb[0].mxu0
    %v1437 = vadd.f32 0.0, %v1436
    %1438 = vdwg.mxu0
    %1439 = vmatprep.subr.bf16.mxu0 %v954
    %1440 = vmatpush1.bf16.msra.mxu0 %v953
    %1441 = vmatprep.subr.bf16.mxu0 %v956
    %1442 = vmatpush1.bf16.msra.mxu0 %v955
    %1443 = vmatprep.subr.bf16.mxu0 %v958
    %1444 = vmatpush1.bf16.msra.mxu0 %v957
    %1445 = vmatprep.subr.bf16.mxu0 %v960
    %1446 = vmatpush1.bf16.msra.mxu0 %v959
    %1447 = vmatprep.subr.bf16.mxu0 %v962
    %1448 = vmatpush1.bf16.msra.mxu0 %v961
    %1449 = vmatprep.subr.bf16.mxu0 %v964
    %1450 = vmatpush1.bf16.msra.mxu0 %v963
    %1451 = vmatprep.subr.bf16.mxu0 %v966
    %1452 = vmatpush1.bf16.msra.mxu0 %v965
    %1453 = vmatprep.subr.bf16.mxu0 %v968
    %1454 = vmatpush1.bf16.msra.mxu0 %v967
    %1455 = vmatprep.subr.bf16.mxu0 %v970
    %1456 = vmatpush1.bf16.msra.mxu0 %v969
    %1457 = vmatprep.subr.bf16.mxu0 %v972
    %1458 = vmatpush1.bf16.msra.mxu0 %v971
    %1459 = vmatprep.subr.bf16.mxu0 %v974
    %1460 = vmatpush1.bf16.msra.mxu0 %v973
    %1461 = vmatprep.subr.bf16.mxu0 %v976
    %1462 = vmatpush1.bf16.msra.mxu0 %v975
    %1463 = vmatprep.subr.bf16.mxu0 %v978
    %1464 = vmatpush1.bf16.msra.mxu0 %v977
    %1465 = vmatprep.subr.bf16.mxu0 %v980
    %1466 = vmatpush1.bf16.msra.mxu0 %v979
    %1467 = vmatprep.subr.bf16.mxu0 0
    %1468 = vmatpush1.bf16.msra.mxu0 0
    %1469 = vmatprep.subr.bf16.mxu0 0
    %1470 = vmatpush1.bf16.msra.mxu0 0
    %1471 = vmatprep.mubr.bf16.mxu0 %v1043
    %1472 = vmatmul.mubr.bf16.gmra.mrb[0].mxu0 %v547
    %v1473 = vpop.f32.mrb[0].mxu0
    %v1474 = vadd.f32 %v1161, %v1473
    %v1475 = vpop.f32.mrb[0].mxu0
    %v1476 = vadd.f32 %v1163, %v1475
    %v1477 = vpop.f32.mrb[0].mxu0
    %v1478 = vadd.f32 %v1165, %v1477
    %v1479 = vpop.f32.mrb[0].mxu0
    %v1480 = vadd.f32 %v1167, %v1479
    %1481 = vmatprep.mubr.bf16.mxu0 %v1046
    %1482 = vmatmul.mubr.bf16.gmra.mrb[0].mxu0 %v551
    %v1483 = vpop.f32.mrb[0].mxu0
    %v1484 = vadd.f32 %v1171, %v1483
    %v1485 = vpop.f32.mrb[0].mxu0
    %v1486 = vadd.f32 %v1173, %v1485
    %v1487 = vpop.f32.mrb[0].mxu0
    %v1488 = vadd.f32 %v1175, %v1487
    %v1489 = vpop.f32.mrb[0].mxu0
    %v1490 = vadd.f32 %v1177, %v1489
    %1491 = vmatprep.mubr.bf16.mxu0 %v1049
    %1492 = vmatmul.mubr.bf16.gmra.mrb[0].mxu0 %v555
    %v1493 = vpop.f32.mrb[0].mxu0
    %v1494 = vadd.f32 %v1181, %v1493
    %v1495 = vpop.f32.mrb[0].mxu0
    %v1496 = vadd.f32 %v1183, %v1495
    %v1497 = vpop.f32.mrb[0].mxu0
    %v1498 = vadd.f32 %v1185, %v1497
    %v1499 = vpop.f32.mrb[0].mxu0
    %v1500 = vadd.f32 %v1187, %v1499
    %1501 = vmatprep.mubr.bf16.mxu0 %v1052
    %1502 = vmatmul.mubr.bf16.gmra.mrb[0].mxu0 %v559
    %v1503 = vpop.f32.mrb[0].mxu0
    %v1504 = vadd.f32 %v1191, %v1503
    %v1505 = vpop.f32.mrb[0].mxu0
    %v1506 = vadd.f32 %v1193, %v1505
    %v1507 = vpop.f32.mrb[0].mxu0
    %v1508 = vadd.f32 %v1195, %v1507
    %v1509 = vpop.f32.mrb[0].mxu0
    %v1510 = vadd.f32 %v1197, %v1509
    %1511 = vmatprep.mubr.bf16.mxu0 %v1055
    %1512 = vmatmul.mubr.bf16.gmra.mrb[0].mxu0 %v563
    %v1513 = vpop.f32.mrb[0].mxu0
    %v1514 = vadd.f32 %v1201, %v1513
    %v1515 = vpop.f32.mrb[0].mxu0
    %v1516 = vadd.f32 %v1203, %v1515
    %v1517 = vpop.f32.mrb[0].mxu0
    %v1518 = vadd.f32 %v1205, %v1517
    %v1519 = vpop.f32.mrb[0].mxu0
    %v1520 = vadd.f32 %v1207, %v1519
    %1521 = vmatprep.mubr.bf16.mxu0 %v1058
    %1522 = vmatmul.mubr.bf16.gmra.mrb[0].mxu0 %v567
    %v1523 = vpop.f32.mrb[0].mxu0
    %v1524 = vadd.f32 %v1211, %v1523
    %v1525 = vpop.f32.mrb[0].mxu0
    %v1526 = vadd.f32 %v1213, %v1525
    %v1527 = vpop.f32.mrb[0].mxu0
    %v1528 = vadd.f32 %v1215, %v1527
    %v1529 = vpop.f32.mrb[0].mxu0
    %v1530 = vadd.f32 %v1217, %v1529
    %1531 = vmatprep.mubr.bf16.mxu0 %v1061
    %1532 = vmatmul.mubr.bf16.gmra.mrb[0].mxu0 %v571
    %v1533 = vpop.f32.mrb[0].mxu0
    %v1534 = vadd.f32 %v1221, %v1533
    %v1535 = vpop.f32.mrb[0].mxu0
    %v1536 = vadd.f32 %v1223, %v1535
    %v1537 = vpop.f32.mrb[0].mxu0
    %v1538 = vadd.f32 %v1225, %v1537
    %v1539 = vpop.f32.mrb[0].mxu0
    %v1540 = vadd.f32 %v1227, %v1539
    %1541 = vmatprep.mubr.bf16.mxu0 %v1064
    %1542 = vmatmul.mubr.bf16.gmra.mrb[0].mxu0 %v575
    %v1543 = vpop.f32.mrb[0].mxu0
    %v1544 = vadd.f32 %v1231, %v1543
    %v1545 = vpop.f32.mrb[0].mxu0
    %v1546 = vadd.f32 %v1233, %v1545
    %v1547 = vpop.f32.mrb[0].mxu0
    %v1548 = vadd.f32 %v1235, %v1547
    %v1549 = vpop.f32.mrb[0].mxu0
    %v1550 = vadd.f32 %v1237, %v1549
    %1551 = vmatprep.mubr.bf16.mxu0 %v1067
    %1552 = vmatmul.mubr.bf16.gmra.mrb[0].mxu0 %v579
    %v1553 = vpop.f32.mrb[0].mxu0
    %v1554 = vadd.f32 %v1241, %v1553
    %v1555 = vpop.f32.mrb[0].mxu0
    %v1556 = vadd.f32 %v1243, %v1555
    %v1557 = vpop.f32.mrb[0].mxu0
    %v1558 = vadd.f32 %v1245, %v1557
    %v1559 = vpop.f32.mrb[0].mxu0
    %v1560 = vadd.f32 %v1247, %v1559
    %1561 = vmatprep.mubr.bf16.mxu0 %v1070
    %1562 = vmatmul.mubr.bf16.gmra.mrb[0].mxu0 %v583
    %v1563 = vpop.f32.mrb[0].mxu0
    %v1564 = vadd.f32 %v1251, %v1563
    %v1565 = vpop.f32.mrb[0].mxu0
    %v1566 = vadd.f32 %v1253, %v1565
    %v1567 = vpop.f32.mrb[0].mxu0
    %v1568 = vadd.f32 %v1255, %v1567
    %v1569 = vpop.f32.mrb[0].mxu0
    %v1570 = vadd.f32 %v1257, %v1569
    %1571 = vmatprep.mubr.bf16.mxu0 %v1073
    %1572 = vmatmul.mubr.bf16.gmra.mrb[0].mxu0 %v587
    %v1573 = vpop.f32.mrb[0].mxu0
    %v1574 = vadd.f32 %v1261, %v1573
    %v1575 = vpop.f32.mrb[0].mxu0
    %v1576 = vadd.f32 %v1263, %v1575
    %v1577 = vpop.f32.mrb[0].mxu0
    %v1578 = vadd.f32 %v1265, %v1577
    %v1579 = vpop.f32.mrb[0].mxu0
    %v1580 = vadd.f32 %v1267, %v1579
    %1581 = vmatprep.mubr.bf16.mxu0 %v1076
    %1582 = vmatmul.mubr.bf16.gmra.mrb[0].mxu0 %v591
    %v1583 = vpop.f32.mrb[0].mxu0
    %v1584 = vadd.f32 %v1271, %v1583
    %v1585 = vpop.f32.mrb[0].mxu0
    %v1586 = vadd.f32 %v1273, %v1585
    %v1587 = vpop.f32.mrb[0].mxu0
    %v1588 = vadd.f32 %v1275, %v1587
    %v1589 = vpop.f32.mrb[0].mxu0
    %v1590 = vadd.f32 %v1277, %v1589
    %1591 = vmatprep.mubr.bf16.mxu0 %v1079
    %1592 = vmatmul.mubr.bf16.gmra.mrb[0].mxu0 %v595
    %v1593 = vpop.f32.mrb[0].mxu0
    %v1594 = vadd.f32 %v1281, %v1593
    %v1595 = vpop.f32.mrb[0].mxu0
    %v1596 = vadd.f32 %v1283, %v1595
    %v1597 = vpop.f32.mrb[0].mxu0
    %v1598 = vadd.f32 %v1285, %v1597
    %v1599 = vpop.f32.mrb[0].mxu0
    %v1600 = vadd.f32 %v1287, %v1599
    %1601 = vmatprep.mubr.bf16.mxu0 %v1082
    %1602 = vmatmul.mubr.bf16.gmra.mrb[0].mxu0 %v599
    %v1603 = vpop.f32.mrb[0].mxu0
    %v1604 = vadd.f32 %v1291, %v1603
    %v1605 = vpop.f32.mrb[0].mxu0
    %v1606 = vadd.f32 %v1293, %v1605
    %v1607 = vpop.f32.mrb[0].mxu0
    %v1608 = vadd.f32 %v1295, %v1607
    %v1609 = vpop.f32.mrb[0].mxu0
    %v1610 = vadd.f32 %v1297, %v1609
    %1611 = vmatprep.mubr.bf16.mxu0 %v1085
    %1612 = vmatmul.mubr.bf16.gmra.mrb[0].mxu0 %v603
    %v1613 = vpop.f32.mrb[0].mxu0
    %v1614 = vadd.f32 %v1301, %v1613
    %v1615 = vpop.f32.mrb[0].mxu0
    %v1616 = vadd.f32 %v1303, %v1615
    %v1617 = vpop.f32.mrb[0].mxu0
    %v1618 = vadd.f32 %v1305, %v1617
    %v1619 = vpop.f32.mrb[0].mxu0
    %v1620 = vadd.f32 %v1307, %v1619
    %1621 = vmatprep.mubr.bf16.mxu0 %v1088
    %1622 = vmatmul.mubr.bf16.gmra.mrb[0].mxu0 %v607
    %v1623 = vpop.f32.mrb[0].mxu0
    %v1624 = vadd.f32 %v1311, %v1623
    %v1625 = vpop.f32.mrb[0].mxu0
    %v1626 = vadd.f32 %v1313, %v1625
    %v1627 = vpop.f32.mrb[0].mxu0
    %v1628 = vadd.f32 %v1315, %v1627
    %v1629 = vpop.f32.mrb[0].mxu0
    %v1630 = vadd.f32 %v1317, %v1629
    %1631 = vmatprep.mubr.bf16.mxu0 %v1091
    %1632 = vmatmul.mubr.bf16.gmra.mrb[0].mxu0 %v611
    %v1633 = vpop.f32.mrb[0].mxu0
    %v1634 = vadd.f32 %v1321, %v1633
    %v1635 = vpop.f32.mrb[0].mxu0
    %v1636 = vadd.f32 %v1323, %v1635
    %v1637 = vpop.f32.mrb[0].mxu0
    %v1638 = vadd.f32 %v1325, %v1637
    %v1639 = vpop.f32.mrb[0].mxu0
    %v1640 = vadd.f32 %v1327, %v1639
    %1641 = vmatprep.mubr.bf16.mxu0 %v1094
    %1642 = vmatmul.mubr.bf16.gmra.mrb[0].mxu0 %v615
    %v1643 = vpop.f32.mrb[0].mxu0
    %v1644 = vadd.f32 %v1331, %v1643
    %v1645 = vpop.f32.mrb[0].mxu0
    %v1646 = vadd.f32 %v1333, %v1645
    %v1647 = vpop.f32.mrb[0].mxu0
    %v1648 = vadd.f32 %v1335, %v1647
    %v1649 = vpop.f32.mrb[0].mxu0
    %v1650 = vadd.f32 %v1337, %v1649
    %1651 = vmatprep.mubr.bf16.mxu0 %v1097
    %1652 = vmatmul.mubr.bf16.gmra.mrb[0].mxu0 %v619
    %v1653 = vpop.f32.mrb[0].mxu0
    %v1654 = vadd.f32 %v1341, %v1653
    %v1655 = vpop.f32.mrb[0].mxu0
    %v1656 = vadd.f32 %v1343, %v1655
    %v1657 = vpop.f32.mrb[0].mxu0
    %v1658 = vadd.f32 %v1345, %v1657
    %v1659 = vpop.f32.mrb[0].mxu0
    %v1660 = vadd.f32 %v1347, %v1659
    %1661 = vmatprep.mubr.bf16.mxu0 %v1100
    %1662 = vmatmul.mubr.bf16.gmra.mrb[0].mxu0 %v623
    %v1663 = vpop.f32.mrb[0].mxu0
    %v1664 = vadd.f32 %v1351, %v1663
    %v1665 = vpop.f32.mrb[0].mxu0
    %v1666 = vadd.f32 %v1353, %v1665
    %v1667 = vpop.f32.mrb[0].mxu0
    %v1668 = vadd.f32 %v1355, %v1667
    %v1669 = vpop.f32.mrb[0].mxu0
    %v1670 = vadd.f32 %v1357, %v1669
    %1671 = vmatprep.mubr.bf16.mxu0 %v1103
    %1672 = vmatmul.mubr.bf16.gmra.mrb[0].mxu0 %v627
    %v1673 = vpop.f32.mrb[0].mxu0
    %v1674 = vadd.f32 %v1361, %v1673
    %v1675 = vpop.f32.mrb[0].mxu0
    %v1676 = vadd.f32 %v1363, %v1675
    %v1677 = vpop.f32.mrb[0].mxu0
    %v1678 = vadd.f32 %v1365, %v1677
    %v1679 = vpop.f32.mrb[0].mxu0
    %v1680 = vadd.f32 %v1367, %v1679
    %1681 = vmatprep.mubr.bf16.mxu0 %v1106
    %1682 = vmatmul.mubr.bf16.gmra.mrb[0].mxu0 %v631
    %v1683 = vpop.f32.mrb[0].mxu0
    %v1684 = vadd.f32 %v1371, %v1683
    %v1685 = vpop.f32.mrb[0].mxu0
    %v1686 = vadd.f32 %v1373, %v1685
    %v1687 = vpop.f32.mrb[0].mxu0
    %v1688 = vadd.f32 %v1375, %v1687
    %v1689 = vpop.f32.mrb[0].mxu0
    %v1690 = vadd.f32 %v1377, %v1689
    %1691 = vmatprep.mubr.bf16.mxu0 %v1109
    %1692 = vmatmul.mubr.bf16.gmra.mrb[0].mxu0 %v635
    %v1693 = vpop.f32.mrb[0].mxu0
    %v1694 = vadd.f32 %v1381, %v1693
    %v1695 = vpop.f32.mrb[0].mxu0
    %v1696 = vadd.f32 %v1383, %v1695
    %v1697 = vpop.f32.mrb[0].mxu0
    %v1698 = vadd.f32 %v1385, %v1697
    %v1699 = vpop.f32.mrb[0].mxu0
    %v1700 = vadd.f32 %v1387, %v1699
    %1701 = vmatprep.mubr.bf16.mxu0 %v1112
    %1702 = vmatmul.mubr.bf16.gmra.mrb[0].mxu0 %v639
    %v1703 = vpop.f32.mrb[0].mxu0
    %v1704 = vadd.f32 %v1391, %v1703
    %v1705 = vpop.f32.mrb[0].mxu0
    %v1706 = vadd.f32 %v1393, %v1705
    %v1707 = vpop.f32.mrb[0].mxu0
    %v1708 = vadd.f32 %v1395, %v1707
    %v1709 = vpop.f32.mrb[0].mxu0
    %v1710 = vadd.f32 %v1397, %v1709
    %1711 = vmatprep.mubr.bf16.mxu0 %v1115
    %1712 = vmatmul.mubr.bf16.gmra.mrb[0].mxu0 %v643
    %v1713 = vpop.f32.mrb[0].mxu0
    %v1714 = vadd.f32 %v1401, %v1713
    %v1715 = vpop.f32.mrb[0].mxu0
    %v1716 = vadd.f32 %v1403, %v1715
    %v1717 = vpop.f32.mrb[0].mxu0
    %v1718 = vadd.f32 %v1405, %v1717
    %v1719 = vpop.f32.mrb[0].mxu0
    %v1720 = vadd.f32 %v1407, %v1719
    %1721 = vmatprep.mubr.bf16.mxu0 %v1118
    %1722 = vmatmul.mubr.bf16.gmra.mrb[0].mxu0 %v647
    %v1723 = vpop.f32.mrb[0].mxu0
    %v1724 = vadd.f32 %v1411, %v1723
    %v1725 = vpop.f32.mrb[0].mxu0
    %v1726 = vadd.f32 %v1413, %v1725
    %v1727 = vpop.f32.mrb[0].mxu0
    %v1728 = vadd.f32 %v1415, %v1727
    %v1729 = vpop.f32.mrb[0].mxu0
    %v1730 = vadd.f32 %v1417, %v1729
    %1731 = vmatprep.mubr.bf16.mxu0 %v1121
    %1732 = vmatmul.mubr.bf16.gmra.mrb[0].mxu0 %v651
    %v1733 = vpop.f32.mrb[0].mxu0
    %v1734 = vadd.f32 %v1421, %v1733
    %v1735 = vpop.f32.mrb[0].mxu0
    %v1736 = vadd.f32 %v1423, %v1735
    %v1737 = vpop.f32.mrb[0].mxu0
    %v1738 = vadd.f32 %v1425, %v1737
    %v1739 = vpop.f32.mrb[0].mxu0
    %v1740 = vadd.f32 %v1427, %v1739
    %1741 = vmatprep.mubr.bf16.mxu0 %v1124
    %1742 = vmatmul.mubr.bf16.gmra.mrb[0].mxu0 %v655
    %v1743 = vpop.f32.mrb[0].mxu0
    %v1744 = vadd.f32 %v1431, %v1743
    %v1745 = vpop.f32.mrb[0].mxu0
    %v1746 = vadd.f32 %v1433, %v1745
    %v1747 = vpop.f32.mrb[0].mxu0
    %v1748 = vadd.f32 %v1435, %v1747
    %v1749 = vpop.f32.mrb[0].mxu0
    %v1750 = vadd.f32 %v1437, %v1749
    %1751 = vdwg.mxu0
    %v1752 = vtanh.pop %v1474
    %v1753 = vtanh.pop %v1476
    %v1754 = vtanh.pop %v1478
    %v1755 = vtanh.pop %v1480
    %v1756 = vtanh.pop %v1484
    %v1757 = vtanh.pop %v1486
    %v1758 = vtanh.pop %v1488
    %v1759 = vtanh.pop %v1490
    %v1760 = vtanh.pop %v1494
    %v1761 = vtanh.pop %v1496
    %v1762 = vtanh.pop %v1498
    %v1763 = vtanh.pop %v1500
    %v1764 = vtanh.pop %v1504
    %v1765 = vtanh.pop %v1506
    %v1766 = vtanh.pop %v1508
    %v1767 = vtanh.pop %v1510
    %v1768 = vtanh.pop %v1514
    %v1769 = vtanh.pop %v1516
    %v1770 = vtanh.pop %v1518
    %v1771 = vtanh.pop %v1520
    %v1772 = vtanh.pop %v1524
    %v1773 = vtanh.pop %v1526
    %v1774 = vtanh.pop %v1528
    %v1775 = vtanh.pop %v1530
    %v1776 = vtanh.pop %v1534
    %v1777 = vtanh.pop %v1536
    %v1778 = vtanh.pop %v1538
    %v1779 = vtanh.pop %v1540
    %v1780 = vtanh.pop %v1544
    %v1781 = vtanh.pop %v1546
    %v1782 = vtanh.pop %v1548
    %v1783 = vtanh.pop %v1550
    %v1784 = vtanh.pop %v1554
    %v1785 = vtanh.pop %v1556
    %v1786 = vtanh.pop %v1558
    %v1787 = vtanh.pop %v1560
    %v1788 = vtanh.pop %v1564
    %v1789 = vtanh.pop %v1566
    %v1790 = vtanh.pop %v1568
    %v1791 = vtanh.pop %v1570
    %v1792 = vtanh.pop %v1574
    %v1793 = vtanh.pop %v1576
    %v1794 = vtanh.pop %v1578
    %v1795 = vtanh.pop %v1580
    %v1796 = vtanh.pop %v1584
    %v1797 = vtanh.pop %v1586
    %v1798 = vtanh.pop %v1588
    %v1799 = vtanh.pop %v1590
    %v1800 = vtanh.pop %v1594
    %v1801 = vtanh.pop %v1596
    %v1802 = vtanh.pop %v1598
    %v1803 = vtanh.pop %v1600
    %v1804 = vtanh.pop %v1604
    %v1805 = vtanh.pop %v1606
    %v1806 = vtanh.pop %v1608
    %v1807 = vtanh.pop %v1610
    %v1808 = vtanh.pop %v1614
    %v1809 = vtanh.pop %v1616
    %v1810 = vtanh.pop %v1618
    %v1811 = vtanh.pop %v1620
    %v1812 = vtanh.pop %v1624
    %v1813 = vtanh.pop %v1626
    %v1814 = vtanh.pop %v1628
    %v1815 = vtanh.pop %v1630
    %v1816 = vtanh.pop %v1634
    %v1817 = vtanh.pop %v1636
    %v1818 = vtanh.pop %v1638
    %v1819 = vtanh.pop %v1640
    %v1820 = vtanh.pop %v1644
    %v1821 = vtanh.pop %v1646
    %v1822 = vtanh.pop %v1648
    %v1823 = vtanh.pop %v1650
    %v1824 = vtanh.pop %v1654
    %v1825 = vtanh.pop %v1656
    %v1826 = vtanh.pop %v1658
    %v1827 = vtanh.pop %v1660
    %v1828 = vtanh.pop %v1664
    %v1829 = vtanh.pop %v1666
    %v1830 = vtanh.pop %v1668
    %v1831 = vtanh.pop %v1670
    %v1832 = vtanh.pop %v1674
    %v1833 = vtanh.pop %v1676
    %v1834 = vtanh.pop %v1678
    %v1835 = vtanh.pop %v1680
    %v1836 = vtanh.pop %v1684
    %v1837 = vtanh.pop %v1686
    %v1838 = vtanh.pop %v1688
    %v1839 = vtanh.pop %v1690
    %v1840 = vtanh.pop %v1694
    %v1841 = vtanh.pop %v1696
    %v1842 = vtanh.pop %v1698
    %v1843 = vtanh.pop %v1700
    %v1844 = vtanh.pop %v1704
    %v1845 = vtanh.pop %v1706
    %v1846 = vtanh.pop %v1708
    %v1847 = vtanh.pop %v1710
    %v1848 = vtanh.pop %v1714
    %v1849 = vtanh.pop %v1716
    %v1850 = vtanh.pop %v1718
    %v1851 = vtanh.pop %v1720
    %v1852 = vtanh.pop %v1724
    %v1853 = vtanh.pop %v1726
    %v1854 = vtanh.pop %v1728
    %v1855 = vtanh.pop %v1730
    %v1856 = vtanh.pop %v1734
    %v1857 = vtanh.pop %v1736
    %v1858 = vtanh.pop %v1738
    %v1859 = vtanh.pop %v1740
    %v1860 = vtanh.pop %v1744
    %v1861 = vtanh.pop %v1746
    %v1862 = vtanh.pop %v1748
    %v1863 = vtanh.pop %v1750
    %v1864 = vpack.c.bf16 %v1754, %v1752
    %v1865 = vpack.c.bf16 %v1755, %v1753
    %v1866 = vpack.c.bf16 %v1758, %v1756
    %v1867 = vpack.c.bf16 %v1759, %v1757
    %v1868 = vpack.c.bf16 %v1762, %v1760
    %v1869 = vpack.c.bf16 %v1763, %v1761
    %v1870 = vpack.c.bf16 %v1766, %v1764
    %v1871 = vpack.c.bf16 %v1767, %v1765
    %v1872 = vpack.c.bf16 %v1770, %v1768
    %v1873 = vpack.c.bf16 %v1771, %v1769
    %v1874 = vpack.c.bf16 %v1774, %v1772
    %v1875 = vpack.c.bf16 %v1775, %v1773
    %v1876 = vpack.c.bf16 %v1778, %v1776
    %v1877 = vpack.c.bf16 %v1779, %v1777
    %v1878 = vpack.c.bf16 %v1782, %v1780
    %v1879 = vpack.c.bf16 %v1783, %v1781
    %v1880 = vpack.c.bf16 %v1786, %v1784
    %v1881 = vpack.c.bf16 %v1787, %v1785
    %v1882 = vpack.c.bf16 %v1790, %v1788
    %v1883 = vpack.c.bf16 %v1791, %v1789
    %v1884 = vpack.c.bf16 %v1794, %v1792
    %v1885 = vpack.c.bf16 %v1795, %v1793
    %v1886 = vpack.c.bf16 %v1798, %v1796
    %v1887 = vpack.c.bf16 %v1799, %v1797
    %v1888 = vpack.c.bf16 %v1802, %v1800
    %v1889 = vpack.c.bf16 %v1803, %v1801
    %v1890 = vpack.c.bf16 %v1806, %v1804
    %v1891 = vpack.c.bf16 %v1807, %v1805
    %v1892 = vpack.c.bf16 %v1810, %v1808
    %v1893 = vpack.c.bf16 %v1811, %v1809
    %v1894 = vpack.c.bf16 %v1814, %v1812
    %v1895 = vpack.c.bf16 %v1815, %v1813
    %v1896 = vpack.c.bf16 %v1818, %v1816
    %v1897 = vpack.c.bf16 %v1819, %v1817
    %v1898 = vpack.c.bf16 %v1822, %v1820
    %v1899 = vpack.c.bf16 %v1823, %v1821
    %v1900 = vpack.c.bf16 %v1826, %v1824
    %v1901 = vpack.c.bf16 %v1827, %v1825
    %v1902 = vpack.c.bf16 %v1830, %v1828
    %v1903 = vpack.c.bf16 %v1831, %v1829
    %v1904 = vpack.c.bf16 %v1834, %v1832
    %v1905 = vpack.c.bf16 %v1835, %v1833
    %v1906 = vpack.c.bf16 %v1838, %v1836
    %v1907 = vpack.c.bf16 %v1839, %v1837
    %v1908 = vpack.c.bf16 %v1842, %v1840
    %v1909 = vpack.c.bf16 %v1843, %v1841
    %v1910 = vpack.c.bf16 %v1846, %v1844
    %v1911 = vpack.c.bf16 %v1847, %v1845
    %v1912 = vpack.c.bf16 %v1850, %v1848
    %v1913 = vpack.c.bf16 %v1851, %v1849
    %v1914 = vpack.c.bf16 %v1854, %v1852
    %v1915 = vpack.c.bf16 %v1855, %v1853
    %v1916 = vpack.c.bf16 %v1858, %v1856
    %v1917 = vpack.c.bf16 %v1859, %v1857
    %v1918 = vpack.c.bf16 %v1862, %v1860
    %v1919 = vpack.c.bf16 %v1863, %v1861
    %v1920 = vld [vmem:[%s2] sm:$0xf]
    %v1921 = vld [vmem:[%s2 + $0x4] sm:$0xf]
    %v1922 = vld [vmem:[%s2 + $0x8] sm:$0xf]
    %v1923 = vld [vmem:[%s2 + $0xc] sm:$0xf]
    %v1924 = vld [vmem:[%s2 + $0x10] sm:$0xf]
    %v1925 = vld [vmem:[%s2 + $0x14] sm:$0xf]
    %v1926 = vld [vmem:[%s2 + $0x18] sm:$0xf]
    %v1927 = vld [vmem:[%s2 + $0x1c] sm:$0xf]
    %v1928 = vld [vmem:[%s2 + $0x20] sm:$0xf]
    %v1929 = vld [vmem:[%s2 + $0x24] sm:$0xf]
    %v1930 = vld [vmem:[%s2 + $0x28] sm:$0xf]
    %v1931 = vld [vmem:[%s2 + $0x2c] sm:$0xf]
    %v1932 = vld [vmem:[%s2 + $0x30] sm:$0xf]
    %v1933 = vld [vmem:[%s2 + $0x34] sm:$0xf]
    %v1934 = vld [vmem:[%s2 + $0x38] sm:$0xf]
    %v1935 = vld [vmem:[%s2 + $0x3c] sm:$0xf]
    %v1936 = vld [vmem:[%s2 + $0x40] sm:$0xf]
    %v1937 = vld [vmem:[%s2 + $0x44] sm:$0xf]
    %v1938 = vld [vmem:[%s2 + $0x48] sm:$0xf]
    %v1939 = vld [vmem:[%s2 + $0x4c] sm:$0xf]
    %v1940 = vld [vmem:[%s2 + $0x50] sm:$0xf]
    %v1962 = vunpack.c.l.b16 %v1920
    %v1963 = vunpack.c.l.b16 %v1921
    %v1964 = vunpack.c.l.b16 %v1922
    %v1965 = vunpack.c.l.b16 %v1923
    %v1966 = vunpack.c.l.b16 %v1924
    %v1967 = vunpack.c.l.b16 %v1925
    %v1968 = vunpack.c.l.b16 %v1926
    %v1969 = vunpack.c.l.b16 %v1927
    %v1970 = vunpack.c.l.b16 %v1928
    %v1971 = vunpack.c.l.b16 %v1929
    %v1972 = vunpack.c.l.b16 %v1930
    %v1973 = vunpack.c.l.b16 %v1931
    %v1974 = vunpack.c.l.b16 %v1932
    %v1975 = vunpack.c.l.b16 %v1933
    %v1976 = vunpack.c.l.b16 %v1934
    %v1977 = vunpack.c.l.b16 %v1935
    %v1978 = vunpack.c.l.b16 %v1936
    %v1979 = vunpack.c.l.b16 %v1937
    %v1980 = vunpack.c.l.b16 %v1938
    %v1981 = vunpack.c.l.b16 %v1939
    %v1982 = vunpack.c.l.b16 %v1940
    %v1983 = vpack.c.b16 %v1963, %v1962
    %v1984 = vpack.c.b16 %v1965, %v1964
    %v1985 = vpack.c.b16 %v1967, %v1966
    %v1986 = vpack.c.b16 %v1969, %v1968
    %v1987 = vpack.c.b16 %v1971, %v1970
    %v1988 = vpack.c.b16 %v1973, %v1972
    %v1989 = vpack.c.b16 %v1975, %v1974
    %v1990 = vpack.c.b16 %v1977, %v1976
    %v1991 = vpack.c.b16 %v1979, %v1978
    %v1992 = vpack.c.b16 %v1981, %v1980
    %v1993 = vpack.c.b16 %v1982, %v1982
    %vm2004 = vcmask 326656
    %v2006 = vsel %vm2004, %v1865, 0
    %v2009 = vsel %vm2004, %v1867, 0
    %v2012 = vsel %vm2004, %v1869, 0
    %v2015 = vsel %vm2004, %v1871, 0
    %v2018 = vsel %vm2004, %v1873, 0
    %v2021 = vsel %vm2004, %v1875, 0
    %v2024 = vsel %vm2004, %v1877, 0
    %v2027 = vsel %vm2004, %v1879, 0
    %v2030 = vsel %vm2004, %v1881, 0
    %v2033 = vsel %vm2004, %v1883, 0
    %v2036 = vsel %vm2004, %v1885, 0
    %v2039 = vsel %vm2004, %v1887, 0
    %v2042 = vsel %vm2004, %v1889, 0
    %v2045 = vsel %vm2004, %v1891, 0
    %v2048 = vsel %vm2004, %v1893, 0
    %v2051 = vsel %vm2004, %v1895, 0
    %v2054 = vsel %vm2004, %v1897, 0
    %v2057 = vsel %vm2004, %v1899, 0
    %v2060 = vsel %vm2004, %v1901, 0
    %v2063 = vsel %vm2004, %v1903, 0
    %v2066 = vsel %vm2004, %v1905, 0
    %v2069 = vsel %vm2004, %v1907, 0
    %v2072 = vsel %vm2004, %v1909, 0
    %v2075 = vsel %vm2004, %v1911, 0
    %v2078 = vsel %vm2004, %v1913, 0
    %v2081 = vsel %vm2004, %v1915, 0
    %v2084 = vsel %vm2004, %v1917, 0
    %v2087 = vsel %vm2004, %v1919, 0
    %vm2089 = vcmask 1043456
    %v2091 = vsel %vm2089, %v1993, 0
    %2093 = vmatprep.subr.bf16.mxu0 0
    %2094 = vmatpush1.bf16.msra.mxu0 %v1983
    %2095 = vmatprep.subr.bf16.mxu0 0
    %2096 = vmatpush1.bf16.msra.mxu0 %v1984
    %2097 = vmatprep.subr.bf16.mxu0 0
    %2098 = vmatpush1.bf16.msra.mxu0 %v1985
    %2099 = vmatprep.subr.bf16.mxu0 0
    %2100 = vmatpush1.bf16.msra.mxu0 %v1986
    %2101 = vmatprep.subr.bf16.mxu0 0
    %2102 = vmatpush1.bf16.msra.mxu0 %v1987
    %2103 = vmatprep.subr.bf16.mxu0 0
    %2104 = vmatpush1.bf16.msra.mxu0 %v1988
    %2105 = vmatprep.subr.bf16.mxu0 0
    %2106 = vmatpush1.bf16.msra.mxu0 %v1989
    %2107 = vmatprep.subr.bf16.mxu0 0
    %2108 = vmatpush1.bf16.msra.mxu0 %v1990
    %2109 = vmatprep.subr.bf16.mxu0 0
    %2110 = vmatpush1.bf16.msra.mxu0 %v1991
    %2111 = vmatprep.subr.bf16.mxu0 0
    %2112 = vmatpush1.bf16.msra.mxu0 %v1992
    %2113 = vmatprep.subr.bf16.mxu0 0
    %2114 = vmatpush1.bf16.msra.mxu0 %v2091
    %2115 = vmatprep.subr.bf16.mxu0 0
    %2116 = vmatpush1.bf16.msra.mxu0 0
    %2117 = vmatprep.subr.bf16.mxu0 0
    %2118 = vmatpush1.bf16.msra.mxu0 0
    %2119 = vmatprep.subr.bf16.mxu0 0
    %2120 = vmatpush1.bf16.msra.mxu0 0
    %2121 = vmatprep.subr.bf16.mxu0 0
    %2122 = vmatpush1.bf16.msra.mxu0 0
    %2123 = vmatprep.subr.bf16.mxu0 0
    %2124 = vmatpush1.bf16.msra.mxu0 0
    %2125 = vmatprep.mubr.bf16.mxu0 %v2006
    %2126 = vmatmul.mubr.bf16.gmra.mrb[0].mxu0 %v1864
    %v2127 = vpop.f32.mrb[0].mxu0
    %v2128 = vadd.f32 0.0, %v2127
    %v2129 = vpop.f32.mrb[0].mxu0
    %v2130 = vpop.f32.mrb[0].mxu0
    %v2131 = vadd.f32 0.0, %v2130
    %v2132 = vpop.f32.mrb[0].mxu0
    %2133 = vmatprep.mubr.bf16.mxu0 %v2009
    %2134 = vmatmul.mubr.bf16.gmra.mrb[0].mxu0 %v1866
    %v2135 = vpop.f32.mrb[0].mxu0
    %v2136 = vadd.f32 0.0, %v2135
    %v2137 = vpop.f32.mrb[0].mxu0
    %v2138 = vpop.f32.mrb[0].mxu0
    %v2139 = vadd.f32 0.0, %v2138
    %v2140 = vpop.f32.mrb[0].mxu0
    %2141 = vmatprep.mubr.bf16.mxu0 %v2012
    %2142 = vmatmul.mubr.bf16.gmra.mrb[0].mxu0 %v1868
    %v2143 = vpop.f32.mrb[0].mxu0
    %v2144 = vadd.f32 0.0, %v2143
    %v2145 = vpop.f32.mrb[0].mxu0
    %v2146 = vpop.f32.mrb[0].mxu0
    %v2147 = vadd.f32 0.0, %v2146
    %v2148 = vpop.f32.mrb[0].mxu0
    %2149 = vmatprep.mubr.bf16.mxu0 %v2015
    %2150 = vmatmul.mubr.bf16.gmra.mrb[0].mxu0 %v1870
    %v2151 = vpop.f32.mrb[0].mxu0
    %v2152 = vadd.f32 0.0, %v2151
    %v2153 = vpop.f32.mrb[0].mxu0
    %v2154 = vpop.f32.mrb[0].mxu0
    %v2155 = vadd.f32 0.0, %v2154
    %v2156 = vpop.f32.mrb[0].mxu0
    %2157 = vmatprep.mubr.bf16.mxu0 %v2018
    %2158 = vmatmul.mubr.bf16.gmra.mrb[0].mxu0 %v1872
    %v2159 = vpop.f32.mrb[0].mxu0
    %v2160 = vadd.f32 0.0, %v2159
    %v2161 = vpop.f32.mrb[0].mxu0
    %v2162 = vpop.f32.mrb[0].mxu0
    %v2163 = vadd.f32 0.0, %v2162
    %v2164 = vpop.f32.mrb[0].mxu0
    %2165 = vmatprep.mubr.bf16.mxu0 %v2021
    %2166 = vmatmul.mubr.bf16.gmra.mrb[0].mxu0 %v1874
    %v2167 = vpop.f32.mrb[0].mxu0
    %v2168 = vadd.f32 0.0, %v2167
    %v2169 = vpop.f32.mrb[0].mxu0
    %v2170 = vpop.f32.mrb[0].mxu0
    %v2171 = vadd.f32 0.0, %v2170
    %v2172 = vpop.f32.mrb[0].mxu0
    %2173 = vmatprep.mubr.bf16.mxu0 %v2024
    %2174 = vmatmul.mubr.bf16.gmra.mrb[0].mxu0 %v1876
    %v2175 = vpop.f32.mrb[0].mxu0
    %v2176 = vadd.f32 0.0, %v2175
    %v2177 = vpop.f32.mrb[0].mxu0
    %v2178 = vpop.f32.mrb[0].mxu0
    %v2179 = vadd.f32 0.0, %v2178
    %v2180 = vpop.f32.mrb[0].mxu0
    %2181 = vmatprep.mubr.bf16.mxu0 %v2027
    %2182 = vmatmul.mubr.bf16.gmra.mrb[0].mxu0 %v1878
    %v2183 = vpop.f32.mrb[0].mxu0
    %v2184 = vadd.f32 0.0, %v2183
    %v2185 = vpop.f32.mrb[0].mxu0
    %v2186 = vpop.f32.mrb[0].mxu0
    %v2187 = vadd.f32 0.0, %v2186
    %v2188 = vpop.f32.mrb[0].mxu0
    %2189 = vmatprep.mubr.bf16.mxu0 %v2030
    %2190 = vmatmul.mubr.bf16.gmra.mrb[0].mxu0 %v1880
    %v2191 = vpop.f32.mrb[0].mxu0
    %v2192 = vadd.f32 0.0, %v2191
    %v2193 = vpop.f32.mrb[0].mxu0
    %v2194 = vpop.f32.mrb[0].mxu0
    %v2195 = vadd.f32 0.0, %v2194
    %v2196 = vpop.f32.mrb[0].mxu0
    %2197 = vmatprep.mubr.bf16.mxu0 %v2033
    %2198 = vmatmul.mubr.bf16.gmra.mrb[0].mxu0 %v1882
    %v2199 = vpop.f32.mrb[0].mxu0
    %v2200 = vadd.f32 0.0, %v2199
    %v2201 = vpop.f32.mrb[0].mxu0
    %v2202 = vpop.f32.mrb[0].mxu0
    %v2203 = vadd.f32 0.0, %v2202
    %v2204 = vpop.f32.mrb[0].mxu0
    %2205 = vmatprep.mubr.bf16.mxu0 %v2036
    %2206 = vmatmul.mubr.bf16.gmra.mrb[0].mxu0 %v1884
    %v2207 = vpop.f32.mrb[0].mxu0
    %v2208 = vadd.f32 0.0, %v2207
    %v2209 = vpop.f32.mrb[0].mxu0
    %v2210 = vpop.f32.mrb[0].mxu0
    %v2211 = vadd.f32 0.0, %v2210
    %v2212 = vpop.f32.mrb[0].mxu0
    %2213 = vmatprep.mubr.bf16.mxu0 %v2039
    %2214 = vmatmul.mubr.bf16.gmra.mrb[0].mxu0 %v1886
    %v2215 = vpop.f32.mrb[0].mxu0
    %v2216 = vadd.f32 0.0, %v2215
    %v2217 = vpop.f32.mrb[0].mxu0
    %v2218 = vpop.f32.mrb[0].mxu0
    %v2219 = vadd.f32 0.0, %v2218
    %v2220 = vpop.f32.mrb[0].mxu0
    %2221 = vmatprep.mubr.bf16.mxu0 %v2042
    %2222 = vmatmul.mubr.bf16.gmra.mrb[0].mxu0 %v1888
    %v2223 = vpop.f32.mrb[0].mxu0
    %v2224 = vadd.f32 0.0, %v2223
    %v2225 = vpop.f32.mrb[0].mxu0
    %v2226 = vpop.f32.mrb[0].mxu0
    %v2227 = vadd.f32 0.0, %v2226
    %v2228 = vpop.f32.mrb[0].mxu0
    %2229 = vmatprep.mubr.bf16.mxu0 %v2045
    %2230 = vmatmul.mubr.bf16.gmra.mrb[0].mxu0 %v1890
    %v2231 = vpop.f32.mrb[0].mxu0
    %v2232 = vadd.f32 0.0, %v2231
    %v2233 = vpop.f32.mrb[0].mxu0
    %v2234 = vpop.f32.mrb[0].mxu0
    %v2235 = vadd.f32 0.0, %v2234
    %v2236 = vpop.f32.mrb[0].mxu0
    %2237 = vmatprep.mubr.bf16.mxu0 %v2048
    %2238 = vmatmul.mubr.bf16.gmra.mrb[0].mxu0 %v1892
    %v2239 = vpop.f32.mrb[0].mxu0
    %v2240 = vadd.f32 0.0, %v2239
    %v2241 = vpop.f32.mrb[0].mxu0
    %v2242 = vpop.f32.mrb[0].mxu0
    %v2243 = vadd.f32 0.0, %v2242
    %v2244 = vpop.f32.mrb[0].mxu0
    %2245 = vmatprep.mubr.bf16.mxu0 %v2051
    %2246 = vmatmul.mubr.bf16.gmra.mrb[0].mxu0 %v1894
    %v2247 = vpop.f32.mrb[0].mxu0
    %v2248 = vadd.f32 0.0, %v2247
    %v2249 = vpop.f32.mrb[0].mxu0
    %v2250 = vpop.f32.mrb[0].mxu0
    %v2251 = vadd.f32 0.0, %v2250
    %v2252 = vpop.f32.mrb[0].mxu0
    %2253 = vmatprep.mubr.bf16.mxu0 %v2054
    %2254 = vmatmul.mubr.bf16.gmra.mrb[0].mxu0 %v1896
    %v2255 = vpop.f32.mrb[0].mxu0
    %v2256 = vadd.f32 0.0, %v2255
    %v2257 = vpop.f32.mrb[0].mxu0
    %v2258 = vpop.f32.mrb[0].mxu0
    %v2259 = vadd.f32 0.0, %v2258
    %v2260 = vpop.f32.mrb[0].mxu0
    %2261 = vmatprep.mubr.bf16.mxu0 %v2057
    %2262 = vmatmul.mubr.bf16.gmra.mrb[0].mxu0 %v1898
    %v2263 = vpop.f32.mrb[0].mxu0
    %v2264 = vadd.f32 0.0, %v2263
    %v2265 = vpop.f32.mrb[0].mxu0
    %v2266 = vpop.f32.mrb[0].mxu0
    %v2267 = vadd.f32 0.0, %v2266
    %v2268 = vpop.f32.mrb[0].mxu0
    %2269 = vmatprep.mubr.bf16.mxu0 %v2060
    %2270 = vmatmul.mubr.bf16.gmra.mrb[0].mxu0 %v1900
    %v2271 = vpop.f32.mrb[0].mxu0
    %v2272 = vadd.f32 0.0, %v2271
    %v2273 = vpop.f32.mrb[0].mxu0
    %v2274 = vpop.f32.mrb[0].mxu0
    %v2275 = vadd.f32 0.0, %v2274
    %v2276 = vpop.f32.mrb[0].mxu0
    %2277 = vmatprep.mubr.bf16.mxu0 %v2063
    %2278 = vmatmul.mubr.bf16.gmra.mrb[0].mxu0 %v1902
    %v2279 = vpop.f32.mrb[0].mxu0
    %v2280 = vadd.f32 0.0, %v2279
    %v2281 = vpop.f32.mrb[0].mxu0
    %v2282 = vpop.f32.mrb[0].mxu0
    %v2283 = vadd.f32 0.0, %v2282
    %v2284 = vpop.f32.mrb[0].mxu0
    %2285 = vmatprep.mubr.bf16.mxu0 %v2066
    %2286 = vmatmul.mubr.bf16.gmra.mrb[0].mxu0 %v1904
    %v2287 = vpop.f32.mrb[0].mxu0
    %v2288 = vadd.f32 0.0, %v2287
    %v2289 = vpop.f32.mrb[0].mxu0
    %v2290 = vpop.f32.mrb[0].mxu0
    %v2291 = vadd.f32 0.0, %v2290
    %v2292 = vpop.f32.mrb[0].mxu0
    %2293 = vmatprep.mubr.bf16.mxu0 %v2069
    %2294 = vmatmul.mubr.bf16.gmra.mrb[0].mxu0 %v1906
    %v2295 = vpop.f32.mrb[0].mxu0
    %v2296 = vadd.f32 0.0, %v2295
    %v2297 = vpop.f32.mrb[0].mxu0
    %v2298 = vpop.f32.mrb[0].mxu0
    %v2299 = vadd.f32 0.0, %v2298
    %v2300 = vpop.f32.mrb[0].mxu0
    %2301 = vmatprep.mubr.bf16.mxu0 %v2072
    %2302 = vmatmul.mubr.bf16.gmra.mrb[0].mxu0 %v1908
    %v2303 = vpop.f32.mrb[0].mxu0
    %v2304 = vadd.f32 0.0, %v2303
    %v2305 = vpop.f32.mrb[0].mxu0
    %v2306 = vpop.f32.mrb[0].mxu0
    %v2307 = vadd.f32 0.0, %v2306
    %v2308 = vpop.f32.mrb[0].mxu0
    %2309 = vmatprep.mubr.bf16.mxu0 %v2075
    %2310 = vmatmul.mubr.bf16.gmra.mrb[0].mxu0 %v1910
    %v2311 = vpop.f32.mrb[0].mxu0
    %v2312 = vadd.f32 0.0, %v2311
    %v2313 = vpop.f32.mrb[0].mxu0
    %v2314 = vpop.f32.mrb[0].mxu0
    %v2315 = vadd.f32 0.0, %v2314
    %v2316 = vpop.f32.mrb[0].mxu0
    %2317 = vmatprep.mubr.bf16.mxu0 %v2078
    %2318 = vmatmul.mubr.bf16.gmra.mrb[0].mxu0 %v1912
    %v2319 = vpop.f32.mrb[0].mxu0
    %v2320 = vadd.f32 0.0, %v2319
    %v2321 = vpop.f32.mrb[0].mxu0
    %v2322 = vpop.f32.mrb[0].mxu0
    %v2323 = vadd.f32 0.0, %v2322
    %v2324 = vpop.f32.mrb[0].mxu0
    %2325 = vmatprep.mubr.bf16.mxu0 %v2081
    %2326 = vmatmul.mubr.bf16.gmra.mrb[0].mxu0 %v1914
    %v2327 = vpop.f32.mrb[0].mxu0
    %v2328 = vadd.f32 0.0, %v2327
    %v2329 = vpop.f32.mrb[0].mxu0
    %v2330 = vpop.f32.mrb[0].mxu0
    %v2331 = vadd.f32 0.0, %v2330
    %v2332 = vpop.f32.mrb[0].mxu0
    %2333 = vmatprep.mubr.bf16.mxu0 %v2084
    %2334 = vmatmul.mubr.bf16.gmra.mrb[0].mxu0 %v1916
    %v2335 = vpop.f32.mrb[0].mxu0
    %v2336 = vadd.f32 0.0, %v2335
    %v2337 = vpop.f32.mrb[0].mxu0
    %v2338 = vpop.f32.mrb[0].mxu0
    %v2339 = vadd.f32 0.0, %v2338
    %v2340 = vpop.f32.mrb[0].mxu0
    %2341 = vmatprep.mubr.bf16.mxu0 %v2087
    %2342 = vmatmul.mubr.bf16.gmra.mrb[0].mxu0 %v1918
    %v2343 = vpop.f32.mrb[0].mxu0
    %v2344 = vadd.f32 0.0, %v2343
    %v2345 = vpop.f32.mrb[0].mxu0
    %v2346 = vpop.f32.mrb[0].mxu0
    %v2347 = vadd.f32 0.0, %v2346
    %v2348 = vpop.f32.mrb[0].mxu0
    %2349 = vdwg.mxu0
    %v2350 = vadd.f32 %v2128, %v2136
    %v2351 = vadd.f32 %v2131, %v2139
    %v2352 = vadd.f32 %v2144, %v2152
    %v2353 = vadd.f32 %v2147, %v2155
    %v2354 = vadd.f32 %v2160, %v2168
    %v2355 = vadd.f32 %v2163, %v2171
    %v2356 = vadd.f32 %v2176, %v2184
    %v2357 = vadd.f32 %v2179, %v2187
    %v2358 = vadd.f32 %v2192, %v2200
    %v2359 = vadd.f32 %v2195, %v2203
    %v2360 = vadd.f32 %v2208, %v2216
    %v2361 = vadd.f32 %v2211, %v2219
    %v2362 = vadd.f32 %v2224, %v2232
    %v2363 = vadd.f32 %v2227, %v2235
    %v2364 = vadd.f32 %v2240, %v2248
    %v2365 = vadd.f32 %v2243, %v2251
    %v2366 = vadd.f32 %v2256, %v2264
    %v2367 = vadd.f32 %v2259, %v2267
    %v2368 = vadd.f32 %v2272, %v2280
    %v2369 = vadd.f32 %v2275, %v2283
    %v2370 = vadd.f32 %v2288, %v2296
    %v2371 = vadd.f32 %v2291, %v2299
    %v2372 = vadd.f32 %v2304, %v2312
    %v2373 = vadd.f32 %v2307, %v2315
    %v2374 = vadd.f32 %v2320, %v2328
    %v2375 = vadd.f32 %v2323, %v2331
    %v2376 = vadd.f32 %v2336, %v2344
    %v2377 = vadd.f32 %v2339, %v2347
    %2380 = vrot.lane.b32.xlu0 %v2352, 14
    %v2381 = vpop.permute.xlu0 %2380
    %2382 = vrot.lane.b32.xlu0 %v2353, 14
    %v2383 = vpop.permute.xlu0 %2382
    %2388 = vrot.lane.b32.xlu0 %v2354, 28
    %v2389 = vpop.permute.xlu0 %2388
    %2390 = vrot.lane.b32.xlu0 %v2355, 28
    %v2391 = vpop.permute.xlu0 %2390
    %2396 = vrot.lane.b32.xlu0 %v2356, 42
    %v2397 = vpop.permute.xlu0 %2396
    %2398 = vrot.lane.b32.xlu0 %v2357, 42
    %v2399 = vpop.permute.xlu0 %2398
    %2404 = vrot.lane.b32.xlu0 %v2358, 56
    %v2405 = vpop.permute.xlu0 %2404
    %2406 = vrot.lane.b32.xlu0 %v2359, 56
    %v2407 = vpop.permute.xlu0 %2406
    %2412 = vrot.lane.b32.xlu0 %v2360, 70
    %v2413 = vpop.permute.xlu0 %2412
    %2414 = vrot.lane.b32.xlu0 %v2361, 70
    %v2415 = vpop.permute.xlu0 %2414
    %2420 = vrot.lane.b32.xlu0 %v2362, 84
    %v2421 = vpop.permute.xlu0 %2420
    %2422 = vrot.lane.b32.xlu0 %v2363, 84
    %v2423 = vpop.permute.xlu0 %2422
    %2428 = vrot.lane.b32.xlu0 %v2364, 98
    %v2429 = vpop.permute.xlu0 %2428
    %2430 = vrot.lane.b32.xlu0 %v2365, 98
    %v2431 = vpop.permute.xlu0 %2430
    %2436 = vrot.lane.b32.xlu0 %v2366, 112
    %v2437 = vpop.permute.xlu0 %2436
    %2438 = vrot.lane.b32.xlu0 %v2367, 112
    %v2439 = vpop.permute.xlu0 %2438
    %2444 = vrot.lane.b32.xlu0 %v2368, 126
    %v2445 = vpop.permute.xlu0 %2444
    %2446 = vrot.lane.b32.xlu0 %v2369, 126
    %v2447 = vpop.permute.xlu0 %2446
    %2452 = vrot.lane.b32.xlu0 %v2370, 12
    %v2453 = vpop.permute.xlu0 %2452
    %2454 = vrot.lane.b32.xlu0 %v2371, 12
    %v2455 = vpop.permute.xlu0 %2454
    %2460 = vrot.lane.b32.xlu0 %v2372, 26
    %v2461 = vpop.permute.xlu0 %2460
    %2462 = vrot.lane.b32.xlu0 %v2373, 26
    %v2463 = vpop.permute.xlu0 %2462
    %2468 = vrot.lane.b32.xlu0 %v2374, 40
    %v2469 = vpop.permute.xlu0 %2468
    %2470 = vrot.lane.b32.xlu0 %v2375, 40
    %v2471 = vpop.permute.xlu0 %2470
    %2476 = vrot.lane.b32.xlu0 %v2376, 54
    %v2477 = vpop.permute.xlu0 %2476
    %2478 = vrot.lane.b32.xlu0 %v2377, 54
    %v2479 = vpop.permute.xlu0 %2478
    %vm2482 = vcmask 113664
    %v2483 = vsel %vm2482, %v2350, %v2381
    %v2484 = vsel %vm2482, %v2351, %v2383
    %vm2485 = vcmask 228352
    %v2486 = vsel %vm2485, %v2483, %v2389
    %v2487 = vsel %vm2485, %v2484, %v2391
    %vm2488 = vcmask 343040
    %v2489 = vsel %vm2488, %v2486, %v2397
    %v2490 = vsel %vm2488, %v2487, %v2399
    %vm2491 = vcmask 457728
    %v2492 = vsel %vm2491, %v2489, %v2405
    %v2493 = vsel %vm2491, %v2490, %v2407
    %vm2494 = vcmask 572416
    %v2495 = vsel %vm2494, %v2492, %v2413
    %v2496 = vsel %vm2494, %v2493, %v2415
    %vm2497 = vcmask 687104
    %v2498 = vsel %vm2497, %v2495, %v2421
    %v2499 = vsel %vm2497, %v2496, %v2423
    %vm2500 = vcmask 801792
    %v2501 = vsel %vm2500, %v2498, %v2429
    %v2502 = vsel %vm2500, %v2499, %v2431
    %vm2503 = vcmask 916480
    %v2504 = vsel %vm2503, %v2501, %v2437
    %v2505 = vsel %vm2503, %v2502, %v2439
    %vm2506 = vcmask 1031168
    %v2507 = vsel %vm2506, %v2504, %v2445
    %v2508 = vsel %vm2506, %v2505, %v2447
    %vm2509 = vcmask 97280
    %v2510 = vsel %vm2509, %v2445, %v2453
    %v2511 = vsel %vm2509, %v2447, %v2455
    %vm2512 = vcmask 211968
    %v2513 = vsel %vm2512, %v2510, %v2461
    %v2514 = vsel %vm2512, %v2511, %v2463
    %v2515 = vsel %vm2004, %v2513, %v2469
    %v2516 = vsel %vm2004, %v2514, %v2471
    %vm2517 = vcmask 441344
    %v2518 = vsel %vm2517, %v2515, %v2477
    %v2519 = vsel %vm2517, %v2516, %v2479
    %v2520 = vpack.c.bf16 %v2508, %v2507
    %v2521 = vpack.c.bf16 %v2519, %v2518
    %v2522 = vld [vmem:[%s3] sm:$0xff]
    %v2523 = vld [vmem:[%s3 + $0x8] sm:$0xff]
    %v2524 = vld [vmem:[%s3 + $0x10] sm:$0xff]
    %v2525 = vld [vmem:[%s3 + $0x18] sm:$0xff]
    %v2526 = vld [vmem:[%s3 + $0x20] sm:$0xff]
    %v2527 = vld [vmem:[%s3 + $0x28] sm:$0xff]
    %v2528 = vld [vmem:[%s3 + $0x30] sm:$0xf]
    %v2529 = vld [vmem:[%s3 + $0x34] sm:$0xff]
    %v2530 = vld [vmem:[%s3 + $0x3c] sm:$0xff]
    %v2531 = vld [vmem:[%s3 + $0x44] sm:$0xff]
    %v2532 = vld [vmem:[%s3 + $0x4c] sm:$0xff]
    %v2533 = vld [vmem:[%s3 + $0x54] sm:$0xff]
    %v2534 = vld [vmem:[%s3 + $0x5c] sm:$0xff]
    %v2535 = vld [vmem:[%s3 + $0x64] sm:$0xf]
    %v2536 = vld [vmem:[%s3 + $0x68] sm:$0xff]
    %v2537 = vld [vmem:[%s3 + $0x70] sm:$0xff]
    %v2538 = vld [vmem:[%s3 + $0x78] sm:$0xff]
    %v2539 = vld [vmem:[%s3 + $0x80] sm:$0xff]
    %v2540 = vld [vmem:[%s3 + $0x88] sm:$0xff]
    %v2541 = vld [vmem:[%s3 + $0x90] sm:$0xff]
    %v2542 = vld [vmem:[%s3 + $0x98] sm:$0xf]
    %v2543 = vld [vmem:[%s3 + $0x9c] sm:$0xff]
    %v2544 = vld [vmem:[%s3 + $0xa4] sm:$0xff]
    %v2545 = vld [vmem:[%s3 + $0xac] sm:$0xff]
    %v2546 = vld [vmem:[%s3 + $0xb4] sm:$0xff]
    %v2547 = vld [vmem:[%s3 + $0xbc] sm:$0xff]
    %v2548 = vld [vmem:[%s3 + $0xc4] sm:$0xff]
    %v2549 = vld [vmem:[%s3 + $0xcc] sm:$0xf]
    %v2550 = vld [vmem:[%s3 + $0xd0] sm:$0xff]
    %v2551 = vld [vmem:[%s3 + $0xd8] sm:$0xff]
    %v2552 = vld [vmem:[%s3 + $0xe0] sm:$0xff]
    %v2553 = vld [vmem:[%s3 + $0xe8] sm:$0xff]
    %v2554 = vld [vmem:[%s3 + $0xf0] sm:$0xff]
    %v2555 = vld [vmem:[%s3 + $0xf8] sm:$0xff]
    %v2556 = vld [vmem:[%s3 + $0x100] sm:$0xf]
    %v2557 = vld [vmem:[%s3 + $0x104] sm:$0xff]
    %v2558 = vld [vmem:[%s3 + $0x10c] sm:$0xff]
    %v2559 = vld [vmem:[%s3 + $0x114] sm:$0xff]
    %v2560 = vld [vmem:[%s3 + $0x11c] sm:$0xff]
    %v2561 = vld [vmem:[%s3 + $0x124] sm:$0xff]
    %v2562 = vld [vmem:[%s3 + $0x12c] sm:$0xff]
    %v2563 = vld [vmem:[%s3 + $0x134] sm:$0xf]
    %v2564 = vld [vmem:[%s3 + $0x138] sm:$0xff]
    %v2565 = vld [vmem:[%s3 + $0x140] sm:$0xff]
    %v2566 = vld [vmem:[%s3 + $0x148] sm:$0xff]
    %v2567 = vld [vmem:[%s3 + $0x150] sm:$0xff]
    %v2568 = vld [vmem:[%s3 + $0x158] sm:$0xff]
    %v2569 = vld [vmem:[%s3 + $0x160] sm:$0xff]
    %v2570 = vld [vmem:[%s3 + $0x168] sm:$0xf]
    %v2571 = vld [vmem:[%s3 + $0x16c] sm:$0xff]
    %v2572 = vld [vmem:[%s3 + $0x174] sm:$0xff]
    %v2573 = vld [vmem:[%s3 + $0x17c] sm:$0xff]
    %v2574 = vld [vmem:[%s3 + $0x184] sm:$0xff]
    %v2575 = vld [vmem:[%s3 + $0x18c] sm:$0xff]
    %v2576 = vld [vmem:[%s3 + $0x194] sm:$0xff]
    %v2577 = vld [vmem:[%s3 + $0x19c] sm:$0xf]
    %v2578 = vld [vmem:[%s3 + $0x1a0] sm:$0xff]
    %v2579 = vld [vmem:[%s3 + $0x1a8] sm:$0xff]
    %v2580 = vld [vmem:[%s3 + $0x1b0] sm:$0xff]
    %v2581 = vld [vmem:[%s3 + $0x1b8] sm:$0xff]
    %v2582 = vld [vmem:[%s3 + $0x1c0] sm:$0xff]
    %v2583 = vld [vmem:[%s3 + $0x1c8] sm:$0xff]
    %v2584 = vld [vmem:[%s3 + $0x1d0] sm:$0xf]
    %v2585 = vld [vmem:[%s3 + $0x1d4] sm:$0xff]
    %v2586 = vld [vmem:[%s3 + $0x1dc] sm:$0xff]
    %v2587 = vld [vmem:[%s3 + $0x1e4] sm:$0xff]
    %v2588 = vld [vmem:[%s3 + $0x1ec] sm:$0xff]
    %v2589 = vld [vmem:[%s3 + $0x1f4] sm:$0xff]
    %v2590 = vld [vmem:[%s3 + $0x1fc] sm:$0xff]
    %v2591 = vld [vmem:[%s3 + $0x204] sm:$0xf]
    %v2592 = vld [vmem:[%s3 + $0x208] sm:$0xff]
    %v2593 = vld [vmem:[%s3 + $0x210] sm:$0xff]
    %v2594 = vld [vmem:[%s3 + $0x218] sm:$0xff]
    %v2595 = vld [vmem:[%s3 + $0x220] sm:$0xff]
    %v2596 = vld [vmem:[%s3 + $0x228] sm:$0xff]
    %v2597 = vld [vmem:[%s3 + $0x230] sm:$0xff]
    %v2598 = vld [vmem:[%s3 + $0x238] sm:$0xf]
    %v2599 = vld [vmem:[%s3 + $0x23c] sm:$0xff]
    %v2600 = vld [vmem:[%s3 + $0x244] sm:$0xff]
    %v2601 = vld [vmem:[%s3 + $0x24c] sm:$0xff]
    %v2602 = vld [vmem:[%s3 + $0x254] sm:$0xff]
    %v2603 = vld [vmem:[%s3 + $0x25c] sm:$0xff]
    %v2604 = vld [vmem:[%s3 + $0x264] sm:$0xff]
    %v2605 = vld [vmem:[%s3 + $0x26c] sm:$0xf]
    %v2606 = vld [vmem:[%s3 + $0x270] sm:$0xff]
    %v2607 = vld [vmem:[%s3 + $0x278] sm:$0xff]
    %v2608 = vld [vmem:[%s3 + $0x280] sm:$0xff]
    %v2609 = vld [vmem:[%s3 + $0x288] sm:$0xff]
    %v2610 = vld [vmem:[%s3 + $0x290] sm:$0xff]
    %v2611 = vld [vmem:[%s3 + $0x298] sm:$0xff]
    %v2612 = vld [vmem:[%s3 + $0x2a0] sm:$0xf]
    %v2613 = vld [vmem:[%s3 + $0x2a4] sm:$0xff]
    %v2614 = vld [vmem:[%s3 + $0x2ac] sm:$0xff]
    %v2615 = vld [vmem:[%s3 + $0x2b4] sm:$0xff]
    %v2616 = vld [vmem:[%s3 + $0x2bc] sm:$0xff]
    %v2617 = vld [vmem:[%s3 + $0x2c4] sm:$0xff]
    %v2618 = vld [vmem:[%s3 + $0x2cc] sm:$0xff]
    %v2619 = vld [vmem:[%s3 + $0x2d4] sm:$0xf]
    %v2620 = vld [vmem:[%s3 + $0x2d8] sm:$0xff]
    %v2621 = vld [vmem:[%s3 + $0x2e0] sm:$0xff]
    %v2622 = vld [vmem:[%s3 + $0x2e8] sm:$0xff]
    %v2623 = vld [vmem:[%s3 + $0x2f0] sm:$0xff]
    %v2624 = vld [vmem:[%s3 + $0x2f8] sm:$0xff]
    %v2625 = vld [vmem:[%s3 + $0x300] sm:$0xff]
    %v2626 = vld [vmem:[%s3 + $0x308] sm:$0xf]
    %v2627 = vld [vmem:[%s3 + $0x30c] sm:$0xff]
    %v2628 = vld [vmem:[%s3 + $0x314] sm:$0xff]
    %v2629 = vld [vmem:[%s3 + $0x31c] sm:$0xff]
    %v2630 = vld [vmem:[%s3 + $0x324] sm:$0xff]
    %v2631 = vld [vmem:[%s3 + $0x32c] sm:$0xff]
    %v2632 = vld [vmem:[%s3 + $0x334] sm:$0xff]
    %v2633 = vld [vmem:[%s3 + $0x33c] sm:$0xf]
    %v2634 = vld [vmem:[%s3 + $0x340] sm:$0xff]
    %v2635 = vld [vmem:[%s3 + $0x348] sm:$0xff]
    %v2636 = vld [vmem:[%s3 + $0x350] sm:$0xff]
    %v2637 = vld [vmem:[%s3 + $0x358] sm:$0xff]
    %v2638 = vld [vmem:[%s3 + $0x360] sm:$0xff]
    %v2639 = vld [vmem:[%s3 + $0x368] sm:$0xff]
    %v2640 = vld [vmem:[%s3 + $0x370] sm:$0xf]
    %v2641 = vld [vmem:[%s3 + $0x374] sm:$0xff]
    %v2642 = vld [vmem:[%s3 + $0x37c] sm:$0xff]
    %v2643 = vld [vmem:[%s3 + $0x384] sm:$0xff]
    %v2644 = vld [vmem:[%s3 + $0x38c] sm:$0xff]
    %v2645 = vld [vmem:[%s3 + $0x394] sm:$0xff]
    %v2646 = vld [vmem:[%s3 + $0x39c] sm:$0xff]
    %v2647 = vld [vmem:[%s3 + $0x3a4] sm:$0xf]
    %v2648 = vld [vmem:[%s3 + $0x3a8] sm:$0xff]
    %v2649 = vld [vmem:[%s3 + $0x3b0] sm:$0xff]
    %v2650 = vld [vmem:[%s3 + $0x3b8] sm:$0xff]
    %v2651 = vld [vmem:[%s3 + $0x3c0] sm:$0xff]
    %v2652 = vld [vmem:[%s3 + $0x3c8] sm:$0xff]
    %v2653 = vld [vmem:[%s3 + $0x3d0] sm:$0xff]
    %v2654 = vld [vmem:[%s3 + $0x3d8] sm:$0xf]
    %v2655 = vld [vmem:[%s3 + $0x3dc] sm:$0xff]
    %v2656 = vld [vmem:[%s3 + $0x3e4] sm:$0xff]
    %v2657 = vld [vmem:[%s3 + $0x3ec] sm:$0xff]
    %v2658 = vld [vmem:[%s3 + $0x3f4] sm:$0xff]
    %v2659 = vld [vmem:[%s3 + $0x3fc] sm:$0xff]
    %v2660 = vld [vmem:[%s3 + $0x404] sm:$0xff]
    %v2661 = vld [vmem:[%s3 + $0x40c] sm:$0xf]
    %v2662 = vld [vmem:[%s3 + $0x410] sm:$0xff]
    %v2663 = vld [vmem:[%s3 + $0x418] sm:$0xff]
    %v2664 = vld [vmem:[%s3 + $0x420] sm:$0xff]
    %v2665 = vld [vmem:[%s3 + $0x428] sm:$0xff]
    %v2666 = vld [vmem:[%s3 + $0x430] sm:$0xff]
    %v2667 = vld [vmem:[%s3 + $0x438] sm:$0xff]
    %v2668 = vld [vmem:[%s3 + $0x440] sm:$0xf]
    %v2669 = vld [vmem:[%s3 + $0x444] sm:$0xff]
    %v2670 = vld [vmem:[%s3 + $0x44c] sm:$0xff]
    %v2671 = vld [vmem:[%s3 + $0x454] sm:$0xff]
    %v2672 = vld [vmem:[%s3 + $0x45c] sm:$0xff]
    %v2673 = vld [vmem:[%s3 + $0x464] sm:$0xff]
    %v2674 = vld [vmem:[%s3 + $0x46c] sm:$0xff]
    %v2675 = vld [vmem:[%s3 + $0x474] sm:$0xf]
    %v2676 = vld [vmem:[%s3 + $0x478] sm:$0xff]
    %v2677 = vld [vmem:[%s3 + $0x480] sm:$0xff]
    %v2678 = vld [vmem:[%s3 + $0x488] sm:$0xff]
    %v2679 = vld [vmem:[%s3 + $0x490] sm:$0xff]
    %v2680 = vld [vmem:[%s3 + $0x498] sm:$0xff]
    %v2681 = vld [vmem:[%s3 + $0x4a0] sm:$0xff]
    %v2682 = vld [vmem:[%s3 + $0x4a8] sm:$0xf]
    %v2683 = vld [vmem:[%s3 + $0x4ac] sm:$0xff]
    %v2684 = vld [vmem:[%s3 + $0x4b4] sm:$0xff]
    %v2685 = vld [vmem:[%s3 + $0x4bc] sm:$0xff]
    %v2686 = vld [vmem:[%s3 + $0x4c4] sm:$0xff]
    %v2687 = vld [vmem:[%s3 + $0x4cc] sm:$0xff]
    %v2688 = vld [vmem:[%s3 + $0x4d4] sm:$0xff]
    %v2689 = vld [vmem:[%s3 + $0x4dc] sm:$0xf]
    %v2690 = vld [vmem:[%s3 + $0x4e0] sm:$0x33]
    %v2691 = vld [vmem:[%s3 + $0x4e8] sm:$0x33]
    %v2692 = vld [vmem:[%s3 + $0x4f0] sm:$0x33]
    %v2693 = vld [vmem:[%s3 + $0x4f8] sm:$0x33]
    %v2694 = vld [vmem:[%s3 + $0x500] sm:$0x33]
    %v2695 = vld [vmem:[%s3 + $0x508] sm:$0x33]
    %v2696 = vld [vmem:[%s3 + $0x510] sm:$0x3]
    %v2872 = vunpack.c.l.b16 %v2522
    %v2873 = vunpack.c.h.b16 %v2522
    %v2874 = vunpack.c.l.b16 %v2523
    %v2875 = vunpack.c.h.b16 %v2523
    %v2876 = vunpack.c.l.b16 %v2524
    %v2877 = vunpack.c.h.b16 %v2524
    %v2878 = vunpack.c.l.b16 %v2525
    %v2879 = vunpack.c.h.b16 %v2525
    %v2880 = vunpack.c.l.b16 %v2526
    %v2881 = vunpack.c.h.b16 %v2526
    %v2882 = vunpack.c.l.b16 %v2527
    %v2883 = vunpack.c.h.b16 %v2527
    %v2884 = vunpack.c.l.b16 %v2528
    %v2885 = vunpack.c.l.b16 %v2529
    %v2886 = vunpack.c.h.b16 %v2529
    %v2887 = vunpack.c.l.b16 %v2530
    %v2888 = vunpack.c.h.b16 %v2530
    %v2889 = vunpack.c.l.b16 %v2531
    %v2890 = vunpack.c.h.b16 %v2531
    %v2891 = vunpack.c.l.b16 %v2532
    %v2892 = vunpack.c.h.b16 %v2532
    %v2893 = vunpack.c.l.b16 %v2533
    %v2894 = vunpack.c.h.b16 %v2533
    %v2895 = vunpack.c.l.b16 %v2534
    %v2896 = vunpack.c.h.b16 %v2534
    %v2897 = vunpack.c.l.b16 %v2535
    %v2898 = vunpack.c.l.b16 %v2536
    %v2899 = vunpack.c.h.b16 %v2536
    %v2900 = vunpack.c.l.b16 %v2537
    %v2901 = vunpack.c.h.b16 %v2537
    %v2902 = vunpack.c.l.b16 %v2538
    %v2903 = vunpack.c.h.b16 %v2538
    %v2904 = vunpack.c.l.b16 %v2539
    %v2905 = vunpack.c.h.b16 %v2539
    %v2906 = vunpack.c.l.b16 %v2540
    %v2907 = vunpack.c.h.b16 %v2540
    %v2908 = vunpack.c.l.b16 %v2541
    %v2909 = vunpack.c.h.b16 %v2541
    %v2910 = vunpack.c.l.b16 %v2542
    %v2911 = vunpack.c.l.b16 %v2543
    %v2912 = vunpack.c.h.b16 %v2543
    %v2913 = vunpack.c.l.b16 %v2544
    %v2914 = vunpack.c.h.b16 %v2544
    %v2915 = vunpack.c.l.b16 %v2545
    %v2916 = vunpack.c.h.b16 %v2545
    %v2917 = vunpack.c.l.b16 %v2546
    %v2918 = vunpack.c.h.b16 %v2546
    %v2919 = vunpack.c.l.b16 %v2547
    %v2920 = vunpack.c.h.b16 %v2547
    %v2921 = vunpack.c.l.b16 %v2548
    %v2922 = vunpack.c.h.b16 %v2548
    %v2923 = vunpack.c.l.b16 %v2549
    %v2924 = vunpack.c.l.b16 %v2550
    %v2925 = vunpack.c.h.b16 %v2550
    %v2926 = vunpack.c.l.b16 %v2551
    %v2927 = vunpack.c.h.b16 %v2551
    %v2928 = vunpack.c.l.b16 %v2552
    %v2929 = vunpack.c.h.b16 %v2552
    %v2930 = vunpack.c.l.b16 %v2553
    %v2931 = vunpack.c.h.b16 %v2553
    %v2932 = vunpack.c.l.b16 %v2554
    %v2933 = vunpack.c.h.b16 %v2554
    %v2934 = vunpack.c.l.b16 %v2555
    %v2935 = vunpack.c.h.b16 %v2555
    %v2936 = vunpack.c.l.b16 %v2556
    %v2937 = vunpack.c.l.b16 %v2557
    %v2938 = vunpack.c.h.b16 %v2557
    %v2939 = vunpack.c.l.b16 %v2558
    %v2940 = vunpack.c.h.b16 %v2558
    %v2941 = vunpack.c.l.b16 %v2559
    %v2942 = vunpack.c.h.b16 %v2559
    %v2943 = vunpack.c.l.b16 %v2560
    %v2944 = vunpack.c.h.b16 %v2560
    %v2945 = vunpack.c.l.b16 %v2561
    %v2946 = vunpack.c.h.b16 %v2561
    %v2947 = vunpack.c.l.b16 %v2562
    %v2948 = vunpack.c.h.b16 %v2562
    %v2949 = vunpack.c.l.b16 %v2563
    %v2950 = vunpack.c.l.b16 %v2564
    %v2951 = vunpack.c.h.b16 %v2564
    %v2952 = vunpack.c.l.b16 %v2565
    %v2953 = vunpack.c.h.b16 %v2565
    %v2954 = vunpack.c.l.b16 %v2566
    %v2955 = vunpack.c.h.b16 %v2566
    %v2956 = vunpack.c.l.b16 %v2567
    %v2957 = vunpack.c.h.b16 %v2567
    %v2958 = vunpack.c.l.b16 %v2568
    %v2959 = vunpack.c.h.b16 %v2568
    %v2960 = vunpack.c.l.b16 %v2569
    %v2961 = vunpack.c.h.b16 %v2569
    %v2962 = vunpack.c.l.b16 %v2570
    %v2963 = vunpack.c.l.b16 %v2571
    %v2964 = vunpack.c.h.b16 %v2571
    %v2965 = vunpack.c.l.b16 %v2572
    %v2966 = vunpack.c.h.b16 %v2572
    %v2967 = vunpack.c.l.b16 %v2573
    %v2968 = vunpack.c.h.b16 %v2573
    %v2969 = vunpack.c.l.b16 %v2574
    %v2970 = vunpack.c.h.b16 %v2574
    %v2971 = vunpack.c.l.b16 %v2575
    %v2972 = vunpack.c.h.b16 %v2575
    %v2973 = vunpack.c.l.b16 %v2576
    %v2974 = vunpack.c.h.b16 %v2576
    %v2975 = vunpack.c.l.b16 %v2577
    %v2976 = vunpack.c.l.b16 %v2578
    %v2977 = vunpack.c.h.b16 %v2578
    %v2978 = vunpack.c.l.b16 %v2579
    %v2979 = vunpack.c.h.b16 %v2579
    %v2980 = vunpack.c.l.b16 %v2580
    %v2981 = vunpack.c.h.b16 %v2580
    %v2982 = vunpack.c.l.b16 %v2581
    %v2983 = vunpack.c.h.b16 %v2581
    %v2984 = vunpack.c.l.b16 %v2582
    %v2985 = vunpack.c.h.b16 %v2582
    %v2986 = vunpack.c.l.b16 %v2583
    %v2987 = vunpack.c.h.b16 %v2583
    %v2988 = vunpack.c.l.b16 %v2584
    %v2989 = vunpack.c.l.b16 %v2585
    %v2990 = vunpack.c.h.b16 %v2585
    %v2991 = vunpack.c.l.b16 %v2586
    %v2992 = vunpack.c.h.b16 %v2586
    %v2993 = vunpack.c.l.b16 %v2587
    %v2994 = vunpack.c.h.b16 %v2587
    %v2995 = vunpack.c.l.b16 %v2588
    %v2996 = vunpack.c.h.b16 %v2588
    %v2997 = vunpack.c.l.b16 %v2589
    %v2998 = vunpack.c.h.b16 %v2589
    %v2999 = vunpack.c.l.b16 %v2590
    %v3000 = vunpack.c.h.b16 %v2590
    %v3001 = vunpack.c.l.b16 %v2591
    %v3002 = vunpack.c.l.b16 %v2592
    %v3003 = vunpack.c.h.b16 %v2592
    %v3004 = vunpack.c.l.b16 %v2593
    %v3005 = vunpack.c.h.b16 %v2593
    %v3006 = vunpack.c.l.b16 %v2594
    %v3007 = vunpack.c.h.b16 %v2594
    %v3008 = vunpack.c.l.b16 %v2595
    %v3009 = vunpack.c.h.b16 %v2595
    %v3010 = vunpack.c.l.b16 %v2596
    %v3011 = vunpack.c.h.b16 %v2596
    %v3012 = vunpack.c.l.b16 %v2597
    %v3013 = vunpack.c.h.b16 %v2597
    %v3014 = vunpack.c.l.b16 %v2598
    %v3015 = vunpack.c.l.b16 %v2599
    %v3016 = vunpack.c.h.b16 %v2599
    %v3017 = vunpack.c.l.b16 %v2600
    %v3018 = vunpack.c.h.b16 %v2600
    %v3019 = vunpack.c.l.b16 %v2601
    %v3020 = vunpack.c.h.b16 %v2601
    %v3021 = vunpack.c.l.b16 %v2602
    %v3022 = vunpack.c.h.b16 %v2602
    %v3023 = vunpack.c.l.b16 %v2603
    %v3024 = vunpack.c.h.b16 %v2603
    %v3025 = vunpack.c.l.b16 %v2604
    %v3026 = vunpack.c.h.b16 %v2604
    %v3027 = vunpack.c.l.b16 %v2605
    %v3028 = vunpack.c.l.b16 %v2606
    %v3029 = vunpack.c.h.b16 %v2606
    %v3030 = vunpack.c.l.b16 %v2607
    %v3031 = vunpack.c.h.b16 %v2607
    %v3032 = vunpack.c.l.b16 %v2608
    %v3033 = vunpack.c.h.b16 %v2608
    %v3034 = vunpack.c.l.b16 %v2609
    %v3035 = vunpack.c.h.b16 %v2609
    %v3036 = vunpack.c.l.b16 %v2610
    %v3037 = vunpack.c.h.b16 %v2610
    %v3038 = vunpack.c.l.b16 %v2611
    %v3039 = vunpack.c.h.b16 %v2611
    %v3040 = vunpack.c.l.b16 %v2612
    %v3041 = vunpack.c.l.b16 %v2613
    %v3042 = vunpack.c.h.b16 %v2613
    %v3043 = vunpack.c.l.b16 %v2614
    %v3044 = vunpack.c.h.b16 %v2614
    %v3045 = vunpack.c.l.b16 %v2615
    %v3046 = vunpack.c.h.b16 %v2615
    %v3047 = vunpack.c.l.b16 %v2616
    %v3048 = vunpack.c.h.b16 %v2616
    %v3049 = vunpack.c.l.b16 %v2617
    %v3050 = vunpack.c.h.b16 %v2617
    %v3051 = vunpack.c.l.b16 %v2618
    %v3052 = vunpack.c.h.b16 %v2618
    %v3053 = vunpack.c.l.b16 %v2619
    %v3054 = vunpack.c.l.b16 %v2620
    %v3055 = vunpack.c.h.b16 %v2620
    %v3056 = vunpack.c.l.b16 %v2621
    %v3057 = vunpack.c.h.b16 %v2621
    %v3058 = vunpack.c.l.b16 %v2622
    %v3059 = vunpack.c.h.b16 %v2622
    %v3060 = vunpack.c.l.b16 %v2623
    %v3061 = vunpack.c.h.b16 %v2623
    %v3062 = vunpack.c.l.b16 %v2624
    %v3063 = vunpack.c.h.b16 %v2624
    %v3064 = vunpack.c.l.b16 %v2625
    %v3065 = vunpack.c.h.b16 %v2625
    %v3066 = vunpack.c.l.b16 %v2626
    %v3067 = vunpack.c.l.b16 %v2627
    %v3068 = vunpack.c.h.b16 %v2627
    %v3069 = vunpack.c.l.b16 %v2628
    %v3070 = vunpack.c.h.b16 %v2628
    %v3071 = vunpack.c.l.b16 %v2629
    %v3072 = vunpack.c.h.b16 %v2629
    %v3073 = vunpack.c.l.b16 %v2630
    %v3074 = vunpack.c.h.b16 %v2630
    %v3075 = vunpack.c.l.b16 %v2631
    %v3076 = vunpack.c.h.b16 %v2631
    %v3077 = vunpack.c.l.b16 %v2632
    %v3078 = vunpack.c.h.b16 %v2632
    %v3079 = vunpack.c.l.b16 %v2633
    %v3080 = vunpack.c.l.b16 %v2634
    %v3081 = vunpack.c.h.b16 %v2634
    %v3082 = vunpack.c.l.b16 %v2635
    %v3083 = vunpack.c.h.b16 %v2635
    %v3084 = vunpack.c.l.b16 %v2636
    %v3085 = vunpack.c.h.b16 %v2636
    %v3086 = vunpack.c.l.b16 %v2637
    %v3087 = vunpack.c.h.b16 %v2637
    %v3088 = vunpack.c.l.b16 %v2638
    %v3089 = vunpack.c.h.b16 %v2638
    %v3090 = vunpack.c.l.b16 %v2639
    %v3091 = vunpack.c.h.b16 %v2639
    %v3092 = vunpack.c.l.b16 %v2640
    %v3093 = vunpack.c.l.b16 %v2641
    %v3094 = vunpack.c.h.b16 %v2641
    %v3095 = vunpack.c.l.b16 %v2642
    %v3096 = vunpack.c.h.b16 %v2642
    %v3097 = vunpack.c.l.b16 %v2643
    %v3098 = vunpack.c.h.b16 %v2643
    %v3099 = vunpack.c.l.b16 %v2644
    %v3100 = vunpack.c.h.b16 %v2644
    %v3101 = vunpack.c.l.b16 %v2645
    %v3102 = vunpack.c.h.b16 %v2645
    %v3103 = vunpack.c.l.b16 %v2646
    %v3104 = vunpack.c.h.b16 %v2646
    %v3105 = vunpack.c.l.b16 %v2647
    %v3106 = vunpack.c.l.b16 %v2648
    %v3107 = vunpack.c.h.b16 %v2648
    %v3108 = vunpack.c.l.b16 %v2649
    %v3109 = vunpack.c.h.b16 %v2649
    %v3110 = vunpack.c.l.b16 %v2650
    %v3111 = vunpack.c.h.b16 %v2650
    %v3112 = vunpack.c.l.b16 %v2651
    %v3113 = vunpack.c.h.b16 %v2651
    %v3114 = vunpack.c.l.b16 %v2652
    %v3115 = vunpack.c.h.b16 %v2652
    %v3116 = vunpack.c.l.b16 %v2653
    %v3117 = vunpack.c.h.b16 %v2653
    %v3118 = vunpack.c.l.b16 %v2654
    %v3119 = vunpack.c.l.b16 %v2655
    %v3120 = vunpack.c.h.b16 %v2655
    %v3121 = vunpack.c.l.b16 %v2656
    %v3122 = vunpack.c.h.b16 %v2656
    %v3123 = vunpack.c.l.b16 %v2657
    %v3124 = vunpack.c.h.b16 %v2657
    %v3125 = vunpack.c.l.b16 %v2658
    %v3126 = vunpack.c.h.b16 %v2658
    %v3127 = vunpack.c.l.b16 %v2659
    %v3128 = vunpack.c.h.b16 %v2659
    %v3129 = vunpack.c.l.b16 %v2660
    %v3130 = vunpack.c.h.b16 %v2660
    %v3131 = vunpack.c.l.b16 %v2661
    %v3132 = vunpack.c.l.b16 %v2662
    %v3133 = vunpack.c.h.b16 %v2662
    %v3134 = vunpack.c.l.b16 %v2663
    %v3135 = vunpack.c.h.b16 %v2663
    %v3136 = vunpack.c.l.b16 %v2664
    %v3137 = vunpack.c.h.b16 %v2664
    %v3138 = vunpack.c.l.b16 %v2665
    %v3139 = vunpack.c.h.b16 %v2665
    %v3140 = vunpack.c.l.b16 %v2666
    %v3141 = vunpack.c.h.b16 %v2666
    %v3142 = vunpack.c.l.b16 %v2667
    %v3143 = vunpack.c.h.b16 %v2667
    %v3144 = vunpack.c.l.b16 %v2668
    %v3145 = vunpack.c.l.b16 %v2669
    %v3146 = vunpack.c.h.b16 %v2669
    %v3147 = vunpack.c.l.b16 %v2670
    %v3148 = vunpack.c.h.b16 %v2670
    %v3149 = vunpack.c.l.b16 %v2671
    %v3150 = vunpack.c.h.b16 %v2671
    %v3151 = vunpack.c.l.b16 %v2672
    %v3152 = vunpack.c.h.b16 %v2672
    %v3153 = vunpack.c.l.b16 %v2673
    %v3154 = vunpack.c.h.b16 %v2673
    %v3155 = vunpack.c.l.b16 %v2674
    %v3156 = vunpack.c.h.b16 %v2674
    %v3157 = vunpack.c.l.b16 %v2675
    %v3158 = vunpack.c.l.b16 %v2676
    %v3159 = vunpack.c.h.b16 %v2676
    %v3160 = vunpack.c.l.b16 %v2677
    %v3161 = vunpack.c.h.b16 %v2677
    %v3162 = vunpack.c.l.b16 %v2678
    %v3163 = vunpack.c.h.b16 %v2678
    %v3164 = vunpack.c.l.b16 %v2679
    %v3165 = vunpack.c.h.b16 %v2679
    %v3166 = vunpack.c.l.b16 %v2680
    %v3167 = vunpack.c.h.b16 %v2680
    %v3168 = vunpack.c.l.b16 %v2681
    %v3169 = vunpack.c.h.b16 %v2681
    %v3170 = vunpack.c.l.b16 %v2682
    %v3171 = vunpack.c.l.b16 %v2683
    %v3172 = vunpack.c.h.b16 %v2683
    %v3173 = vunpack.c.l.b16 %v2684
    %v3174 = vunpack.c.h.b16 %v2684
    %v3175 = vunpack.c.l.b16 %v2685
    %v3176 = vunpack.c.h.b16 %v2685
    %v3177 = vunpack.c.l.b16 %v2686
    %v3178 = vunpack.c.h.b16 %v2686
    %v3179 = vunpack.c.l.b16 %v2687
    %v3180 = vunpack.c.h.b16 %v2687
    %v3181 = vunpack.c.l.b16 %v2688
    %v3182 = vunpack.c.h.b16 %v2688
    %v3183 = vunpack.c.l.b16 %v2689
    %v3184 = vunpack.c.l.b16 %v2690
    %v3185 = vunpack.c.h.b16 %v2690
    %v3186 = vunpack.c.l.b16 %v2691
    %v3187 = vunpack.c.h.b16 %v2691
    %v3188 = vunpack.c.l.b16 %v2692
    %v3189 = vunpack.c.h.b16 %v2692
    %v3190 = vunpack.c.l.b16 %v2693
    %v3191 = vunpack.c.h.b16 %v2693
    %v3192 = vunpack.c.l.b16 %v2694
    %v3193 = vunpack.c.h.b16 %v2694
    %v3194 = vunpack.c.l.b16 %v2695
    %v3195 = vunpack.c.h.b16 %v2695
    %v3196 = vunpack.c.l.b16 %v2696
    %v3197 = vpack.c.b16 %v2885, %v2872
    %v3198 = vpack.c.b16 %v2886, %v2873
    %v3199 = vpack.c.b16 %v2887, %v2874
    %v3200 = vpack.c.b16 %v2888, %v2875
    %v3201 = vpack.c.b16 %v2889, %v2876
    %v3202 = vpack.c.b16 %v2890, %v2877
    %v3203 = vpack.c.b16 %v2891, %v2878
    %v3204 = vpack.c.b16 %v2892, %v2879
    %v3205 = vpack.c.b16 %v2893, %v2880
    %v3206 = vpack.c.b16 %v2894, %v2881
    %v3207 = vpack.c.b16 %v2895, %v2882
    %v3208 = vpack.c.b16 %v2896, %v2883
    %v3209 = vpack.c.b16 %v2897, %v2884
    %v3210 = vpack.c.b16 %v2911, %v2898
    %v3211 = vpack.c.b16 %v2912, %v2899
    %v3212 = vpack.c.b16 %v2913, %v2900
    %v3213 = vpack.c.b16 %v2914, %v2901
    %v3214 = vpack.c.b16 %v2915, %v2902
    %v3215 = vpack.c.b16 %v2916, %v2903
    %v3216 = vpack.c.b16 %v2917, %v2904
    %v3217 = vpack.c.b16 %v2918, %v2905
    %v3218 = vpack.c.b16 %v2919, %v2906
    %v3219 = vpack.c.b16 %v2920, %v2907
    %v3220 = vpack.c.b16 %v2921, %v2908
    %v3221 = vpack.c.b16 %v2922, %v2909
    %v3222 = vpack.c.b16 %v2923, %v2910
    %v3223 = vpack.c.b16 %v2937, %v2924
    %v3224 = vpack.c.b16 %v2938, %v2925
    %v3225 = vpack.c.b16 %v2939, %v2926
    %v3226 = vpack.c.b16 %v2940, %v2927
    %v3227 = vpack.c.b16 %v2941, %v2928
    %v3228 = vpack.c.b16 %v2942, %v2929
    %v3229 = vpack.c.b16 %v2943, %v2930
    %v3230 = vpack.c.b16 %v2944, %v2931
    %v3231 = vpack.c.b16 %v2945, %v2932
    %v3232 = vpack.c.b16 %v2946, %v2933
    %v3233 = vpack.c.b16 %v2947, %v2934
    %v3234 = vpack.c.b16 %v2948, %v2935
    %v3235 = vpack.c.b16 %v2949, %v2936
    %v3236 = vpack.c.b16 %v2963, %v2950
    %v3237 = vpack.c.b16 %v2964, %v2951
    %v3238 = vpack.c.b16 %v2965, %v2952
    %v3239 = vpack.c.b16 %v2966, %v2953
    %v3240 = vpack.c.b16 %v2967, %v2954
    %v3241 = vpack.c.b16 %v2968, %v2955
    %v3242 = vpack.c.b16 %v2969, %v2956
    %v3243 = vpack.c.b16 %v2970, %v2957
    %v3244 = vpack.c.b16 %v2971, %v2958
    %v3245 = vpack.c.b16 %v2972, %v2959
    %v3246 = vpack.c.b16 %v2973, %v2960
    %v3247 = vpack.c.b16 %v2974, %v2961
    %v3248 = vpack.c.b16 %v2975, %v2962
    %v3249 = vpack.c.b16 %v2989, %v2976
    %v3250 = vpack.c.b16 %v2990, %v2977
    %v3251 = vpack.c.b16 %v2991, %v2978
    %v3252 = vpack.c.b16 %v2992, %v2979
    %v3253 = vpack.c.b16 %v2993, %v2980
    %v3254 = vpack.c.b16 %v2994, %v2981
    %v3255 = vpack.c.b16 %v2995, %v2982
    %v3256 = vpack.c.b16 %v2996, %v2983
    %v3257 = vpack.c.b16 %v2997, %v2984
    %v3258 = vpack.c.b16 %v2998, %v2985
    %v3259 = vpack.c.b16 %v2999, %v2986
    %v3260 = vpack.c.b16 %v3000, %v2987
    %v3261 = vpack.c.b16 %v3001, %v2988
    %v3262 = vpack.c.b16 %v3015, %v3002
    %v3263 = vpack.c.b16 %v3016, %v3003
    %v3264 = vpack.c.b16 %v3017, %v3004
    %v3265 = vpack.c.b16 %v3018, %v3005
    %v3266 = vpack.c.b16 %v3019, %v3006
    %v3267 = vpack.c.b16 %v3020, %v3007
    %v3268 = vpack.c.b16 %v3021, %v3008
    %v3269 = vpack.c.b16 %v3022, %v3009
    %v3270 = vpack.c.b16 %v3023, %v3010
    %v3271 = vpack.c.b16 %v3024, %v3011
    %v3272 = vpack.c.b16 %v3025, %v3012
    %v3273 = vpack.c.b16 %v3026, %v3013
    %v3274 = vpack.c.b16 %v3027, %v3014
    %v3275 = vpack.c.b16 %v3041, %v3028
    %v3276 = vpack.c.b16 %v3042, %v3029
    %v3277 = vpack.c.b16 %v3043, %v3030
    %v3278 = vpack.c.b16 %v3044, %v3031
    %v3279 = vpack.c.b16 %v3045, %v3032
    %v3280 = vpack.c.b16 %v3046, %v3033
    %v3281 = vpack.c.b16 %v3047, %v3034
    %v3282 = vpack.c.b16 %v3048, %v3035
    %v3283 = vpack.c.b16 %v3049, %v3036
    %v3284 = vpack.c.b16 %v3050, %v3037
    %v3285 = vpack.c.b16 %v3051, %v3038
    %v3286 = vpack.c.b16 %v3052, %v3039
    %v3287 = vpack.c.b16 %v3053, %v3040
    %v3288 = vpack.c.b16 %v3067, %v3054
    %v3289 = vpack.c.b16 %v3068, %v3055
    %v3290 = vpack.c.b16 %v3069, %v3056
    %v3291 = vpack.c.b16 %v3070, %v3057
    %v3292 = vpack.c.b16 %v3071, %v3058
    %v3293 = vpack.c.b16 %v3072, %v3059
    %v3294 = vpack.c.b16 %v3073, %v3060
    %v3295 = vpack.c.b16 %v3074, %v3061
    %v3296 = vpack.c.b16 %v3075, %v3062
    %v3297 = vpack.c.b16 %v3076, %v3063
    %v3298 = vpack.c.b16 %v3077, %v3064
    %v3299 = vpack.c.b16 %v3078, %v3065
    %v3300 = vpack.c.b16 %v3079, %v3066
    %v3301 = vpack.c.b16 %v3093, %v3080
    %v3302 = vpack.c.b16 %v3094, %v3081
    %v3303 = vpack.c.b16 %v3095, %v3082
    %v3304 = vpack.c.b16 %v3096, %v3083
    %v3305 = vpack.c.b16 %v3097, %v3084
    %v3306 = vpack.c.b16 %v3098, %v3085
    %v3307 = vpack.c.b16 %v3099, %v3086
    %v3308 = vpack.c.b16 %v3100, %v3087
    %v3309 = vpack.c.b16 %v3101, %v3088
    %v3310 = vpack.c.b16 %v3102, %v3089
    %v3311 = vpack.c.b16 %v3103, %v3090
    %v3312 = vpack.c.b16 %v3104, %v3091
    %v3313 = vpack.c.b16 %v3105, %v3092
    %v3314 = vpack.c.b16 %v3119, %v3106
    %v3315 = vpack.c.b16 %v3120, %v3107
    %v3316 = vpack.c.b16 %v3121, %v3108
    %v3317 = vpack.c.b16 %v3122, %v3109
    %v3318 = vpack.c.b16 %v3123, %v3110
    %v3319 = vpack.c.b16 %v3124, %v3111
    %v3320 = vpack.c.b16 %v3125, %v3112
    %v3321 = vpack.c.b16 %v3126, %v3113
    %v3322 = vpack.c.b16 %v3127, %v3114
    %v3323 = vpack.c.b16 %v3128, %v3115
    %v3324 = vpack.c.b16 %v3129, %v3116
    %v3325 = vpack.c.b16 %v3130, %v3117
    %v3326 = vpack.c.b16 %v3131, %v3118
    %v3327 = vpack.c.b16 %v3145, %v3132
    %v3328 = vpack.c.b16 %v3146, %v3133
    %v3329 = vpack.c.b16 %v3147, %v3134
    %v3330 = vpack.c.b16 %v3148, %v3135
    %v3331 = vpack.c.b16 %v3149, %v3136
    %v3332 = vpack.c.b16 %v3150, %v3137
    %v3333 = vpack.c.b16 %v3151, %v3138
    %v3334 = vpack.c.b16 %v3152, %v3139
    %v3335 = vpack.c.b16 %v3153, %v3140
    %v3336 = vpack.c.b16 %v3154, %v3141
    %v3337 = vpack.c.b16 %v3155, %v3142
    %v3338 = vpack.c.b16 %v3156, %v3143
    %v3339 = vpack.c.b16 %v3157, %v3144
    %v3340 = vpack.c.b16 %v3171, %v3158
    %v3341 = vpack.c.b16 %v3172, %v3159
    %v3342 = vpack.c.b16 %v3173, %v3160
    %v3343 = vpack.c.b16 %v3174, %v3161
    %v3344 = vpack.c.b16 %v3175, %v3162
    %v3345 = vpack.c.b16 %v3176, %v3163
    %v3346 = vpack.c.b16 %v3177, %v3164
    %v3347 = vpack.c.b16 %v3178, %v3165
    %v3348 = vpack.c.b16 %v3179, %v3166
    %v3349 = vpack.c.b16 %v3180, %v3167
    %v3350 = vpack.c.b16 %v3181, %v3168
    %v3351 = vpack.c.b16 %v3182, %v3169
    %v3352 = vpack.c.b16 %v3183, %v3170
    %v3353 = vpack.c.b16 %v3184, %v3184
    %v3354 = vpack.c.b16 %v3185, %v3185
    %v3355 = vpack.c.b16 %v3186, %v3186
    %v3356 = vpack.c.b16 %v3187, %v3187
    %v3357 = vpack.c.b16 %v3188, %v3188
    %v3358 = vpack.c.b16 %v3189, %v3189
    %v3359 = vpack.c.b16 %v3190, %v3190
    %v3360 = vpack.c.b16 %v3191, %v3191
    %v3361 = vpack.c.b16 %v3192, %v3192
    %v3362 = vpack.c.b16 %v3193, %v3193
    %v3363 = vpack.c.b16 %v3194, %v3194
    %v3364 = vpack.c.b16 %v3195, %v3195
    %v3365 = vpack.c.b16 %v3196, %v3196
    %vm3522 = vcmask 556032
    %v3524 = vsel %vm3522, %v2521, 0
    %vm3526 = vcmask 1041408
    %v3528 = vsel %vm3526, %v3353, 0
    %v3531 = vsel %vm3526, %v3354, 0
    %v3534 = vsel %vm3526, %v3355, 0
    %v3537 = vsel %vm3526, %v3356, 0
    %v3540 = vsel %vm3526, %v3357, 0
    %v3543 = vsel %vm3526, %v3358, 0
    %v3546 = vsel %vm3526, %v3359, 0
    %v3549 = vsel %vm3526, %v3360, 0
    %v3552 = vsel %vm3526, %v3361, 0
    %v3555 = vsel %vm3526, %v3362, 0
    %v3558 = vsel %vm3526, %v3363, 0
    %v3561 = vsel %vm3526, %v3364, 0
    %v3564 = vsel %vm3526, %v3365, 0
    %3566 = vmatprep.subr.bf16.mxu0 %v3198
    %3567 = vmatpush1.bf16.msra.mxu0 %v3197
    %3568 = vmatprep.subr.bf16.mxu0 %v3211
    %3569 = vmatpush1.bf16.msra.mxu0 %v3210
    %3570 = vmatprep.subr.bf16.mxu0 %v3224
    %3571 = vmatpush1.bf16.msra.mxu0 %v3223
    %3572 = vmatprep.subr.bf16.mxu0 %v3237
    %3573 = vmatpush1.bf16.msra.mxu0 %v3236
    %3574 = vmatprep.subr.bf16.mxu0 %v3250
    %3575 = vmatpush1.bf16.msra.mxu0 %v3249
    %3576 = vmatprep.subr.bf16.mxu0 %v3263
    %3577 = vmatpush1.bf16.msra.mxu0 %v3262
    %3578 = vmatprep.subr.bf16.mxu0 %v3276
    %3579 = vmatpush1.bf16.msra.mxu0 %v3275
    %3580 = vmatprep.subr.bf16.mxu0 %v3289
    %3581 = vmatpush1.bf16.msra.mxu0 %v3288
    %3582 = vmatprep.subr.bf16.mxu0 %v3302
    %3583 = vmatpush1.bf16.msra.mxu0 %v3301
    %3584 = vmatprep.subr.bf16.mxu0 %v3315
    %3585 = vmatpush1.bf16.msra.mxu0 %v3314
    %3586 = vmatprep.subr.bf16.mxu0 %v3328
    %3587 = vmatpush1.bf16.msra.mxu0 %v3327
    %3588 = vmatprep.subr.bf16.mxu0 %v3341
    %3589 = vmatpush1.bf16.msra.mxu0 %v3340
    %3590 = vmatprep.subr.bf16.mxu0 %v3531
    %3591 = vmatpush1.bf16.msra.mxu0 %v3528
    %3592 = vmatprep.subr.bf16.mxu0 0
    %3593 = vmatpush1.bf16.msra.mxu0 0
    %3594 = vmatprep.subr.bf16.mxu0 0
    %3595 = vmatpush1.bf16.msra.mxu0 0
    %3596 = vmatprep.subr.bf16.mxu0 0
    %3597 = vmatpush1.bf16.msra.mxu0 0
    %3598 = vmatprep.mubr.bf16.mxu0 %v3524
    %3599 = vmatmul.mubr.bf16.gmra.mrb[0].mxu0 %v2520
    %v3600 = vpop.f32.mrb[0].mxu0
    %v3601 = vadd.f32 0.0, %v3600
    %v3602 = vpop.f32.mrb[0].mxu0
    %v3603 = vadd.f32 0.0, %v3602
    %v3604 = vpop.f32.mrb[0].mxu0
    %v3605 = vadd.f32 0.0, %v3604
    %v3606 = vpop.f32.mrb[0].mxu0
    %v3607 = vadd.f32 0.0, %v3606
    %3608 = vdwg.mxu0
    %3609 = vmatprep.subr.bf16.mxu0 %v3200
    %3610 = vmatpush1.bf16.msra.mxu0 %v3199
    %3611 = vmatprep.subr.bf16.mxu0 %v3213
    %3612 = vmatpush1.bf16.msra.mxu0 %v3212
    %3613 = vmatprep.subr.bf16.mxu0 %v3226
    %3614 = vmatpush1.bf16.msra.mxu0 %v3225
    %3615 = vmatprep.subr.bf16.mxu0 %v3239
    %3616 = vmatpush1.bf16.msra.mxu0 %v3238
    %3617 = vmatprep.subr.bf16.mxu0 %v3252
    %3618 = vmatpush1.bf16.msra.mxu0 %v3251
    %3619 = vmatprep.subr.bf16.mxu0 %v3265
    %3620 = vmatpush1.bf16.msra.mxu0 %v3264
    %3621 = vmatprep.subr.bf16.mxu0 %v3278
    %3622 = vmatpush1.bf16.msra.mxu0 %v3277
    %3623 = vmatprep.subr.bf16.mxu0 %v3291
    %3624 = vmatpush1.bf16.msra.mxu0 %v3290
    %3625 = vmatprep.subr.bf16.mxu0 %v3304
    %3626 = vmatpush1.bf16.msra.mxu0 %v3303
    %3627 = vmatprep.subr.bf16.mxu0 %v3317
    %3628 = vmatpush1.bf16.msra.mxu0 %v3316
    %3629 = vmatprep.subr.bf16.mxu0 %v3330
    %3630 = vmatpush1.bf16.msra.mxu0 %v3329
    %3631 = vmatprep.subr.bf16.mxu0 %v3343
    %3632 = vmatpush1.bf16.msra.mxu0 %v3342
    %3633 = vmatprep.subr.bf16.mxu0 %v3537
    %3634 = vmatpush1.bf16.msra.mxu0 %v3534
    %3635 = vmatprep.subr.bf16.mxu0 0
    %3636 = vmatpush1.bf16.msra.mxu0 0
    %3637 = vmatprep.subr.bf16.mxu0 0
    %3638 = vmatpush1.bf16.msra.mxu0 0
    %3639 = vmatprep.subr.bf16.mxu0 0
    %3640 = vmatpush1.bf16.msra.mxu0 0
    %3641 = vmatprep.mubr.bf16.mxu0 %v3524
    %3642 = vmatmul.mubr.bf16.gmra.mrb[0].mxu0 %v2520
    %v3643 = vpop.f32.mrb[0].mxu0
    %v3644 = vadd.f32 0.0, %v3643
    %v3645 = vpop.f32.mrb[0].mxu0
    %v3646 = vadd.f32 0.0, %v3645
    %v3647 = vpop.f32.mrb[0].mxu0
    %v3648 = vadd.f32 0.0, %v3647
    %v3649 = vpop.f32.mrb[0].mxu0
    %v3650 = vadd.f32 0.0, %v3649
    %3651 = vdwg.mxu0
    %3652 = vmatprep.subr.bf16.mxu0 %v3202
    %3653 = vmatpush1.bf16.msra.mxu0 %v3201
    %3654 = vmatprep.subr.bf16.mxu0 %v3215
    %3655 = vmatpush1.bf16.msra.mxu0 %v3214
    %3656 = vmatprep.subr.bf16.mxu0 %v3228
    %3657 = vmatpush1.bf16.msra.mxu0 %v3227
    %3658 = vmatprep.subr.bf16.mxu0 %v3241
    %3659 = vmatpush1.bf16.msra.mxu0 %v3240
    %3660 = vmatprep.subr.bf16.mxu0 %v3254
    %3661 = vmatpush1.bf16.msra.mxu0 %v3253
    %3662 = vmatprep.subr.bf16.mxu0 %v3267
    %3663 = vmatpush1.bf16.msra.mxu0 %v3266
    %3664 = vmatprep.subr.bf16.mxu0 %v3280
    %3665 = vmatpush1.bf16.msra.mxu0 %v3279
    %3666 = vmatprep.subr.bf16.mxu0 %v3293
    %3667 = vmatpush1.bf16.msra.mxu0 %v3292
    %3668 = vmatprep.subr.bf16.mxu0 %v3306
    %3669 = vmatpush1.bf16.msra.mxu0 %v3305
    %3670 = vmatprep.subr.bf16.mxu0 %v3319
    %3671 = vmatpush1.bf16.msra.mxu0 %v3318
    %3672 = vmatprep.subr.bf16.mxu0 %v3332
    %3673 = vmatpush1.bf16.msra.mxu0 %v3331
    %3674 = vmatprep.subr.bf16.mxu0 %v3345
    %3675 = vmatpush1.bf16.msra.mxu0 %v3344
    %3676 = vmatprep.subr.bf16.mxu0 %v3543
    %3677 = vmatpush1.bf16.msra.mxu0 %v3540
    %3678 = vmatprep.subr.bf16.mxu0 0
    %3679 = vmatpush1.bf16.msra.mxu0 0
    %3680 = vmatprep.subr.bf16.mxu0 0
    %3681 = vmatpush1.bf16.msra.mxu0 0
    %3682 = vmatprep.subr.bf16.mxu0 0
    %3683 = vmatpush1.bf16.msra.mxu0 0
    %3684 = vmatprep.mubr.bf16.mxu0 %v3524
    %3685 = vmatmul.mubr.bf16.gmra.mrb[0].mxu0 %v2520
    %v3686 = vpop.f32.mrb[0].mxu0
    %v3687 = vadd.f32 0.0, %v3686
    %v3688 = vpop.f32.mrb[0].mxu0
    %v3689 = vadd.f32 0.0, %v3688
    %v3690 = vpop.f32.mrb[0].mxu0
    %v3691 = vadd.f32 0.0, %v3690
    %v3692 = vpop.f32.mrb[0].mxu0
    %v3693 = vadd.f32 0.0, %v3692
    %3694 = vdwg.mxu0
    %3695 = vmatprep.subr.bf16.mxu0 %v3204
    %3696 = vmatpush1.bf16.msra.mxu0 %v3203
    %3697 = vmatprep.subr.bf16.mxu0 %v3217
    %3698 = vmatpush1.bf16.msra.mxu0 %v3216
    %3699 = vmatprep.subr.bf16.mxu0 %v3230
    %3700 = vmatpush1.bf16.msra.mxu0 %v3229
    %3701 = vmatprep.subr.bf16.mxu0 %v3243
    %3702 = vmatpush1.bf16.msra.mxu0 %v3242
    %3703 = vmatprep.subr.bf16.mxu0 %v3256
    %3704 = vmatpush1.bf16.msra.mxu0 %v3255
    %3705 = vmatprep.subr.bf16.mxu0 %v3269
    %3706 = vmatpush1.bf16.msra.mxu0 %v3268
    %3707 = vmatprep.subr.bf16.mxu0 %v3282
    %3708 = vmatpush1.bf16.msra.mxu0 %v3281
    %3709 = vmatprep.subr.bf16.mxu0 %v3295
    %3710 = vmatpush1.bf16.msra.mxu0 %v3294
    %3711 = vmatprep.subr.bf16.mxu0 %v3308
    %3712 = vmatpush1.bf16.msra.mxu0 %v3307
    %3713 = vmatprep.subr.bf16.mxu0 %v3321
    %3714 = vmatpush1.bf16.msra.mxu0 %v3320
    %3715 = vmatprep.subr.bf16.mxu0 %v3334
    %3716 = vmatpush1.bf16.msra.mxu0 %v3333
    %3717 = vmatprep.subr.bf16.mxu0 %v3347
    %3718 = vmatpush1.bf16.msra.mxu0 %v3346
    %3719 = vmatprep.subr.bf16.mxu0 %v3549
    %3720 = vmatpush1.bf16.msra.mxu0 %v3546
    %3721 = vmatprep.subr.bf16.mxu0 0
    %3722 = vmatpush1.bf16.msra.mxu0 0
    %3723 = vmatprep.subr.bf16.mxu0 0
    %3724 = vmatpush1.bf16.msra.mxu0 0
    %3725 = vmatprep.subr.bf16.mxu0 0
    %3726 = vmatpush1.bf16.msra.mxu0 0
    %3727 = vmatprep.mubr.bf16.mxu0 %v3524
    %3728 = vmatmul.mubr.bf16.gmra.mrb[0].mxu0 %v2520
    %v3729 = vpop.f32.mrb[0].mxu0
    %v3730 = vadd.f32 0.0, %v3729
    %v3731 = vpop.f32.mrb[0].mxu0
    %v3732 = vadd.f32 0.0, %v3731
    %v3733 = vpop.f32.mrb[0].mxu0
    %v3734 = vadd.f32 0.0, %v3733
    %v3735 = vpop.f32.mrb[0].mxu0
    %v3736 = vadd.f32 0.0, %v3735
    %3737 = vdwg.mxu0
    %3738 = vmatprep.subr.bf16.mxu0 %v3206
    %3739 = vmatpush1.bf16.msra.mxu0 %v3205
    %3740 = vmatprep.subr.bf16.mxu0 %v3219
    %3741 = vmatpush1.bf16.msra.mxu0 %v3218
    %3742 = vmatprep.subr.bf16.mxu0 %v3232
    %3743 = vmatpush1.bf16.msra.mxu0 %v3231
    %3744 = vmatprep.subr.bf16.mxu0 %v3245
    %3745 = vmatpush1.bf16.msra.mxu0 %v3244
    %3746 = vmatprep.subr.bf16.mxu0 %v3258
    %3747 = vmatpush1.bf16.msra.mxu0 %v3257
    %3748 = vmatprep.subr.bf16.mxu0 %v3271
    %3749 = vmatpush1.bf16.msra.mxu0 %v3270
    %3750 = vmatprep.subr.bf16.mxu0 %v3284
    %3751 = vmatpush1.bf16.msra.mxu0 %v3283
    %3752 = vmatprep.subr.bf16.mxu0 %v3297
    %3753 = vmatpush1.bf16.msra.mxu0 %v3296
    %3754 = vmatprep.subr.bf16.mxu0 %v3310
    %3755 = vmatpush1.bf16.msra.mxu0 %v3309
    %3756 = vmatprep.subr.bf16.mxu0 %v3323
    %3757 = vmatpush1.bf16.msra.mxu0 %v3322
    %3758 = vmatprep.subr.bf16.mxu0 %v3336
    %3759 = vmatpush1.bf16.msra.mxu0 %v3335
    %3760 = vmatprep.subr.bf16.mxu0 %v3349
    %3761 = vmatpush1.bf16.msra.mxu0 %v3348
    %3762 = vmatprep.subr.bf16.mxu0 %v3555
    %3763 = vmatpush1.bf16.msra.mxu0 %v3552
    %3764 = vmatprep.subr.bf16.mxu0 0
    %3765 = vmatpush1.bf16.msra.mxu0 0
    %3766 = vmatprep.subr.bf16.mxu0 0
    %3767 = vmatpush1.bf16.msra.mxu0 0
    %3768 = vmatprep.subr.bf16.mxu0 0
    %3769 = vmatpush1.bf16.msra.mxu0 0
    %3770 = vmatprep.mubr.bf16.mxu0 %v3524
    %3771 = vmatmul.mubr.bf16.gmra.mrb[0].mxu0 %v2520
    %v3772 = vpop.f32.mrb[0].mxu0
    %v3773 = vadd.f32 0.0, %v3772
    %v3774 = vpop.f32.mrb[0].mxu0
    %v3775 = vadd.f32 0.0, %v3774
    %v3776 = vpop.f32.mrb[0].mxu0
    %v3777 = vadd.f32 0.0, %v3776
    %v3778 = vpop.f32.mrb[0].mxu0
    %v3779 = vadd.f32 0.0, %v3778
    %3780 = vdwg.mxu0
    %3781 = vmatprep.subr.bf16.mxu0 %v3208
    %3782 = vmatpush1.bf16.msra.mxu0 %v3207
    %3783 = vmatprep.subr.bf16.mxu0 %v3221
    %3784 = vmatpush1.bf16.msra.mxu0 %v3220
    %3785 = vmatprep.subr.bf16.mxu0 %v3234
    %3786 = vmatpush1.bf16.msra.mxu0 %v3233
    %3787 = vmatprep.subr.bf16.mxu0 %v3247
    %3788 = vmatpush1.bf16.msra.mxu0 %v3246
    %3789 = vmatprep.subr.bf16.mxu0 %v3260
    %3790 = vmatpush1.bf16.msra.mxu0 %v3259
    %3791 = vmatprep.subr.bf16.mxu0 %v3273
    %3792 = vmatpush1.bf16.msra.mxu0 %v3272
    %3793 = vmatprep.subr.bf16.mxu0 %v3286
    %3794 = vmatpush1.bf16.msra.mxu0 %v3285
    %3795 = vmatprep.subr.bf16.mxu0 %v3299
    %3796 = vmatpush1.bf16.msra.mxu0 %v3298
    %3797 = vmatprep.subr.bf16.mxu0 %v3312
    %3798 = vmatpush1.bf16.msra.mxu0 %v3311
    %3799 = vmatprep.subr.bf16.mxu0 %v3325
    %3800 = vmatpush1.bf16.msra.mxu0 %v3324
    %3801 = vmatprep.subr.bf16.mxu0 %v3338
    %3802 = vmatpush1.bf16.msra.mxu0 %v3337
    %3803 = vmatprep.subr.bf16.mxu0 %v3351
    %3804 = vmatpush1.bf16.msra.mxu0 %v3350
    %3805 = vmatprep.subr.bf16.mxu0 %v3561
    %3806 = vmatpush1.bf16.msra.mxu0 %v3558
    %3807 = vmatprep.subr.bf16.mxu0 0
    %3808 = vmatpush1.bf16.msra.mxu0 0
    %3809 = vmatprep.subr.bf16.mxu0 0
    %3810 = vmatpush1.bf16.msra.mxu0 0
    %3811 = vmatprep.subr.bf16.mxu0 0
    %3812 = vmatpush1.bf16.msra.mxu0 0
    %3813 = vmatprep.mubr.bf16.mxu0 %v3524
    %3814 = vmatmul.mubr.bf16.gmra.mrb[0].mxu0 %v2520
    %v3815 = vpop.f32.mrb[0].mxu0
    %v3816 = vadd.f32 0.0, %v3815
    %v3817 = vpop.f32.mrb[0].mxu0
    %v3818 = vadd.f32 0.0, %v3817
    %v3819 = vpop.f32.mrb[0].mxu0
    %v3820 = vadd.f32 0.0, %v3819
    %v3821 = vpop.f32.mrb[0].mxu0
    %v3822 = vadd.f32 0.0, %v3821
    %3823 = vdwg.mxu0
    %3824 = vmatprep.subr.bf16.mxu0 0
    %3825 = vmatpush1.bf16.msra.mxu0 %v3209
    %3826 = vmatprep.subr.bf16.mxu0 0
    %3827 = vmatpush1.bf16.msra.mxu0 %v3222
    %3828 = vmatprep.subr.bf16.mxu0 0
    %3829 = vmatpush1.bf16.msra.mxu0 %v3235
    %3830 = vmatprep.subr.bf16.mxu0 0
    %3831 = vmatpush1.bf16.msra.mxu0 %v3248
    %3832 = vmatprep.subr.bf16.mxu0 0
    %3833 = vmatpush1.bf16.msra.mxu0 %v3261
    %3834 = vmatprep.subr.bf16.mxu0 0
    %3835 = vmatpush1.bf16.msra.mxu0 %v3274
    %3836 = vmatprep.subr.bf16.mxu0 0
    %3837 = vmatpush1.bf16.msra.mxu0 %v3287
    %3838 = vmatprep.subr.bf16.mxu0 0
    %3839 = vmatpush1.bf16.msra.mxu0 %v3300
    %3840 = vmatprep.subr.bf16.mxu0 0
    %3841 = vmatpush1.bf16.msra.mxu0 %v3313
    %3842 = vmatprep.subr.bf16.mxu0 0
    %3843 = vmatpush1.bf16.msra.mxu0 %v3326
    %3844 = vmatprep.subr.bf16.mxu0 0
    %3845 = vmatpush1.bf16.msra.mxu0 %v3339
    %3846 = vmatprep.subr.bf16.mxu0 0
    %3847 = vmatpush1.bf16.msra.mxu0 %v3352
    %3848 = vmatprep.subr.bf16.mxu0 0
    %3849 = vmatpush1.bf16.msra.mxu0 %v3564
    %3850 = vmatprep.subr.bf16.mxu0 0
    %3851 = vmatpush1.bf16.msra.mxu0 0
    %3852 = vmatprep.subr.bf16.mxu0 0
    %3853 = vmatpush1.bf16.msra.mxu0 0
    %3854 = vmatprep.subr.bf16.mxu0 0
    %3855 = vmatpush1.bf16.msra.mxu0 0
    %3856 = vmatprep.mubr.bf16.mxu0 %v3524
    %3857 = vmatmul.mubr.bf16.gmra.mrb[0].mxu0 %v2520
    %v3858 = vpop.f32.mrb[0].mxu0
    %v3859 = vadd.f32 0.0, %v3858
    %v3860 = vpop.f32.mrb[0].mxu0
    %v3861 = vpop.f32.mrb[0].mxu0
    %v3862 = vadd.f32 0.0, %v3861
    %v3863 = vpop.f32.mrb[0].mxu0
    %3864 = vdwg.mxu0
    %v3865 = vtanh.pop %v3601
    %v3866 = vtanh.pop %v3603
    %v3867 = vtanh.pop %v3644
    %v3868 = vtanh.pop %v3646
    %v3869 = vtanh.pop %v3687
    %v3870 = vtanh.pop %v3689
    %v3871 = vtanh.pop %v3730
    %v3872 = vtanh.pop %v3732
    %v3873 = vtanh.pop %v3773
    %v3874 = vtanh.pop %v3775
    %v3875 = vtanh.pop %v3816
    %v3876 = vtanh.pop %v3818
    %v3877 = vtanh.pop %v3859
    %v3878 = vtanh.pop %v3605
    %v3879 = vtanh.pop %v3607
    %v3880 = vtanh.pop %v3648
    %v3881 = vtanh.pop %v3650
    %v3882 = vtanh.pop %v3691
    %v3883 = vtanh.pop %v3693
    %v3884 = vtanh.pop %v3734
    %v3885 = vtanh.pop %v3736
    %v3886 = vtanh.pop %v3777
    %v3887 = vtanh.pop %v3779
    %v3888 = vtanh.pop %v3820
    %v3889 = vtanh.pop %v3822
    %v3890 = vtanh.pop %v3862
    %v3891 = vpack.c.bf16 %v3878, %v3865
    %v3892 = vpack.c.bf16 %v3879, %v3866
    %v3893 = vpack.c.bf16 %v3880, %v3867
    %v3894 = vpack.c.bf16 %v3881, %v3868
    %v3895 = vpack.c.bf16 %v3882, %v3869
    %v3896 = vpack.c.bf16 %v3883, %v3870
    %v3897 = vpack.c.bf16 %v3884, %v3871
    %v3898 = vpack.c.bf16 %v3885, %v3872
    %v3899 = vpack.c.bf16 %v3886, %v3873
    %v3900 = vpack.c.bf16 %v3887, %v3874
    %v3901 = vpack.c.bf16 %v3888, %v3875
    %v3902 = vpack.c.bf16 %v3889, %v3876
    %v3903 = vpack.c.bf16 %v3890, %v3877
    %v3904 = vld [vmem:[%s4] sm:$0xf]
    %v3905 = vld [vmem:[%s4 + $0x4] sm:$0xf]
    %v3906 = vld [vmem:[%s4 + $0x8] sm:$0xf]
    %v3907 = vld [vmem:[%s4 + $0xc] sm:$0xf]
    %v3908 = vld [vmem:[%s4 + $0x10] sm:$0xf]
    %v3909 = vld [vmem:[%s4 + $0x14] sm:$0xf]
    %v3910 = vld [vmem:[%s4 + $0x18] sm:$0xf]
    %v3911 = vld [vmem:[%s4 + $0x1c] sm:$0xf]
    %v3912 = vld [vmem:[%s4 + $0x20] sm:$0xf]
    %v3913 = vld [vmem:[%s4 + $0x24] sm:$0xf]
    %v3914 = vld [vmem:[%s4 + $0x28] sm:$0xf]
    %v3915 = vld [vmem:[%s4 + $0x2c] sm:$0xf]
    %v3916 = vld [vmem:[%s4 + $0x30] sm:$0xf]
    %v3917 = vld [vmem:[%s4 + $0x34] sm:$0xf]
    %v3918 = vld [vmem:[%s4 + $0x38] sm:$0xf]
    %v3919 = vld [vmem:[%s4 + $0x3c] sm:$0xf]
    %v3920 = vld [vmem:[%s4 + $0x40] sm:$0xf]
    %v3921 = vld [vmem:[%s4 + $0x44] sm:$0xf]
    %v3922 = vld [vmem:[%s4 + $0x48] sm:$0xf]
    %v3923 = vld [vmem:[%s4 + $0x4c] sm:$0xf]
    %v3924 = vld [vmem:[%s4 + $0x50] sm:$0xf]
    %v3925 = vld [vmem:[%s4 + $0x54] sm:$0xf]
    %v3926 = vld [vmem:[%s4 + $0x58] sm:$0xf]
    %v3927 = vld [vmem:[%s4 + $0x5c] sm:$0xf]
    %v3928 = vld [vmem:[%s4 + $0x60] sm:$0xf]
    %v3929 = vld [vmem:[%s4 + $0x64] sm:$0xf]
    %v3930 = vld [vmem:[%s4 + $0x68] sm:$0xf]
    %v3931 = vld [vmem:[%s4 + $0x6c] sm:$0xf]
    %v3932 = vld [vmem:[%s4 + $0x70] sm:$0xf]
    %v3933 = vld [vmem:[%s4 + $0x74] sm:$0xf]
    %v3934 = vld [vmem:[%s4 + $0x78] sm:$0xf]
    %v3935 = vld [vmem:[%s4 + $0x7c] sm:$0xf]
    %v3936 = vld [vmem:[%s4 + $0x80] sm:$0xf]
    %v3937 = vld [vmem:[%s4 + $0x84] sm:$0xf]
    %v3938 = vld [vmem:[%s4 + $0x88] sm:$0xf]
    %v3939 = vld [vmem:[%s4 + $0x8c] sm:$0xf]
    %v3940 = vld [vmem:[%s4 + $0x90] sm:$0xf]
    %v3941 = vld [vmem:[%s4 + $0x94] sm:$0xf]
    %v3942 = vld [vmem:[%s4 + $0x98] sm:$0xf]
    %v3943 = vld [vmem:[%s4 + $0x9c] sm:$0xf]
    %v3944 = vld [vmem:[%s4 + $0xa0] sm:$0xf]
    %v3945 = vld [vmem:[%s4 + $0xa4] sm:$0xf]
    %v3946 = vld [vmem:[%s4 + $0xa8] sm:$0xf]
    %v3947 = vld [vmem:[%s4 + $0xac] sm:$0xf]
    %v3948 = vld [vmem:[%s4 + $0xb0] sm:$0xf]
    %v3949 = vld [vmem:[%s4 + $0xb4] sm:$0xf]
    %v3950 = vld [vmem:[%s4 + $0xb8] sm:$0xf]
    %v3951 = vld [vmem:[%s4 + $0xbc] sm:$0xf]
    %v3952 = vld [vmem:[%s4 + $0xc0] sm:$0xf]
    %v3953 = vld [vmem:[%s4 + $0xc4] sm:$0xf]
    %v3954 = vld [vmem:[%s4 + $0xc8] sm:$0xf]
    %v3955 = vld [vmem:[%s4 + $0xcc] sm:$0xf]
    %v3956 = vld [vmem:[%s4 + $0xd0] sm:$0xf]
    %v3957 = vld [vmem:[%s4 + $0xd4] sm:$0xf]
    %v3958 = vld [vmem:[%s4 + $0xd8] sm:$0xf]
    %v3959 = vld [vmem:[%s4 + $0xdc] sm:$0xf]
    %v3960 = vld [vmem:[%s4 + $0xe0] sm:$0xf]
    %v3961 = vld [vmem:[%s4 + $0xe4] sm:$0xf]
    %v3962 = vld [vmem:[%s4 + $0xe8] sm:$0xf]
    %v3963 = vld [vmem:[%s4 + $0xec] sm:$0xf]
    %v3964 = vld [vmem:[%s4 + $0xf0] sm:$0xf]
    %v3965 = vld [vmem:[%s4 + $0xf4] sm:$0xf]
    %v3966 = vld [vmem:[%s4 + $0xf8] sm:$0xf]
    %v3967 = vld [vmem:[%s4 + $0xfc] sm:$0xf]
    %v3968 = vld [vmem:[%s4 + $0x100] sm:$0xf]
    %v3969 = vld [vmem:[%s4 + $0x104] sm:$0xf]
    %v3970 = vld [vmem:[%s4 + $0x108] sm:$0xf]
    %v3971 = vld [vmem:[%s4 + $0x10c] sm:$0xf]
    %v3972 = vld [vmem:[%s4 + $0x110] sm:$0xf]
    %v3973 = vld [vmem:[%s4 + $0x114] sm:$0xf]
    %v3974 = vld [vmem:[%s4 + $0x118] sm:$0xf]
    %v3975 = vld [vmem:[%s4 + $0x11c] sm:$0xf]
    %v3976 = vld [vmem:[%s4 + $0x120] sm:$0xf]
    %v3977 = vld [vmem:[%s4 + $0x124] sm:$0xf]
    %v3978 = vld [vmem:[%s4 + $0x128] sm:$0xf]
    %v3979 = vld [vmem:[%s4 + $0x12c] sm:$0xf]
    %v3980 = vld [vmem:[%s4 + $0x130] sm:$0xf]
    %v3981 = vld [vmem:[%s4 + $0x134] sm:$0xf]
    %v3982 = vld [vmem:[%s4 + $0x138] sm:$0xf]
    %v3983 = vld [vmem:[%s4 + $0x13c] sm:$0xf]
    %v3984 = vld [vmem:[%s4 + $0x140] sm:$0xf]
    %v3985 = vld [vmem:[%s4 + $0x144] sm:$0xf]
    %v3986 = vld [vmem:[%s4 + $0x148] sm:$0xf]
    %v3987 = vld [vmem:[%s4 + $0x14c] sm:$0xf]
    %v3988 = vld [vmem:[%s4 + $0x150] sm:$0xf]
    %v3989 = vld [vmem:[%s4 + $0x154] sm:$0xf]
    %v3990 = vld [vmem:[%s4 + $0x158] sm:$0xf]
    %v3991 = vld [vmem:[%s4 + $0x15c] sm:$0xf]
    %v3992 = vld [vmem:[%s4 + $0x160] sm:$0xf]
    %v3993 = vld [vmem:[%s4 + $0x164] sm:$0xf]
    %v3994 = vld [vmem:[%s4 + $0x168] sm:$0xf]
    %v3995 = vld [vmem:[%s4 + $0x16c] sm:$0xf]
    %v3996 = vld [vmem:[%s4 + $0x170] sm:$0xf]
    %v3997 = vld [vmem:[%s4 + $0x174] sm:$0xf]
    %v3998 = vld [vmem:[%s4 + $0x178] sm:$0xf]
    %v3999 = vld [vmem:[%s4 + $0x17c] sm:$0xf]
    %v4000 = vld [vmem:[%s4 + $0x180] sm:$0xf]
    %v4001 = vld [vmem:[%s4 + $0x184] sm:$0xf]
    %v4002 = vld [vmem:[%s4 + $0x188] sm:$0xf]
    %v4003 = vld [vmem:[%s4 + $0x18c] sm:$0xf]
    %v4004 = vld [vmem:[%s4 + $0x190] sm:$0xf]
    %v4005 = vld [vmem:[%s4 + $0x194] sm:$0xf]
    %v4006 = vld [vmem:[%s4 + $0x198] sm:$0xf]
    %v4007 = vld [vmem:[%s4 + $0x19c] sm:$0xf]
    %v4008 = vld [vmem:[%s4 + $0x1a0] sm:$0xf]
    %v4009 = vld [vmem:[%s4 + $0x1a4] sm:$0xf]
    %v4010 = vld [vmem:[%s4 + $0x1a8] sm:$0xf]
    %v4011 = vld [vmem:[%s4 + $0x1ac] sm:$0xf]
    %v4012 = vld [vmem:[%s4 + $0x1b0] sm:$0xf]
    %v4013 = vld [vmem:[%s4 + $0x1b4] sm:$0xf]
    %v4014 = vld [vmem:[%s4 + $0x1b8] sm:$0xf]
    %v4015 = vld [vmem:[%s4 + $0x1bc] sm:$0xf]
    %v4016 = vld [vmem:[%s4 + $0x1c0] sm:$0xf]
    %v4017 = vld [vmem:[%s4 + $0x1c4] sm:$0xf]
    %v4018 = vld [vmem:[%s4 + $0x1c8] sm:$0xf]
    %v4019 = vld [vmem:[%s4 + $0x1cc] sm:$0xf]
    %v4020 = vld [vmem:[%s4 + $0x1d0] sm:$0xf]
    %v4021 = vld [vmem:[%s4 + $0x1d4] sm:$0xf]
    %v4022 = vld [vmem:[%s4 + $0x1d8] sm:$0xf]
    %v4023 = vld [vmem:[%s4 + $0x1dc] sm:$0xf]
    %v4024 = vld [vmem:[%s4 + $0x1e0] sm:$0xf]
    %v4025 = vld [vmem:[%s4 + $0x1e4] sm:$0xf]
    %v4026 = vld [vmem:[%s4 + $0x1e8] sm:$0xf]
    %v4027 = vld [vmem:[%s4 + $0x1ec] sm:$0xf]
    %v4028 = vld [vmem:[%s4 + $0x1f0] sm:$0xf]
    %v4029 = vld [vmem:[%s4 + $0x1f4] sm:$0xf]
    %v4030 = vld [vmem:[%s4 + $0x1f8] sm:$0xf]
    %v4031 = vld [vmem:[%s4 + $0x1fc] sm:$0xf]
    %v4032 = vld [vmem:[%s4 + $0x200] sm:$0xf]
    %v4033 = vld [vmem:[%s4 + $0x204] sm:$0xf]
    %v4034 = vld [vmem:[%s4 + $0x208] sm:$0xf]
    %v4035 = vld [vmem:[%s4 + $0x20c] sm:$0xf]
    %v4036 = vld [vmem:[%s4 + $0x210] sm:$0xf]
    %v4037 = vld [vmem:[%s4 + $0x214] sm:$0xf]
    %v4038 = vld [vmem:[%s4 + $0x218] sm:$0xf]
    %v4039 = vld [vmem:[%s4 + $0x21c] sm:$0xf]
    %v4040 = vld [vmem:[%s4 + $0x220] sm:$0xf]
    %v4041 = vld [vmem:[%s4 + $0x224] sm:$0xf]
    %v4042 = vld [vmem:[%s4 + $0x228] sm:$0xf]
    %v4043 = vld [vmem:[%s4 + $0x22c] sm:$0xf]
    %v4044 = vld [vmem:[%s4 + $0x230] sm:$0xf]
    %v4045 = vld [vmem:[%s4 + $0x234] sm:$0xf]
    %v4046 = vld [vmem:[%s4 + $0x238] sm:$0xf]
    %v4047 = vld [vmem:[%s4 + $0x23c] sm:$0xf]
    %v4048 = vld [vmem:[%s4 + $0x240] sm:$0xf]
    %v4049 = vld [vmem:[%s4 + $0x244] sm:$0xf]
    %v4050 = vld [vmem:[%s4 + $0x248] sm:$0xf]
    %v4051 = vld [vmem:[%s4 + $0x24c] sm:$0xf]
    %v4052 = vld [vmem:[%s4 + $0x250] sm:$0xf]
    %v4053 = vld [vmem:[%s4 + $0x254] sm:$0xf]
    %v4054 = vld [vmem:[%s4 + $0x258] sm:$0xf]
    %v4055 = vld [vmem:[%s4 + $0x25c] sm:$0xf]
    %v4056 = vld [vmem:[%s4 + $0x260] sm:$0xf]
    %v4057 = vld [vmem:[%s4 + $0x264] sm:$0xf]
    %v4058 = vld [vmem:[%s4 + $0x268] sm:$0xf]
    %v4059 = vld [vmem:[%s4 + $0x26c] sm:$0xf]
    %v4060 = vld [vmem:[%s4 + $0x270] sm:$0xf]
    %v4061 = vld [vmem:[%s4 + $0x274] sm:$0xf]
    %v4062 = vld [vmem:[%s4 + $0x278] sm:$0xf]
    %v4063 = vld [vmem:[%s4 + $0x27c] sm:$0xf]
    %v4064 = vld [vmem:[%s4 + $0x280] sm:$0xf]
    %v4065 = vld [vmem:[%s4 + $0x284] sm:$0xf]
    %v4066 = vld [vmem:[%s4 + $0x288] sm:$0xf]
    %v4067 = vld [vmem:[%s4 + $0x28c] sm:$0xf]
    %v4068 = vld [vmem:[%s4 + $0x290] sm:$0xf]
    %v4069 = vld [vmem:[%s4 + $0x294] sm:$0xf]
    %v4070 = vld [vmem:[%s4 + $0x298] sm:$0xf]
    %v4071 = vld [vmem:[%s4 + $0x29c] sm:$0xf]
    %v4072 = vld [vmem:[%s4 + $0x2a0] sm:$0xf]
    %v4073 = vld [vmem:[%s4 + $0x2a4] sm:$0xf]
    %v4074 = vld [vmem:[%s4 + $0x2a8] sm:$0xf]
    %v4075 = vld [vmem:[%s4 + $0x2ac] sm:$0xf]
    %v4076 = vld [vmem:[%s4 + $0x2b0] sm:$0xf]
    %v4077 = vld [vmem:[%s4 + $0x2b4] sm:$0xf]
    %v4078 = vld [vmem:[%s4 + $0x2b8] sm:$0xf]
    %v4079 = vld [vmem:[%s4 + $0x2bc] sm:$0xf]
    %v4080 = vld [vmem:[%s4 + $0x2c0] sm:$0xf]
    %v4081 = vld [vmem:[%s4 + $0x2c4] sm:$0xf]
    %v4082 = vld [vmem:[%s4 + $0x2c8] sm:$0xf]
    %v4083 = vld [vmem:[%s4 + $0x2cc] sm:$0xf]
    %v4084 = vld [vmem:[%s4 + $0x2d0] sm:$0xf]
    %v4085 = vld [vmem:[%s4 + $0x2d4] sm:$0xf]
    %v4086 = vld [vmem:[%s4 + $0x2d8] sm:$0xf]
    %v4087 = vld [vmem:[%s4 + $0x2dc] sm:$0xf]
    %v4088 = vld [vmem:[%s4 + $0x2e0] sm:$0xf]
    %v4089 = vld [vmem:[%s4 + $0x2e4] sm:$0xf]
    %v4090 = vld [vmem:[%s4 + $0x2e8] sm:$0xf]
    %v4091 = vld [vmem:[%s4 + $0x2ec] sm:$0xf]
    %v4092 = vld [vmem:[%s4 + $0x2f0] sm:$0xf]
    %v4093 = vld [vmem:[%s4 + $0x2f4] sm:$0xf]
    %v4094 = vld [vmem:[%s4 + $0x2f8] sm:$0xf]
    %v4095 = vld [vmem:[%s4 + $0x2fc] sm:$0xf]
    %v4096 = vld [vmem:[%s4 + $0x300] sm:$0xf]
    %v4097 = vld [vmem:[%s4 + $0x304] sm:$0xf]
    %v4098 = vld [vmem:[%s4 + $0x308] sm:$0xf]
    %v4099 = vld [vmem:[%s4 + $0x30c] sm:$0xf]
    %v4100 = vld [vmem:[%s4 + $0x310] sm:$0xf]
    %v4101 = vld [vmem:[%s4 + $0x314] sm:$0xf]
    %v4102 = vld [vmem:[%s4 + $0x318] sm:$0xf]
    %v4103 = vld [vmem:[%s4 + $0x31c] sm:$0xf]
    %v4304 = vunpack.c.l.b16 %v3904
    %v4305 = vunpack.c.l.b16 %v3905
    %v4306 = vunpack.c.l.b16 %v3906
    %v4307 = vunpack.c.l.b16 %v3907
    %v4308 = vunpack.c.l.b16 %v3908
    %v4309 = vunpack.c.l.b16 %v3909
    %v4310 = vunpack.c.l.b16 %v3910
    %v4311 = vunpack.c.l.b16 %v3911
    %v4312 = vunpack.c.l.b16 %v3912
    %v4313 = vunpack.c.l.b16 %v3913
    %v4314 = vunpack.c.l.b16 %v3914
    %v4315 = vunpack.c.l.b16 %v3915
    %v4316 = vunpack.c.l.b16 %v3916
    %v4317 = vunpack.c.l.b16 %v3917
    %v4318 = vunpack.c.l.b16 %v3918
    %v4319 = vunpack.c.l.b16 %v3919
    %v4320 = vunpack.c.l.b16 %v3920
    %v4321 = vunpack.c.l.b16 %v3921
    %v4322 = vunpack.c.l.b16 %v3922
    %v4323 = vunpack.c.l.b16 %v3923
    %v4324 = vunpack.c.l.b16 %v3924
    %v4325 = vunpack.c.l.b16 %v3925
    %v4326 = vunpack.c.l.b16 %v3926
    %v4327 = vunpack.c.l.b16 %v3927
    %v4328 = vunpack.c.l.b16 %v3928
    %v4329 = vunpack.c.l.b16 %v3929
    %v4330 = vunpack.c.l.b16 %v3930
    %v4331 = vunpack.c.l.b16 %v3931
    %v4332 = vunpack.c.l.b16 %v3932
    %v4333 = vunpack.c.l.b16 %v3933
    %v4334 = vunpack.c.l.b16 %v3934
    %v4335 = vunpack.c.l.b16 %v3935
    %v4336 = vunpack.c.l.b16 %v3936
    %v4337 = vunpack.c.l.b16 %v3937
    %v4338 = vunpack.c.l.b16 %v3938
    %v4339 = vunpack.c.l.b16 %v3939
    %v4340 = vunpack.c.l.b16 %v3940
    %v4341 = vunpack.c.l.b16 %v3941
    %v4342 = vunpack.c.l.b16 %v3942
    %v4343 = vunpack.c.l.b16 %v3943
    %v4344 = vunpack.c.l.b16 %v3944
    %v4345 = vunpack.c.l.b16 %v3945
    %v4346 = vunpack.c.l.b16 %v3946
    %v4347 = vunpack.c.l.b16 %v3947
    %v4348 = vunpack.c.l.b16 %v3948
    %v4349 = vunpack.c.l.b16 %v3949
    %v4350 = vunpack.c.l.b16 %v3950
    %v4351 = vunpack.c.l.b16 %v3951
    %v4352 = vunpack.c.l.b16 %v3952
    %v4353 = vunpack.c.l.b16 %v3953
    %v4354 = vunpack.c.l.b16 %v3954
    %v4355 = vunpack.c.l.b16 %v3955
    %v4356 = vunpack.c.l.b16 %v3956
    %v4357 = vunpack.c.l.b16 %v3957
    %v4358 = vunpack.c.l.b16 %v3958
    %v4359 = vunpack.c.l.b16 %v3959
    %v4360 = vunpack.c.l.b16 %v3960
    %v4361 = vunpack.c.l.b16 %v3961
    %v4362 = vunpack.c.l.b16 %v3962
    %v4363 = vunpack.c.l.b16 %v3963
    %v4364 = vunpack.c.l.b16 %v3964
    %v4365 = vunpack.c.l.b16 %v3965
    %v4366 = vunpack.c.l.b16 %v3966
    %v4367 = vunpack.c.l.b16 %v3967
    %v4368 = vunpack.c.l.b16 %v3968
    %v4369 = vunpack.c.l.b16 %v3969
    %v4370 = vunpack.c.l.b16 %v3970
    %v4371 = vunpack.c.l.b16 %v3971
    %v4372 = vunpack.c.l.b16 %v3972
    %v4373 = vunpack.c.l.b16 %v3973
    %v4374 = vunpack.c.l.b16 %v3974
    %v4375 = vunpack.c.l.b16 %v3975
    %v4376 = vunpack.c.l.b16 %v3976
    %v4377 = vunpack.c.l.b16 %v3977
    %v4378 = vunpack.c.l.b16 %v3978
    %v4379 = vunpack.c.l.b16 %v3979
    %v4380 = vunpack.c.l.b16 %v3980
    %v4381 = vunpack.c.l.b16 %v3981
    %v4382 = vunpack.c.l.b16 %v3982
    %v4383 = vunpack.c.l.b16 %v3983
    %v4384 = vunpack.c.l.b16 %v3984
    %v4385 = vunpack.c.l.b16 %v3985
    %v4386 = vunpack.c.l.b16 %v3986
    %v4387 = vunpack.c.l.b16 %v3987
    %v4388 = vunpack.c.l.b16 %v3988
    %v4389 = vunpack.c.l.b16 %v3989
    %v4390 = vunpack.c.l.b16 %v3990
    %v4391 = vunpack.c.l.b16 %v3991
    %v4392 = vunpack.c.l.b16 %v3992
    %v4393 = vunpack.c.l.b16 %v3993
    %v4394 = vunpack.c.l.b16 %v3994
    %v4395 = vunpack.c.l.b16 %v3995
    %v4396 = vunpack.c.l.b16 %v3996
    %v4397 = vunpack.c.l.b16 %v3997
    %v4398 = vunpack.c.l.b16 %v3998
    %v4399 = vunpack.c.l.b16 %v3999
    %v4400 = vunpack.c.l.b16 %v4000
    %v4401 = vunpack.c.l.b16 %v4001
    %v4402 = vunpack.c.l.b16 %v4002
    %v4403 = vunpack.c.l.b16 %v4003
    %v4404 = vunpack.c.l.b16 %v4004
    %v4405 = vunpack.c.l.b16 %v4005
    %v4406 = vunpack.c.l.b16 %v4006
    %v4407 = vunpack.c.l.b16 %v4007
    %v4408 = vunpack.c.l.b16 %v4008
    %v4409 = vunpack.c.l.b16 %v4009
    %v4410 = vunpack.c.l.b16 %v4010
    %v4411 = vunpack.c.l.b16 %v4011
    %v4412 = vunpack.c.l.b16 %v4012
    %v4413 = vunpack.c.l.b16 %v4013
    %v4414 = vunpack.c.l.b16 %v4014
    %v4415 = vunpack.c.l.b16 %v4015
    %v4416 = vunpack.c.l.b16 %v4016
    %v4417 = vunpack.c.l.b16 %v4017
    %v4418 = vunpack.c.l.b16 %v4018
    %v4419 = vunpack.c.l.b16 %v4019
    %v4420 = vunpack.c.l.b16 %v4020
    %v4421 = vunpack.c.l.b16 %v4021
    %v4422 = vunpack.c.l.b16 %v4022
    %v4423 = vunpack.c.l.b16 %v4023
    %v4424 = vunpack.c.l.b16 %v4024
    %v4425 = vunpack.c.l.b16 %v4025
    %v4426 = vunpack.c.l.b16 %v4026
    %v4427 = vunpack.c.l.b16 %v4027
    %v4428 = vunpack.c.l.b16 %v4028
    %v4429 = vunpack.c.l.b16 %v4029
    %v4430 = vunpack.c.l.b16 %v4030
    %v4431 = vunpack.c.l.b16 %v4031
    %v4432 = vunpack.c.l.b16 %v4032
    %v4433 = vunpack.c.l.b16 %v4033
    %v4434 = vunpack.c.l.b16 %v4034
    %v4435 = vunpack.c.l.b16 %v4035
    %v4436 = vunpack.c.l.b16 %v4036
    %v4437 = vunpack.c.l.b16 %v4037
    %v4438 = vunpack.c.l.b16 %v4038
    %v4439 = vunpack.c.l.b16 %v4039
    %v4440 = vunpack.c.l.b16 %v4040
    %v4441 = vunpack.c.l.b16 %v4041
    %v4442 = vunpack.c.l.b16 %v4042
    %v4443 = vunpack.c.l.b16 %v4043
    %v4444 = vunpack.c.l.b16 %v4044
    %v4445 = vunpack.c.l.b16 %v4045
    %v4446 = vunpack.c.l.b16 %v4046
    %v4447 = vunpack.c.l.b16 %v4047
    %v4448 = vunpack.c.l.b16 %v4048
    %v4449 = vunpack.c.l.b16 %v4049
    %v4450 = vunpack.c.l.b16 %v4050
    %v4451 = vunpack.c.l.b16 %v4051
    %v4452 = vunpack.c.l.b16 %v4052
    %v4453 = vunpack.c.l.b16 %v4053
    %v4454 = vunpack.c.l.b16 %v4054
    %v4455 = vunpack.c.l.b16 %v4055
    %v4456 = vunpack.c.l.b16 %v4056
    %v4457 = vunpack.c.l.b16 %v4057
    %v4458 = vunpack.c.l.b16 %v4058
    %v4459 = vunpack.c.l.b16 %v4059
    %v4460 = vunpack.c.l.b16 %v4060
    %v4461 = vunpack.c.l.b16 %v4061
    %v4462 = vunpack.c.l.b16 %v4062
    %v4463 = vunpack.c.l.b16 %v4063
    %v4464 = vunpack.c.l.b16 %v4064
    %v4465 = vunpack.c.l.b16 %v4065
    %v4466 = vunpack.c.l.b16 %v4066
    %v4467 = vunpack.c.l.b16 %v4067
    %v4468 = vunpack.c.l.b16 %v4068
    %v4469 = vunpack.c.l.b16 %v4069
    %v4470 = vunpack.c.l.b16 %v4070
    %v4471 = vunpack.c.l.b16 %v4071
    %v4472 = vunpack.c.l.b16 %v4072
    %v4473 = vunpack.c.l.b16 %v4073
    %v4474 = vunpack.c.l.b16 %v4074
    %v4475 = vunpack.c.l.b16 %v4075
    %v4476 = vunpack.c.l.b16 %v4076
    %v4477 = vunpack.c.l.b16 %v4077
    %v4478 = vunpack.c.l.b16 %v4078
    %v4479 = vunpack.c.l.b16 %v4079
    %v4480 = vunpack.c.l.b16 %v4080
    %v4481 = vunpack.c.l.b16 %v4081
    %v4482 = vunpack.c.l.b16 %v4082
    %v4483 = vunpack.c.l.b16 %v4083
    %v4484 = vunpack.c.l.b16 %v4084
    %v4485 = vunpack.c.l.b16 %v4085
    %v4486 = vunpack.c.l.b16 %v4086
    %v4487 = vunpack.c.l.b16 %v4087
    %v4488 = vunpack.c.l.b16 %v4088
    %v4489 = vunpack.c.l.b16 %v4089
    %v4490 = vunpack.c.l.b16 %v4090
    %v4491 = vunpack.c.l.b16 %v4091
    %v4492 = vunpack.c.l.b16 %v4092
    %v4493 = vunpack.c.l.b16 %v4093
    %v4494 = vunpack.c.l.b16 %v4094
    %v4495 = vunpack.c.l.b16 %v4095
    %v4496 = vunpack.c.l.b16 %v4096
    %v4497 = vunpack.c.l.b16 %v4097
    %v4498 = vunpack.c.l.b16 %v4098
    %v4499 = vunpack.c.l.b16 %v4099
    %v4500 = vunpack.c.l.b16 %v4100
    %v4501 = vunpack.c.l.b16 %v4101
    %v4502 = vunpack.c.l.b16 %v4102
    %v4503 = vunpack.c.l.b16 %v4103
    %v4504 = vpack.c.b16 %v4305, %v4304
    %v4505 = vpack.c.b16 %v4307, %v4306
    %v4506 = vpack.c.b16 %v4309, %v4308
    %v4507 = vpack.c.b16 %v4311, %v4310
    %v4508 = vpack.c.b16 %v4313, %v4312
    %v4509 = vpack.c.b16 %v4315, %v4314
    %v4510 = vpack.c.b16 %v4317, %v4316
    %v4511 = vpack.c.b16 %v4319, %v4318
    %v4512 = vpack.c.b16 %v4321, %v4320
    %v4513 = vpack.c.b16 %v4323, %v4322
    %v4514 = vpack.c.b16 %v4325, %v4324
    %v4515 = vpack.c.b16 %v4327, %v4326
    %v4516 = vpack.c.b16 %v4329, %v4328
    %v4517 = vpack.c.b16 %v4331, %v4330
    %v4518 = vpack.c.b16 %v4333, %v4332
    %v4519 = vpack.c.b16 %v4335, %v4334
    %v4520 = vpack.c.b16 %v4337, %v4336
    %v4521 = vpack.c.b16 %v4339, %v4338
    %v4522 = vpack.c.b16 %v4341, %v4340
    %v4523 = vpack.c.b16 %v4343, %v4342
    %v4524 = vpack.c.b16 %v4345, %v4344
    %v4525 = vpack.c.b16 %v4347, %v4346
    %v4526 = vpack.c.b16 %v4349, %v4348
    %v4527 = vpack.c.b16 %v4351, %v4350
    %v4528 = vpack.c.b16 %v4353, %v4352
    %v4529 = vpack.c.b16 %v4355, %v4354
    %v4530 = vpack.c.b16 %v4357, %v4356
    %v4531 = vpack.c.b16 %v4359, %v4358
    %v4532 = vpack.c.b16 %v4361, %v4360
    %v4533 = vpack.c.b16 %v4363, %v4362
    %v4534 = vpack.c.b16 %v4365, %v4364
    %v4535 = vpack.c.b16 %v4367, %v4366
    %v4536 = vpack.c.b16 %v4369, %v4368
    %v4537 = vpack.c.b16 %v4371, %v4370
    %v4538 = vpack.c.b16 %v4373, %v4372
    %v4539 = vpack.c.b16 %v4375, %v4374
    %v4540 = vpack.c.b16 %v4377, %v4376
    %v4541 = vpack.c.b16 %v4379, %v4378
    %v4542 = vpack.c.b16 %v4381, %v4380
    %v4543 = vpack.c.b16 %v4383, %v4382
    %v4544 = vpack.c.b16 %v4385, %v4384
    %v4545 = vpack.c.b16 %v4387, %v4386
    %v4546 = vpack.c.b16 %v4389, %v4388
    %v4547 = vpack.c.b16 %v4391, %v4390
    %v4548 = vpack.c.b16 %v4393, %v4392
    %v4549 = vpack.c.b16 %v4395, %v4394
    %v4550 = vpack.c.b16 %v4397, %v4396
    %v4551 = vpack.c.b16 %v4399, %v4398
    %v4552 = vpack.c.b16 %v4401, %v4400
    %v4553 = vpack.c.b16 %v4403, %v4402
    %v4554 = vpack.c.b16 %v4405, %v4404
    %v4555 = vpack.c.b16 %v4407, %v4406
    %v4556 = vpack.c.b16 %v4409, %v4408
    %v4557 = vpack.c.b16 %v4411, %v4410
    %v4558 = vpack.c.b16 %v4413, %v4412
    %v4559 = vpack.c.b16 %v4415, %v4414
    %v4560 = vpack.c.b16 %v4417, %v4416
    %v4561 = vpack.c.b16 %v4419, %v4418
    %v4562 = vpack.c.b16 %v4421, %v4420
    %v4563 = vpack.c.b16 %v4423, %v4422
    %v4564 = vpack.c.b16 %v4425, %v4424
    %v4565 = vpack.c.b16 %v4427, %v4426
    %v4566 = vpack.c.b16 %v4429, %v4428
    %v4567 = vpack.c.b16 %v4431, %v4430
    %v4568 = vpack.c.b16 %v4433, %v4432
    %v4569 = vpack.c.b16 %v4435, %v4434
    %v4570 = vpack.c.b16 %v4437, %v4436
    %v4571 = vpack.c.b16 %v4439, %v4438
    %v4572 = vpack.c.b16 %v4441, %v4440
    %v4573 = vpack.c.b16 %v4443, %v4442
    %v4574 = vpack.c.b16 %v4445, %v4444
    %v4575 = vpack.c.b16 %v4447, %v4446
    %v4576 = vpack.c.b16 %v4449, %v4448
    %v4577 = vpack.c.b16 %v4451, %v4450
    %v4578 = vpack.c.b16 %v4453, %v4452
    %v4579 = vpack.c.b16 %v4455, %v4454
    %v4580 = vpack.c.b16 %v4457, %v4456
    %v4581 = vpack.c.b16 %v4459, %v4458
    %v4582 = vpack.c.b16 %v4461, %v4460
    %v4583 = vpack.c.b16 %v4463, %v4462
    %v4584 = vpack.c.b16 %v4465, %v4464
    %v4585 = vpack.c.b16 %v4467, %v4466
    %v4586 = vpack.c.b16 %v4469, %v4468
    %v4587 = vpack.c.b16 %v4471, %v4470
    %v4588 = vpack.c.b16 %v4473, %v4472
    %v4589 = vpack.c.b16 %v4475, %v4474
    %v4590 = vpack.c.b16 %v4477, %v4476
    %v4591 = vpack.c.b16 %v4479, %v4478
    %v4592 = vpack.c.b16 %v4481, %v4480
    %v4593 = vpack.c.b16 %v4483, %v4482
    %v4594 = vpack.c.b16 %v4485, %v4484
    %v4595 = vpack.c.b16 %v4487, %v4486
    %v4596 = vpack.c.b16 %v4489, %v4488
    %v4597 = vpack.c.b16 %v4491, %v4490
    %v4598 = vpack.c.b16 %v4493, %v4492
    %v4599 = vpack.c.b16 %v4495, %v4494
    %v4600 = vpack.c.b16 %v4497, %v4496
    %v4601 = vpack.c.b16 %v4499, %v4498
    %v4602 = vpack.c.b16 %v4501, %v4500
    %v4603 = vpack.c.b16 %v4503, %v4502
    %vm4704 = vcmask 523264
    %v4706 = vsel %vm4704, %v3903, 0
    %4708 = vmatprep.subr.bf16.mxu0 0
    %4709 = vmatpush1.bf16.msra.mxu0 %v4504
    %4710 = vmatprep.subr.bf16.mxu0 0
    %4711 = vmatpush1.bf16.msra.mxu0 %v4505
    %4712 = vmatprep.subr.bf16.mxu0 0
    %4713 = vmatpush1.bf16.msra.mxu0 %v4506
    %4714 = vmatprep.subr.bf16.mxu0 0
    %4715 = vmatpush1.bf16.msra.mxu0 %v4507
    %4716 = vmatprep.subr.bf16.mxu0 0
    %4717 = vmatpush1.bf16.msra.mxu0 %v4508
    %4718 = vmatprep.subr.bf16.mxu0 0
    %4719 = vmatpush1.bf16.msra.mxu0 %v4509
    %4720 = vmatprep.subr.bf16.mxu0 0
    %4721 = vmatpush1.bf16.msra.mxu0 %v4510
    %4722 = vmatprep.subr.bf16.mxu0 0
    %4723 = vmatpush1.bf16.msra.mxu0 %v4511
    %4724 = vmatprep.subr.bf16.mxu0 0
    %4725 = vmatpush1.bf16.msra.mxu0 %v4512
    %4726 = vmatprep.subr.bf16.mxu0 0
    %4727 = vmatpush1.bf16.msra.mxu0 %v4513
    %4728 = vmatprep.subr.bf16.mxu0 0
    %4729 = vmatpush1.bf16.msra.mxu0 %v4514
    %4730 = vmatprep.subr.bf16.mxu0 0
    %4731 = vmatpush1.bf16.msra.mxu0 %v4515
    %4732 = vmatprep.subr.bf16.mxu0 0
    %4733 = vmatpush1.bf16.msra.mxu0 %v4516
    %4734 = vmatprep.subr.bf16.mxu0 0
    %4735 = vmatpush1.bf16.msra.mxu0 %v4517
    %4736 = vmatprep.subr.bf16.mxu0 0
    %4737 = vmatpush1.bf16.msra.mxu0 %v4518
    %4738 = vmatprep.subr.bf16.mxu0 0
    %4739 = vmatpush1.bf16.msra.mxu0 %v4519
    %4740 = vmatprep.mubr.bf16.mxu0 %v3892
    %4741 = vmatmul.mubr.bf16.gmra.mrb[0].mxu0 %v3891
    %v4742 = vpop.f32.mrb[0].mxu0
    %v4743 = vadd.f32 0.0, %v4742
    %v4744 = vpop.f32.mrb[0].mxu0
    %v4745 = vpop.f32.mrb[0].mxu0
    %v4746 = vadd.f32 0.0, %v4745
    %v4747 = vpop.f32.mrb[0].mxu0
    %4748 = vdwg.mxu0
    %4749 = vmatprep.subr.bf16.mxu0 0
    %4750 = vmatpush1.bf16.msra.mxu0 %v4520
    %4751 = vmatprep.subr.bf16.mxu0 0
    %4752 = vmatpush1.bf16.msra.mxu0 %v4521
    %4753 = vmatprep.subr.bf16.mxu0 0
    %4754 = vmatpush1.bf16.msra.mxu0 %v4522
    %4755 = vmatprep.subr.bf16.mxu0 0
    %4756 = vmatpush1.bf16.msra.mxu0 %v4523
    %4757 = vmatprep.subr.bf16.mxu0 0
    %4758 = vmatpush1.bf16.msra.mxu0 %v4524
    %4759 = vmatprep.subr.bf16.mxu0 0
    %4760 = vmatpush1.bf16.msra.mxu0 %v4525
    %4761 = vmatprep.subr.bf16.mxu0 0
    %4762 = vmatpush1.bf16.msra.mxu0 %v4526
    %4763 = vmatprep.subr.bf16.mxu0 0
    %4764 = vmatpush1.bf16.msra.mxu0 %v4527
    %4765 = vmatprep.subr.bf16.mxu0 0
    %4766 = vmatpush1.bf16.msra.mxu0 %v4528
    %4767 = vmatprep.subr.bf16.mxu0 0
    %4768 = vmatpush1.bf16.msra.mxu0 %v4529
    %4769 = vmatprep.subr.bf16.mxu0 0
    %4770 = vmatpush1.bf16.msra.mxu0 %v4530
    %4771 = vmatprep.subr.bf16.mxu0 0
    %4772 = vmatpush1.bf16.msra.mxu0 %v4531
    %4773 = vmatprep.subr.bf16.mxu0 0
    %4774 = vmatpush1.bf16.msra.mxu0 %v4532
    %4775 = vmatprep.subr.bf16.mxu0 0
    %4776 = vmatpush1.bf16.msra.mxu0 %v4533
    %4777 = vmatprep.subr.bf16.mxu0 0
    %4778 = vmatpush1.bf16.msra.mxu0 %v4534
    %4779 = vmatprep.subr.bf16.mxu0 0
    %4780 = vmatpush1.bf16.msra.mxu0 %v4535
    %4781 = vmatprep.mubr.bf16.mxu0 %v3894
    %4782 = vmatmul.mubr.bf16.gmra.mrb[0].mxu0 %v3893
    %v4783 = vpop.f32.mrb[0].mxu0
    %v4784 = vadd.f32 %v4743, %v4783
    %v4785 = vpop.f32.mrb[0].mxu0
    %v4786 = vpop.f32.mrb[0].mxu0
    %v4787 = vadd.f32 %v4746, %v4786
    %v4788 = vpop.f32.mrb[0].mxu0
    %4789 = vdwg.mxu0
    %4790 = vmatprep.subr.bf16.mxu0 0
    %4791 = vmatpush1.bf16.msra.mxu0 %v4536
    %4792 = vmatprep.subr.bf16.mxu0 0
    %4793 = vmatpush1.bf16.msra.mxu0 %v4537
    %4794 = vmatprep.subr.bf16.mxu0 0
    %4795 = vmatpush1.bf16.msra.mxu0 %v4538
    %4796 = vmatprep.subr.bf16.mxu0 0
    %4797 = vmatpush1.bf16.msra.mxu0 %v4539
    %4798 = vmatprep.subr.bf16.mxu0 0
    %4799 = vmatpush1.bf16.msra.mxu0 %v4540
    %4800 = vmatprep.subr.bf16.mxu0 0
    %4801 = vmatpush1.bf16.msra.mxu0 %v4541
    %4802 = vmatprep.subr.bf16.mxu0 0
    %4803 = vmatpush1.bf16.msra.mxu0 %v4542
    %4804 = vmatprep.subr.bf16.mxu0 0
    %4805 = vmatpush1.bf16.msra.mxu0 %v4543
    %4806 = vmatprep.subr.bf16.mxu0 0
    %4807 = vmatpush1.bf16.msra.mxu0 %v4544
    %4808 = vmatprep.subr.bf16.mxu0 0
    %4809 = vmatpush1.bf16.msra.mxu0 %v4545
    %4810 = vmatprep.subr.bf16.mxu0 0
    %4811 = vmatpush1.bf16.msra.mxu0 %v4546
    %4812 = vmatprep.subr.bf16.mxu0 0
    %4813 = vmatpush1.bf16.msra.mxu0 %v4547
    %4814 = vmatprep.subr.bf16.mxu0 0
    %4815 = vmatpush1.bf16.msra.mxu0 %v4548
    %4816 = vmatprep.subr.bf16.mxu0 0
    %4817 = vmatpush1.bf16.msra.mxu0 %v4549
    %4818 = vmatprep.subr.bf16.mxu0 0
    %4819 = vmatpush1.bf16.msra.mxu0 %v4550
    %4820 = vmatprep.subr.bf16.mxu0 0
    %4821 = vmatpush1.bf16.msra.mxu0 %v4551
    %4822 = vmatprep.mubr.bf16.mxu0 %v3896
    %4823 = vmatmul.mubr.bf16.gmra.mrb[0].mxu0 %v3895
    %v4824 = vpop.f32.mrb[0].mxu0
    %v4825 = vadd.f32 %v4784, %v4824
    %v4826 = vpop.f32.mrb[0].mxu0
    %v4827 = vpop.f32.mrb[0].mxu0
    %v4828 = vadd.f32 %v4787, %v4827
    %v4829 = vpop.f32.mrb[0].mxu0
    %4830 = vdwg.mxu0
    %4831 = vmatprep.subr.bf16.mxu0 0
    %4832 = vmatpush1.bf16.msra.mxu0 %v4552
    %4833 = vmatprep.subr.bf16.mxu0 0
    %4834 = vmatpush1.bf16.msra.mxu0 %v4553
    %4835 = vmatprep.subr.bf16.mxu0 0
    %4836 = vmatpush1.bf16.msra.mxu0 %v4554
    %4837 = vmatprep.subr.bf16.mxu0 0
    %4838 = vmatpush1.bf16.msra.mxu0 %v4555
    %4839 = vmatprep.subr.bf16.mxu0 0
    %4840 = vmatpush1.bf16.msra.mxu0 %v4556
    %4841 = vmatprep.subr.bf16.mxu0 0
    %4842 = vmatpush1.bf16.msra.mxu0 %v4557
    %4843 = vmatprep.subr.bf16.mxu0 0
    %4844 = vmatpush1.bf16.msra.mxu0 %v4558
    %4845 = vmatprep.subr.bf16.mxu0 0
    %4846 = vmatpush1.bf16.msra.mxu0 %v4559
    %4847 = vmatprep.subr.bf16.mxu0 0
    %4848 = vmatpush1.bf16.msra.mxu0 %v4560
    %4849 = vmatprep.subr.bf16.mxu0 0
    %4850 = vmatpush1.bf16.msra.mxu0 %v4561
    %4851 = vmatprep.subr.bf16.mxu0 0
    %4852 = vmatpush1.bf16.msra.mxu0 %v4562
    %4853 = vmatprep.subr.bf16.mxu0 0
    %4854 = vmatpush1.bf16.msra.mxu0 %v4563
    %4855 = vmatprep.subr.bf16.mxu0 0
    %4856 = vmatpush1.bf16.msra.mxu0 %v4564
    %4857 = vmatprep.subr.bf16.mxu0 0
    %4858 = vmatpush1.bf16.msra.mxu0 %v4565
    %4859 = vmatprep.subr.bf16.mxu0 0
    %4860 = vmatpush1.bf16.msra.mxu0 %v4566
    %4861 = vmatprep.subr.bf16.mxu0 0
    %4862 = vmatpush1.bf16.msra.mxu0 %v4567
    %4863 = vmatprep.mubr.bf16.mxu0 %v3898
    %4864 = vmatmul.mubr.bf16.gmra.mrb[0].mxu0 %v3897
    %v4865 = vpop.f32.mrb[0].mxu0
    %v4866 = vadd.f32 %v4825, %v4865
    %v4867 = vpop.f32.mrb[0].mxu0
    %v4868 = vpop.f32.mrb[0].mxu0
    %v4869 = vadd.f32 %v4828, %v4868
    %v4870 = vpop.f32.mrb[0].mxu0
    %4871 = vdwg.mxu0
    %4872 = vmatprep.subr.bf16.mxu0 0
    %4873 = vmatpush1.bf16.msra.mxu0 %v4568
    %4874 = vmatprep.subr.bf16.mxu0 0
    %4875 = vmatpush1.bf16.msra.mxu0 %v4569
    %4876 = vmatprep.subr.bf16.mxu0 0
    %4877 = vmatpush1.bf16.msra.mxu0 %v4570
    %4878 = vmatprep.subr.bf16.mxu0 0
    %4879 = vmatpush1.bf16.msra.mxu0 %v4571
    %4880 = vmatprep.subr.bf16.mxu0 0
    %4881 = vmatpush1.bf16.msra.mxu0 %v4572
    %4882 = vmatprep.subr.bf16.mxu0 0
    %4883 = vmatpush1.bf16.msra.mxu0 %v4573
    %4884 = vmatprep.subr.bf16.mxu0 0
    %4885 = vmatpush1.bf16.msra.mxu0 %v4574
    %4886 = vmatprep.subr.bf16.mxu0 0
    %4887 = vmatpush1.bf16.msra.mxu0 %v4575
    %4888 = vmatprep.subr.bf16.mxu0 0
    %4889 = vmatpush1.bf16.msra.mxu0 %v4576
    %4890 = vmatprep.subr.bf16.mxu0 0
    %4891 = vmatpush1.bf16.msra.mxu0 %v4577
    %4892 = vmatprep.subr.bf16.mxu0 0
    %4893 = vmatpush1.bf16.msra.mxu0 %v4578
    %4894 = vmatprep.subr.bf16.mxu0 0
    %4895 = vmatpush1.bf16.msra.mxu0 %v4579
    %4896 = vmatprep.subr.bf16.mxu0 0
    %4897 = vmatpush1.bf16.msra.mxu0 %v4580
    %4898 = vmatprep.subr.bf16.mxu0 0
    %4899 = vmatpush1.bf16.msra.mxu0 %v4581
    %4900 = vmatprep.subr.bf16.mxu0 0
    %4901 = vmatpush1.bf16.msra.mxu0 %v4582
    %4902 = vmatprep.subr.bf16.mxu0 0
    %4903 = vmatpush1.bf16.msra.mxu0 %v4583
    %4904 = vmatprep.mubr.bf16.mxu0 %v3900
    %4905 = vmatmul.mubr.bf16.gmra.mrb[0].mxu0 %v3899
    %v4906 = vpop.f32.mrb[0].mxu0
    %v4907 = vadd.f32 %v4866, %v4906
    %v4908 = vpop.f32.mrb[0].mxu0
    %v4909 = vpop.f32.mrb[0].mxu0
    %v4910 = vadd.f32 %v4869, %v4909
    %v4911 = vpop.f32.mrb[0].mxu0
    %4912 = vdwg.mxu0
    %4913 = vmatprep.subr.bf16.mxu0 0
    %4914 = vmatpush1.bf16.msra.mxu0 %v4584
    %4915 = vmatprep.subr.bf16.mxu0 0
    %4916 = vmatpush1.bf16.msra.mxu0 %v4585
    %4917 = vmatprep.subr.bf16.mxu0 0
    %4918 = vmatpush1.bf16.msra.mxu0 %v4586
    %4919 = vmatprep.subr.bf16.mxu0 0
    %4920 = vmatpush1.bf16.msra.mxu0 %v4587
    %4921 = vmatprep.subr.bf16.mxu0 0
    %4922 = vmatpush1.bf16.msra.mxu0 %v4588
    %4923 = vmatprep.subr.bf16.mxu0 0
    %4924 = vmatpush1.bf16.msra.mxu0 %v4589
    %4925 = vmatprep.subr.bf16.mxu0 0
    %4926 = vmatpush1.bf16.msra.mxu0 %v4590
    %4927 = vmatprep.subr.bf16.mxu0 0
    %4928 = vmatpush1.bf16.msra.mxu0 %v4591
    %4929 = vmatprep.subr.bf16.mxu0 0
    %4930 = vmatpush1.bf16.msra.mxu0 %v4592
    %4931 = vmatprep.subr.bf16.mxu0 0
    %4932 = vmatpush1.bf16.msra.mxu0 %v4593
    %4933 = vmatprep.subr.bf16.mxu0 0
    %4934 = vmatpush1.bf16.msra.mxu0 %v4594
    %4935 = vmatprep.subr.bf16.mxu0 0
    %4936 = vmatpush1.bf16.msra.mxu0 %v4595
    %4937 = vmatprep.subr.bf16.mxu0 0
    %4938 = vmatpush1.bf16.msra.mxu0 %v4596
    %4939 = vmatprep.subr.bf16.mxu0 0
    %4940 = vmatpush1.bf16.msra.mxu0 %v4597
    %4941 = vmatprep.subr.bf16.mxu0 0
    %4942 = vmatpush1.bf16.msra.mxu0 %v4598
    %4943 = vmatprep.subr.bf16.mxu0 0
    %4944 = vmatpush1.bf16.msra.mxu0 %v4599
    %4945 = vmatprep.mubr.bf16.mxu0 %v3902
    %4946 = vmatmul.mubr.bf16.gmra.mrb[0].mxu0 %v3901
    %v4947 = vpop.f32.mrb[0].mxu0
    %v4948 = vadd.f32 %v4907, %v4947
    %v4949 = vpop.f32.mrb[0].mxu0
    %v4950 = vpop.f32.mrb[0].mxu0
    %v4951 = vadd.f32 %v4910, %v4950
    %v4952 = vpop.f32.mrb[0].mxu0
    %4953 = vdwg.mxu0
    %4954 = vmatprep.subr.bf16.mxu0 0
    %4955 = vmatpush1.bf16.msra.mxu0 %v4600
    %4956 = vmatprep.subr.bf16.mxu0 0
    %4957 = vmatpush1.bf16.msra.mxu0 %v4601
    %4958 = vmatprep.subr.bf16.mxu0 0
    %4959 = vmatpush1.bf16.msra.mxu0 %v4602
    %4960 = vmatprep.subr.bf16.mxu0 0
    %4961 = vmatpush1.bf16.msra.mxu0 %v4603
    %4962 = vmatprep.subr.bf16.mxu0 0
    %4963 = vmatpush1.bf16.msra.mxu0 0
    %4964 = vmatprep.subr.bf16.mxu0 0
    %4965 = vmatpush1.bf16.msra.mxu0 0
    %4966 = vmatprep.subr.bf16.mxu0 0
    %4967 = vmatpush1.bf16.msra.mxu0 0
    %4968 = vmatprep.subr.bf16.mxu0 0
    %4969 = vmatpush1.bf16.msra.mxu0 0
    %4970 = vmatprep.subr.bf16.mxu0 0
    %4971 = vmatpush1.bf16.msra.mxu0 0
    %4972 = vmatprep.subr.bf16.mxu0 0
    %4973 = vmatpush1.bf16.msra.mxu0 0
    %4974 = vmatprep.subr.bf16.mxu0 0
    %4975 = vmatpush1.bf16.msra.mxu0 0
    %4976 = vmatprep.subr.bf16.mxu0 0
    %4977 = vmatpush1.bf16.msra.mxu0 0
    %4978 = vmatprep.subr.bf16.mxu0 0
    %4979 = vmatpush1.bf16.msra.mxu0 0
    %4980 = vmatprep.subr.bf16.mxu0 0
    %4981 = vmatpush1.bf16.msra.mxu0 0
    %4982 = vmatprep.subr.bf16.mxu0 0
    %4983 = vmatpush1.bf16.msra.mxu0 0
    %4984 = vmatprep.subr.bf16.mxu0 0
    %4985 = vmatpush1.bf16.msra.mxu0 0
    %4986 = vmatprep.mubr.bf16.mxu0 0
    %4987 = vmatmul.mubr.bf16.gmra.mrb[0].mxu0 %v4706
    %v4988 = vpop.f32.mrb[0].mxu0
    %v4989 = vadd.f32 %v4948, %v4988
    %v4990 = vpop.f32.mrb[0].mxu0
    %v4991 = vpop.f32.mrb[0].mxu0
    %v4992 = vadd.f32 %v4951, %v4991
    %v4993 = vpop.f32.mrb[0].mxu0
    %4994 = vdwg.mxu0
    %v4995 = vpack.c.bf16 %v4992, %v4989
    %v4996 = vld [vmem:[%s5] sm:$0xf]
    %v4997 = vld [vmem:[%s5 + $0x4] sm:$0xf]
    %v4998 = vld [vmem:[%s5 + $0x8] sm:$0xf]
    %v4999 = vld [vmem:[%s5 + $0xc] sm:$0x1]
    %v5004 = vunpack.c.l.b16 %v4996
    %v5005 = vunpack.c.l.b16 %v4997
    %v5006 = vunpack.c.l.b16 %v4998
    %v5007 = vunpack.c.l.b16 %v4999
    %v5008 = vpack.c.b16 %v5005, %v5004
    %v5009 = vpack.c.b16 %v5007, %v5006
    %vm5011 = vcmask 203776
    %v5013 = vsel %vm5011, %v4995, 0
    %vm5015 = vcmask 1044480
    %v5016 = vsel %vm2089, 4294967295, 65535
    %v5017 = vsel %vm5015, %v5016, 0
    %v5019 = vand.u32 %v5009, %v5017
    %5021 = vmatprep.subr.bf16.mxu0 0
    %5022 = vmatpush1.bf16.msra.mxu0 %v5008
    %5023 = vmatprep.subr.bf16.mxu0 0
    %5024 = vmatpush1.bf16.msra.mxu0 %v5019
    %5025 = vmatprep.subr.bf16.mxu0 0
    %5026 = vmatpush1.bf16.msra.mxu0 0
    %5027 = vmatprep.subr.bf16.mxu0 0
    %5028 = vmatpush1.bf16.msra.mxu0 0
    %5029 = vmatprep.subr.bf16.mxu0 0
    %5030 = vmatpush1.bf16.msra.mxu0 0
    %5031 = vmatprep.subr.bf16.mxu0 0
    %5032 = vmatpush1.bf16.msra.mxu0 0
    %5033 = vmatprep.subr.bf16.mxu0 0
    %5034 = vmatpush1.bf16.msra.mxu0 0
    %5035 = vmatprep.subr.bf16.mxu0 0
    %5036 = vmatpush1.bf16.msra.mxu0 0
    %5037 = vmatprep.subr.bf16.mxu0 0
    %5038 = vmatpush1.bf16.msra.mxu0 0
    %5039 = vmatprep.subr.bf16.mxu0 0
    %5040 = vmatpush1.bf16.msra.mxu0 0
    %5041 = vmatprep.subr.bf16.mxu0 0
    %5042 = vmatpush1.bf16.msra.mxu0 0
    %5043 = vmatprep.subr.bf16.mxu0 0
    %5044 = vmatpush1.bf16.msra.mxu0 0
    %5045 = vmatprep.subr.bf16.mxu0 0
    %5046 = vmatpush1.bf16.msra.mxu0 0
    %5047 = vmatprep.subr.bf16.mxu0 0
    %5048 = vmatpush1.bf16.msra.mxu0 0
    %5049 = vmatprep.subr.bf16.mxu0 0
    %5050 = vmatpush1.bf16.msra.mxu0 0
    %5051 = vmatprep.subr.bf16.mxu0 0
    %5052 = vmatpush1.bf16.msra.mxu0 0
    %5053 = vmatprep.mubr.bf16.mxu0 0
    %5054 = vmatmul.mubr.bf16.gmra.mrb[0].mxu0 %v5013
    %v5055 = vpop.f32.mrb[0].mxu0
    %v5056 = vadd.f32 0.0, %v5055
    %v5057 = vpop.f32.mrb[0].mxu0
    %v5058 = vpop.f32.mrb[0].mxu0
    %v5059 = vadd.f32 0.0, %v5058
    %v5060 = vpop.f32.mrb[0].mxu0
    %5061 = vdwg.mxu0
    %v5062 = vtanh.pop %v5056
    %v5063 = vtanh.pop %v5059
    %v5064 = vpack.c.bf16 %v5063, %v5062
    %v5065 = vld [vmem:[%s6] sm:$0xf]
    %v5066 = vld [vmem:[%s6 + $0x4] sm:$0xf]
    %v5067 = vld [vmem:[%s6 + $0x8] sm:$0xf]
    %v5068 = vld [vmem:[%s6 + $0xc] sm:$0xf]
    %v5069 = vld [vmem:[%s6 + $0x10] sm:$0xf]
    %v5070 = vld [vmem:[%s6 + $0x14] sm:$0xf]
    %v5071 = vld [vmem:[%s6 + $0x18] sm:$0xf]
    %v5072 = vld [vmem:[%s6 + $0x1c] sm:$0xf]
    %v5073 = vld [vmem:[%s6 + $0x20] sm:$0xf]
    %v5074 = vld [vmem:[%s6 + $0x24] sm:$0xf]
    %v5075 = vld [vmem:[%s6 + $0x28] sm:$0xf]
    %v5076 = vld [vmem:[%s6 + $0x2c] sm:$0xf]
    %v5077 = vld [vmem:[%s6 + $0x30] sm:$0xf]
    %v5078 = vld [vmem:[%s6 + $0x34] sm:$0xf]
    %v5079 = vld [vmem:[%s6 + $0x38] sm:$0xf]
    %v5080 = vld [vmem:[%s7] sm:$0x1]
    %v5082 = vlaneseq
    %v5083 = vshrl.u32 %v5082, 7
    %v5084 = vsub.s32 0, %v5083
    %v5085 = vrot.slane %v5080, %v5084
    %v5102 = vunpack.c.l.b16 %v5065
    %v5103 = vunpack.c.l.b16 %v5066
    %v5104 = vunpack.c.l.b16 %v5067
    %v5105 = vunpack.c.l.b16 %v5068
    %v5106 = vunpack.c.l.b16 %v5069
    %v5107 = vunpack.c.l.b16 %v5070
    %v5108 = vunpack.c.l.b16 %v5071
    %v5109 = vunpack.c.l.b16 %v5072
    %v5110 = vunpack.c.l.b16 %v5073
    %v5111 = vunpack.c.l.b16 %v5074
    %v5112 = vunpack.c.l.b16 %v5075
    %v5113 = vunpack.c.l.b16 %v5076
    %v5114 = vunpack.c.l.b16 %v5077
    %v5115 = vunpack.c.l.b16 %v5078
    %v5116 = vunpack.c.l.b16 %v5079
    %v5117 = vpack.c.b16 %v5103, %v5102
    %v5118 = vpack.c.b16 %v5105, %v5104
    %v5119 = vpack.c.b16 %v5107, %v5106
    %v5120 = vpack.c.b16 %v5109, %v5108
    %v5121 = vpack.c.b16 %v5111, %v5110
    %v5122 = vpack.c.b16 %v5113, %v5112
    %v5123 = vpack.c.b16 %v5115, %v5114
    %v5124 = vpack.c.b16 %v5116, %v5116
    %vm5132 = vcmask 982016
    %v5134 = vsel %vm5132, %v5064, 0
    %v5137 = vsel %vm2089, %v5124, 0
    %5139 = vmatprep.subr.bf16.mxu0 0
    %5140 = vmatpush1.bf16.msra.mxu0 %v5117
    %5141 = vmatprep.subr.bf16.mxu0 0
    %5142 = vmatpush1.bf16.msra.mxu0 %v5118
    %5143 = vmatprep.subr.bf16.mxu0 0
    %5144 = vmatpush1.bf16.msra.mxu0 %v5119
    %5145 = vmatprep.subr.bf16.mxu0 0
    %5146 = vmatpush1.bf16.msra.mxu0 %v5120
    %5147 = vmatprep.subr.bf16.mxu0 0
    %5148 = vmatpush1.bf16.msra.mxu0 %v5121
    %5149 = vmatprep.subr.bf16.mxu0 0
    %5150 = vmatpush1.bf16.msra.mxu0 %v5122
    %5151 = vmatprep.subr.bf16.mxu0 0
    %5152 = vmatpush1.bf16.msra.mxu0 %v5123
    %5153 = vmatprep.subr.bf16.mxu0 0
    %5154 = vmatpush1.bf16.msra.mxu0 %v5137
    %5155 = vmatprep.subr.bf16.mxu0 0
    %5156 = vmatpush1.bf16.msra.mxu0 0
    %5157 = vmatprep.subr.bf16.mxu0 0
    %5158 = vmatpush1.bf16.msra.mxu0 0
    %5159 = vmatprep.subr.bf16.mxu0 0
    %5160 = vmatpush1.bf16.msra.mxu0 0
    %5161 = vmatprep.subr.bf16.mxu0 0
    %5162 = vmatpush1.bf16.msra.mxu0 0
    %5163 = vmatprep.subr.bf16.mxu0 0
    %5164 = vmatpush1.bf16.msra.mxu0 0
    %5165 = vmatprep.subr.bf16.mxu0 0
    %5166 = vmatpush1.bf16.msra.mxu0 0
    %5167 = vmatprep.subr.bf16.mxu0 0
    %5168 = vmatpush1.bf16.msra.mxu0 0
    %5169 = vmatprep.subr.bf16.mxu0 0
    %5170 = vmatpush1.bf16.msra.mxu0 0
    %5171 = vmatprep.mubr.bf16.mxu0 0
    %5172 = vmatmul.mubr.bf16.gmra.mrb[0].mxu0 %v5134
    %v5173 = vpop.f32.mrb[0].mxu0
    %v5174 = vadd.f32 %v5085, %v5173
    %v5175 = vpop.f32.mrb[0].mxu0
    %v5176 = vpop.f32.mrb[0].mxu0
    %v5177 = vadd.f32 %v5085, %v5176
    %v5178 = vpop.f32.mrb[0].mxu0
    %5179 = vdwg.mxu0
    %v5180 = vtanh.pop %v5174
    %v5181 = vtanh.pop %v5177
    %v5182 = vpack.c.bf16 %v5181, %v5180
    %v5183 = vld [vmem:[%s8] sm:$0xf]
    %v5184 = vld [vmem:[%s8 + $0x4] sm:$0xf]
    %v5185 = vld [vmem:[%s8 + $0x8] sm:$0xf]
    %v5186 = vld [vmem:[%s8 + $0xc] sm:$0xf]
    %v5187 = vld [vmem:[%s8 + $0x10] sm:$0xf]
    %v5188 = vld [vmem:[%s8 + $0x14] sm:$0xf]
    %v5189 = vld [vmem:[%s8 + $0x18] sm:$0xf]
    %v5190 = vld [vmem:[%s8 + $0x1c] sm:$0xf]
    %v5191 = vld [vmem:[%s8 + $0x20] sm:$0xf]
    %v5192 = vld [vmem:[%s8 + $0x24] sm:$0xf]
    %v5193 = vld [vmem:[%s8 + $0x28] sm:$0x3]
    %v5194 = vld [vmem:[%s9] sm:$0x1]
    %v5196 = vlaneseq
    %v5197 = vshrl.u32 %v5196, 7
    %v5198 = vsub.s32 0, %v5197
    %v5199 = vrot.slane %v5194, %v5198
    %v5212 = vunpack.c.l.b16 %v5183
    %v5213 = vunpack.c.l.b16 %v5184
    %v5214 = vunpack.c.l.b16 %v5185
    %v5215 = vunpack.c.l.b16 %v5186
    %v5216 = vunpack.c.l.b16 %v5187
    %v5217 = vunpack.c.l.b16 %v5188
    %v5218 = vunpack.c.l.b16 %v5189
    %v5219 = vunpack.c.l.b16 %v5190
    %v5220 = vunpack.c.l.b16 %v5191
    %v5221 = vunpack.c.l.b16 %v5192
    %v5222 = vunpack.c.l.b16 %v5193
    %v5223 = vpack.c.b16 %v5213, %v5212
    %v5224 = vpack.c.b16 %v5215, %v5214
    %v5225 = vpack.c.b16 %v5217, %v5216
    %v5226 = vpack.c.b16 %v5219, %v5218
    %v5227 = vpack.c.b16 %v5221, %v5220
    %v5228 = vpack.c.b16 %v5222, %v5222
    %v5235 = vsel %vm2497, %v5182, 0
    %v5238 = vsel %vm3526, %v5228, 0
    %5240 = vmatprep.subr.bf16.mxu0 0
    %5241 = vmatpush1.bf16.msra.mxu0 %v5223
    %5242 = vmatprep.subr.bf16.mxu0 0
    %5243 = vmatpush1.bf16.msra.mxu0 %v5224
    %5244 = vmatprep.subr.bf16.mxu0 0
    %5245 = vmatpush1.bf16.msra.mxu0 %v5225
    %5246 = vmatprep.subr.bf16.mxu0 0
    %5247 = vmatpush1.bf16.msra.mxu0 %v5226
    %5248 = vmatprep.subr.bf16.mxu0 0
    %5249 = vmatpush1.bf16.msra.mxu0 %v5227
    %5250 = vmatprep.subr.bf16.mxu0 0
    %5251 = vmatpush1.bf16.msra.mxu0 %v5238
    %5252 = vmatprep.subr.bf16.mxu0 0
    %5253 = vmatpush1.bf16.msra.mxu0 0
    %5254 = vmatprep.subr.bf16.mxu0 0
    %5255 = vmatpush1.bf16.msra.mxu0 0
    %5256 = vmatprep.subr.bf16.mxu0 0
    %5257 = vmatpush1.bf16.msra.mxu0 0
    %5258 = vmatprep.subr.bf16.mxu0 0
    %5259 = vmatpush1.bf16.msra.mxu0 0
    %5260 = vmatprep.subr.bf16.mxu0 0
    %5261 = vmatpush1.bf16.msra.mxu0 0
    %5262 = vmatprep.subr.bf16.mxu0 0
    %5263 = vmatpush1.bf16.msra.mxu0 0
    %5264 = vmatprep.subr.bf16.mxu0 0
    %5265 = vmatpush1.bf16.msra.mxu0 0
    %5266 = vmatprep.subr.bf16.mxu0 0
    %5267 = vmatpush1.bf16.msra.mxu0 0
    %5268 = vmatprep.subr.bf16.mxu0 0
    %5269 = vmatpush1.bf16.msra.mxu0 0
    %5270 = vmatprep.subr.bf16.mxu0 0
    %5271 = vmatpush1.bf16.msra.mxu0 0
    %5272 = vmatprep.mubr.bf16.mxu0 0
    %5273 = vmatmul.mubr.bf16.gmra.mrb[0].mxu0 %v5235
    %v5274 = vpop.f32.mrb[0].mxu0
    %v5275 = vadd.f32 %v5199, %v5274
    %v5276 = vpop.f32.mrb[0].mxu0
    %v5277 = vpop.f32.mrb[0].mxu0
    %v5278 = vadd.f32 %v5199, %v5277
    %v5279 = vpop.f32.mrb[0].mxu0
    %5280 = vdwg.mxu0
    %vm5281 = vcmask 80896
    %5282 = vst.msk [vmem:[#allocation2] sm:$0xff] %vm5281, %v5275
    %5283 = vst.msk [vmem:[#allocation2 + $0x8] sm:$0xff] %vm5281, %v5278
    // Predicated region
    $region42: #{custom_cnn_forward.1} parent=1 // pred_check
      _
    $region43: #{custom_cnn_forward.1} parent=1 // pred_check_branch
      %5285 = sbr.rel (0) target = $region45
    $region44: #{custom_cnn_forward.1} parent=1 // pred_region
      %s5287 = ssub.s32 256, 256
      %5288 = vsyncadd [#allocation3], %s5287
      %s5289 = sshll.u32 [#allocation2], 4
      %s5290 = int_to_ptr.vmem [resolvable:$true] %s5289
      %5295 = dma.vmem_to_hbm [thread:$0]  %s5290, 256, %s10, [#allocation3], 128, 128, 8
    $region45: #{custom_cnn_forward.1} parent=1 // pred_fallthru
      _
    // Predicated region
    $region46: #{custom_cnn_forward.1} parent=1 // pred_check
      _
    $region47: #{custom_cnn_forward.1} parent=1 // pred_check_branch
      %5297 = sbr.rel (0) target = $region49
    $region48: #{custom_cnn_forward.1} parent=1 // pred_region
      %5298 = dma.done [#allocation3], 256
    $region49: #{custom_cnn_forward.1} parent=1 // pred_fallthru
      _
    %5299 = vsyncpa [#allocation3], 1

</llo_original>
